<compile_context>
chip_gen: v6e
topology: v6e:2x2x1
jax: 0.10.0
libtpu: 0.0.40
codegen_flags: <defaults>
</compile_context>

<pallas_src>
import functools

import jax
import jax.numpy as jnp
from jax.experimental import pallas as pl
from jax.experimental.pallas import tpu as pltpu


# ----------------------------------------------------------------------------
# Kernel bodies
# ----------------------------------------------------------------------------
def _conv_pool_tile(t_ref, w_ref, b_ref, *, tr, w2, c):
    """3x3 conv + 2x2 maxpool + bias + ReLU for one row tile.

    t_ref: (2, 2, tr+1, w2+1, C)  pool-parity windows
           [row-parity, col-parity, pooled-row (+1 halo), pooled-col (+1 halo), C]
    w_ref: (9*C, C)               conv weights, tap-major ((dy*3+dx)*C + c_in).
    b_ref: (1, C)                 bias (f32).
    returns (tr*w2, C) float32    pooled, biased, ReLU'd rows (row-major r*w2+u).
    """
    blk = t_ref[...]
    # 16 shifted tap views: offset (A, B) in the un-pooled padded map lives at
    # parity (A % 2, B % 2) with shift (A // 2, B // 2) inside the parity grid.
    taps = {}
    for a in range(4):
        for b in range(4):
            taps[(a, b)] = blk[a % 2, b % 2,
                               a // 2:a // 2 + tr,
                               b // 2:b // 2 + w2, :]

    m = tr * w2
    # Build the im2col slab: taps concatenated along lanes (K = 9*C), the 4
    # pool phases and the tr rows concatenated along M (no in-kernel reshapes).
    phase_mats = []
    for py in range(2):
        for px in range(2):
            im3 = jnp.concatenate(
                [taps[(py + dy, px + dx)] for dy in range(3) for dx in range(3)],
                axis=-1)                                   # (tr, w2, 9C)
            rows = [im3[r] for r in range(tr)]             # tr x (w2, 9C)
            phase_mats.append(jnp.concatenate(rows, axis=0))   # (m, 9C)
    im2col = jnp.concatenate(phase_mats, axis=0)           # (4m, 9C)

    # Single MXU matmul per tile: K = 576 contraction, f32 accumulation.
    acc = jnp.dot(im2col, w_ref[...], preferred_element_type=jnp.float32)  # (4m, C)

    # 2x2 max pool == max over the 4 phase slabs (cheap VPU maxes).
    pooled = jnp.maximum(jnp.maximum(acc[0:m], acc[m:2 * m]),
                         jnp.maximum(acc[2 * m:3 * m], acc[3 * m:4 * m]))
    # bias + ReLU hoisted out of the phase loop (bias phase-invariant, ReLU monotone).
    return jnp.maximum(pooled + b_ref[...], 0.0)


def _conv_pool_kernel(t_ref, w_ref, b_ref, o_ref, *, tr, w2, c):
    o_ref[...] = _conv_pool_tile(t_ref, w_ref, b_ref,
                                 tr=tr, w2=w2, c=c).astype(o_ref.dtype)


def _conv_pool_global_kernel(t_ref, w_ref, b_ref, o_ref, mx_ref, sm_ref, *,
                             tr, w2, c, inv_m):
    """Conv block 2 with the global MaxPool+AvgPool head fused into the epilogue."""
    pooled = _conv_pool_tile(t_ref, w_ref, b_ref, tr=tr, w2=w2, c=c)
    tile_max = jnp.max(pooled, axis=0, keepdims=True)      # (1, C)
    tile_sum = jnp.sum(pooled, axis=0, keepdims=True)      # (1, C)
    t = pl.program_id(1)

    @pl.when(t == 0)
    def _init():
        mx_ref[...] = tile_max
        sm_ref[...] = tile_sum

    @pl.when(t != 0)
    def _update():
        mx_ref[...] = jnp.maximum(mx_ref[...], tile_max)
        sm_ref[...] = sm_ref[...] + tile_sum

    @pl.when(t == pl.num_programs(1) - 1)
    def _finalize():
        o_ref[...] = (mx_ref[...] + sm_ref[...] * inv_m).astype(o_ref.dtype)


# ----------------------------------------------------------------------------
# Wrappers (pallas_call + cheap indexing glue)
# ----------------------------------------------------------------------------
def _pick_tile_rows(h_half, target):
    """Largest divisor of h_half that is <= target (keeps tiles VMEM-friendly)."""
    tr = max(1, min(target, h_half))
    while h_half % tr:
        tr -= 1
    return tr


def _phase_windows(x, tr):
    """(N,H,W,C) -> (N, NT, 2, 2, tr+1, W//2+1, C) pool-parity row windows.

    Only ~(tr+1)/tr times the raw feature-map bytes (1-row halo), vs the old
    36x tap materialization.
    """
    n, h, w, c = x.shape
    assert h % 2 == 0 and w % 2 == 0, (h, w)
    h2, w2 = h // 2, w // 2
    nt = h2 // tr
    xp = jnp.pad(x, ((0, 0), (1, 1), (1, 1), (0, 0)))      # conv zero padding
    # 4 parity-downsampled grids of the padded map, each (N, h2+1, w2+1, C).
    grids = [[xp[:, a::2, b::2, :] for b in range(2)] for a in range(2)]

    def row_windows(g):                                    # overlapping (+1 halo row)
        return jnp.stack([g[:, t * tr:t * tr + tr + 1] for t in range(nt)], axis=1)

    return jnp.stack(
        [jnp.stack([row_windows(grids[a][b]) for b in range(2)], axis=2)
         for a in range(2)],
        axis=2)                                            # (N, NT, 2, 2, tr+1, w2+1, C)


def _conv_in_specs(tr, w2, c):
    return [
        pl.BlockSpec((None, None, 2, 2, tr + 1, w2 + 1, c),
                     lambda i, j: (i, j, 0, 0, 0, 0, 0)),
        # constant index maps -> weights/bias stay VMEM-resident, no re-DMA
        pl.BlockSpec((9 * c, c), lambda i, j: (0, 0)),
        pl.BlockSpec((1, c), lambda i, j: (0, 0)),
    ]


def conv_relu_pool(x, w, b, *, compute_dtype, tile_rows=8):
    """3x3 conv(pad=1) + ReLU + MaxPool2d(2).  x:(N,H,W,C), w:(3,3,C,C) HWIO."""
    n, h, wd, c = x.shape
    h2, w2 = h // 2, wd // 2
    tr = _pick_tile_rows(h2, tile_rows)
    nt = h2 // tr
    tb = _phase_windows(x.astype(compute_dtype), tr)
    wmat = w.reshape(9 * c, c).astype(compute_dtype)
    bias = b.reshape(1, c).astype(jnp.float32)
    kernel = functools.partial(_conv_pool_kernel, tr=tr, w2=w2, c=c)
    y = pl.pallas_call(
        kernel,
        out_shape=jax.ShapeDtypeStruct((n, nt, tr * w2, c), compute_dtype),
        grid=(n, nt),
        in_specs=_conv_in_specs(tr, w2, c),
        out_specs=pl.BlockSpec((None, None, tr * w2, c),
                               lambda i, j: (i, j, 0, 0)),
        compiler_params=pltpu.CompilerParams(
            dimension_semantics=("parallel", "parallel")),   # v7x: shard row tiles
    )(tb, wmat, bias)
    return y.reshape(n, h2, w2, c)                         # free (row-major match)


def conv_relu_pool_global(x, w, b, *, compute_dtype, tile_rows=8):
    """Conv block 2 + fused global max+avg pool -> (N, 1, C) float32."""
    n, h, wd, c = x.shape
    h2, w2 = h // 2, wd // 2
    tr = _pick_tile_rows(h2, tile_rows)
    nt = h2 // tr
    tb = _phase_windows(x.astype(compute_dtype), tr)
    wmat = w.reshape(9 * c, c).astype(compute_dtype)
    bias = b.reshape(1, c).astype(jnp.float32)
    kernel = functools.partial(_conv_pool_global_kernel, tr=tr, w2=w2, c=c,
                               inv_m=1.0 / float(h2 * w2))
    return pl.pallas_call(
        kernel,
        out_shape=jax.ShapeDtypeStruct((n, 1, c), jnp.float32),
        grid=(n, nt),
        in_specs=_conv_in_specs(tr, w2, c),
        out_specs=pl.BlockSpec((None, 1, c), lambda i, j: (i, 0, 0)),
        scratch_shapes=[pltpu.VMEM((1, c), jnp.float32),    # running max
                        pltpu.VMEM((1, c), jnp.float32)],   # running sum
        compiler_params=pltpu.CompilerParams(
            dimension_semantics=("parallel", "arbitrary")),  # accumulator axis
    )(tb, wmat, bias)


def conv_encoder_forward(x_nchw, w1, b1, w2, b2, *,
                         compute_dtype=jnp.bfloat16, tile_rows=8):
    """Full Conv_Encoder.forward.  x_nchw: (N, 64, H, W) -> (N, 64, 1)."""
    n, c, h, w = x_nchw.shape
    assert h % 4 == 0 and w % 4 == 0, "two 2x2 pools assume H, W divisible by 4"
    x = jnp.transpose(x_nchw, (0, 2, 3, 1))                # NCHW -> NHWC

    y1 = conv_relu_pool(x, w1, b1, compute_dtype=compute_dtype,
                        tile_rows=tile_rows)               # (N, H/2, W/2, C)
    out = conv_relu_pool_global(y1, w2, b2, compute_dtype=compute_dtype,
                                tile_rows=tile_rows)       # (N, 1, C)
    return jnp.transpose(out, (0, 2, 1))                   # (N, C, 1)


# ----------------------------------------------------------------------------
# Pure-JAX reference (for correctness checks of the Pallas path)
# ----------------------------------------------------------------------------
def _reference_forward(x_nchw, w1, b1, w2, b2):
    x = jnp.transpose(x_nchw, (0, 2, 3, 1))

    def block(xx, ww, bb):
        y = jax.lax.conv_general_dilated(
            xx, ww, window_strides=(1, 1), padding=((1, 1), (1, 1)),
            dimension_numbers=("NHWC", "HWIO", "NHWC"))
        y = jnp.maximum(y + bb.reshape(1, 1, 1, -1), 0.0)
        return jax.lax.reduce_window(y, -jnp.inf, jax.lax.max,
                                     (1, 2, 2, 1), (1, 2, 2, 1), "VALID")

    y = block(block(x, w1, b1), w2, b2)
    mx = jnp.max(y, axis=(1, 2))
    av = jnp.mean(y, axis=(1, 2))
    return (mx + av)[..., None]


# ----------------------------------------------------------------------------
# Main
# ----------------------------------------------------------------------------
if __name__ == "__main__":
    key = jax.random.PRNGKey(0)
    kx, k1, k2 = jax.random.split(key, 3)

    N, C, H, W = 2, 64, 16, 16                             # small, shape-consistent
    x_nchw = jax.random.normal(kx, (N, C, H, W), dtype=jnp.float32)

    # kaiming_normal_(mode='fan_out', nonlinearity='relu'): std = sqrt(2/(C_out*3*3))
    std = (2.0 / (C * 3 * 3)) ** 0.5
    w1 = jax.random.normal(k1, (3, 3, C, C), dtype=jnp.float32) * std   # HWIO
    w2 = jax.random.normal(k2, (3, 3, C, C), dtype=jnp.float32) * std
    b1 = jnp.zeros((C,), dtype=jnp.float32)
    b2 = jnp.zeros((C,), dtype=jnp.float32)

    ref = jax.block_until_ready(_reference_forward(x_nchw, w1, b1, w2, b2))

    # f32 path (tight check).
    fwd_f32 = jax.jit(functools.partial(conv_encoder_forward,
                                        compute_dtype=jnp.float32))
    out_f32 = jax.block_until_ready(fwd_f32(x_nchw, w1, b1, w2, b2))
    assert out_f32.shape == (N, C, 1), out_f32.shape
    assert jnp.allclose(out_f32, ref, rtol=2e-3, atol=2e-3), (
        float(jnp.max(jnp.abs(out_f32 - ref))))

    # bf16 fast path (halved HBM bytes, 2x MXU on v6e/v7x); bf16-level tolerance.
    fwd_bf16 = jax.jit(functools.partial(conv_encoder_forward,
                                         compute_dtype=jnp.bfloat16))
    out_bf16 = jax.block_until_ready(fwd_bf16(x_nchw, w1, b1, w2, b2))
    assert out_bf16.shape == (N, C, 1), out_bf16.shape
    assert jnp.allclose(out_bf16, ref, rtol=5e-2, atol=5e-2), (
        float(jnp.max(jnp.abs(out_bf16 - ref))))

    print("KERNEL_OK")
</pallas_src>

<mosaic_0001>
module attributes {stable_mosaic.version = 11 : i64} {
  func.func @_conv_pool_kernel(%arg0: i32, %arg1: i32, %arg2: memref<1x1x2x2x9x9x64xf32, #tpu.memory_space<vmem>>, %arg3: memref<576x64xf32, #tpu.memory_space<vmem>>, %arg4: memref<1x64xf32, #tpu.memory_space<vmem>>, %arg5: memref<1x1x64x64xf32, #tpu.memory_space<vmem>>) attributes {dimension_semantics = [#tpu.dimension_semantics<parallel>, #tpu.dimension_semantics<parallel>], iteration_bounds = array<i64: 2, 1>, scalar_prefetch = 0 : i64, scratch_operands = 0 : i64, tpu.core_type = #tpu.core_type<tc>, window_params = [{transform_indices = @transform_0, window_bounds = array<i64: 1, 1, 2, 2, 9, 9, 64>}, {pipeline_mode = #tpu.pipeline_mode<synchronous>, transform_indices = @transform_1, window_bounds = array<i64: 576, 64>}, {pipeline_mode = #tpu.pipeline_mode<synchronous>, transform_indices = @transform_2, window_bounds = array<i64: 1, 64>}, {transform_indices = @transform_3, window_bounds = array<i64: 1, 1, 64, 64>}]} {
    %c0 = arith.constant 0 : index
    %c0_0 = arith.constant 0 : index
    %c0_1 = arith.constant 0 : index
    %c0_2 = arith.constant 0 : index
    %c0_3 = arith.constant 0 : index
    %c0_4 = arith.constant 0 : index
    %c0_5 = arith.constant 0 : index
    %0 = vector.load %arg2[%c0, %c0_0, %c0_1, %c0_2, %c0_3, %c0_4, %c0_5] : memref<1x1x2x2x9x9x64xf32, #tpu.memory_space<vmem>>, vector<1x1x2x2x9x9x64xf32>
    %1 = vector.shape_cast %0 : vector<1x1x2x2x9x9x64xf32> to vector<2x2x9x9x64xf32>
    %2 = vector.extract_strided_slice %1 {offsets = [0, 0, 0, 0, 0], sizes = [1, 1, 8, 8, 64], strides = [1, 1, 1, 1, 1]} : vector<2x2x9x9x64xf32> to vector<1x1x8x8x64xf32>
    %3 = vector.shape_cast %2 : vector<1x1x8x8x64xf32> to vector<8x8x64xf32>
    %4 = vector.extract_strided_slice %1 {offsets = [0, 1, 0, 0, 0], sizes = [1, 1, 8, 8, 64], strides = [1, 1, 1, 1, 1]} : vector<2x2x9x9x64xf32> to vector<1x1x8x8x64xf32>
    %5 = vector.shape_cast %4 : vector<1x1x8x8x64xf32> to vector<8x8x64xf32>
    %6 = vector.extract_strided_slice %1 {offsets = [0, 0, 0, 1, 0], sizes = [1, 1, 8, 8, 64], strides = [1, 1, 1, 1, 1]} : vector<2x2x9x9x64xf32> to vector<1x1x8x8x64xf32>
    %7 = vector.shape_cast %6 : vector<1x1x8x8x64xf32> to vector<8x8x64xf32>
    %8 = vector.extract_strided_slice %1 {offsets = [0, 1, 0, 1, 0], sizes = [1, 1, 8, 8, 64], strides = [1, 1, 1, 1, 1]} : vector<2x2x9x9x64xf32> to vector<1x1x8x8x64xf32>
    %9 = vector.shape_cast %8 : vector<1x1x8x8x64xf32> to vector<8x8x64xf32>
    %10 = vector.extract_strided_slice %1 {offsets = [1, 0, 0, 0, 0], sizes = [1, 1, 8, 8, 64], strides = [1, 1, 1, 1, 1]} : vector<2x2x9x9x64xf32> to vector<1x1x8x8x64xf32>
    %11 = vector.shape_cast %10 : vector<1x1x8x8x64xf32> to vector<8x8x64xf32>
    %12 = vector.extract_strided_slice %1 {offsets = [1, 1, 0, 0, 0], sizes = [1, 1, 8, 8, 64], strides = [1, 1, 1, 1, 1]} : vector<2x2x9x9x64xf32> to vector<1x1x8x8x64xf32>
    %13 = vector.shape_cast %12 : vector<1x1x8x8x64xf32> to vector<8x8x64xf32>
    %14 = vector.extract_strided_slice %1 {offsets = [1, 0, 0, 1, 0], sizes = [1, 1, 8, 8, 64], strides = [1, 1, 1, 1, 1]} : vector<2x2x9x9x64xf32> to vector<1x1x8x8x64xf32>
    %15 = vector.shape_cast %14 : vector<1x1x8x8x64xf32> to vector<8x8x64xf32>
    %16 = vector.extract_strided_slice %1 {offsets = [1, 1, 0, 1, 0], sizes = [1, 1, 8, 8, 64], strides = [1, 1, 1, 1, 1]} : vector<2x2x9x9x64xf32> to vector<1x1x8x8x64xf32>
    %17 = vector.shape_cast %16 : vector<1x1x8x8x64xf32> to vector<8x8x64xf32>
    %18 = vector.extract_strided_slice %1 {offsets = [0, 0, 1, 0, 0], sizes = [1, 1, 8, 8, 64], strides = [1, 1, 1, 1, 1]} : vector<2x2x9x9x64xf32> to vector<1x1x8x8x64xf32>
    %19 = vector.shape_cast %18 : vector<1x1x8x8x64xf32> to vector<8x8x64xf32>
    %20 = vector.extract_strided_slice %1 {offsets = [0, 1, 1, 0, 0], sizes = [1, 1, 8, 8, 64], strides = [1, 1, 1, 1, 1]} : vector<2x2x9x9x64xf32> to vector<1x1x8x8x64xf32>
    %21 = vector.shape_cast %20 : vector<1x1x8x8x64xf32> to vector<8x8x64xf32>
    %22 = vector.extract_strided_slice %1 {offsets = [0, 0, 1, 1, 0], sizes = [1, 1, 8, 8, 64], strides = [1, 1, 1, 1, 1]} : vector<2x2x9x9x64xf32> to vector<1x1x8x8x64xf32>
    %23 = vector.shape_cast %22 : vector<1x1x8x8x64xf32> to vector<8x8x64xf32>
    %24 = vector.extract_strided_slice %1 {offsets = [0, 1, 1, 1, 0], sizes = [1, 1, 8, 8, 64], strides = [1, 1, 1, 1, 1]} : vector<2x2x9x9x64xf32> to vector<1x1x8x8x64xf32>
    %25 = vector.shape_cast %24 : vector<1x1x8x8x64xf32> to vector<8x8x64xf32>
    %26 = vector.extract_strided_slice %1 {offsets = [1, 0, 1, 0, 0], sizes = [1, 1, 8, 8, 64], strides = [1, 1, 1, 1, 1]} : vector<2x2x9x9x64xf32> to vector<1x1x8x8x64xf32>
    %27 = vector.shape_cast %26 : vector<1x1x8x8x64xf32> to vector<8x8x64xf32>
    %28 = vector.extract_strided_slice %1 {offsets = [1, 1, 1, 0, 0], sizes = [1, 1, 8, 8, 64], strides = [1, 1, 1, 1, 1]} : vector<2x2x9x9x64xf32> to vector<1x1x8x8x64xf32>
    %29 = vector.shape_cast %28 : vector<1x1x8x8x64xf32> to vector<8x8x64xf32>
    %30 = vector.extract_strided_slice %1 {offsets = [1, 0, 1, 1, 0], sizes = [1, 1, 8, 8, 64], strides = [1, 1, 1, 1, 1]} : vector<2x2x9x9x64xf32> to vector<1x1x8x8x64xf32>
    %31 = vector.shape_cast %30 : vector<1x1x8x8x64xf32> to vector<8x8x64xf32>
    %32 = vector.extract_strided_slice %1 {offsets = [1, 1, 1, 1, 0], sizes = [1, 1, 8, 8, 64], strides = [1, 1, 1, 1, 1]} : vector<2x2x9x9x64xf32> to vector<1x1x8x8x64xf32>
    %33 = vector.shape_cast %32 : vector<1x1x8x8x64xf32> to vector<8x8x64xf32>
    %34 = tpu.concatenate %3, %5, %7, %11, %13, %15, %19, %21, %23 in 2 : vector<8x8x64xf32>, vector<8x8x64xf32>, vector<8x8x64xf32>, vector<8x8x64xf32>, vector<8x8x64xf32>, vector<8x8x64xf32>, vector<8x8x64xf32>, vector<8x8x64xf32>, vector<8x8x64xf32> -> vector<8x8x576xf32>
    %35 = vector.extract_strided_slice %34 {offsets = [0, 0, 0], sizes = [1, 8, 576], strides = [1, 1, 1]} : vector<8x8x576xf32> to vector<1x8x576xf32>
    %36 = vector.shape_cast %35 : vector<1x8x576xf32> to vector<8x576xf32>
    %37 = vector.extract_strided_slice %34 {offsets = [1, 0, 0], sizes = [1, 8, 576], strides = [1, 1, 1]} : vector<8x8x576xf32> to vector<1x8x576xf32>
    %38 = vector.shape_cast %37 : vector<1x8x576xf32> to vector<8x576xf32>
    %39 = vector.extract_strided_slice %34 {offsets = [2, 0, 0], sizes = [1, 8, 576], strides = [1, 1, 1]} : vector<8x8x576xf32> to vector<1x8x576xf32>
    %40 = vector.shape_cast %39 : vector<1x8x576xf32> to vector<8x576xf32>
    %41 = vector.extract_strided_slice %34 {offsets = [3, 0, 0], sizes = [1, 8, 576], strides = [1, 1, 1]} : vector<8x8x576xf32> to vector<1x8x576xf32>
    %42 = vector.shape_cast %41 : vector<1x8x576xf32> to vector<8x576xf32>
    %43 = vector.extract_strided_slice %34 {offsets = [4, 0, 0], sizes = [1, 8, 576], strides = [1, 1, 1]} : vector<8x8x576xf32> to vector<1x8x576xf32>
    %44 = vector.shape_cast %43 : vector<1x8x576xf32> to vector<8x576xf32>
    %45 = vector.extract_strided_slice %34 {offsets = [5, 0, 0], sizes = [1, 8, 576], strides = [1, 1, 1]} : vector<8x8x576xf32> to vector<1x8x576xf32>
    %46 = vector.shape_cast %45 : vector<1x8x576xf32> to vector<8x576xf32>
    %47 = vector.extract_strided_slice %34 {offsets = [6, 0, 0], sizes = [1, 8, 576], strides = [1, 1, 1]} : vector<8x8x576xf32> to vector<1x8x576xf32>
    %48 = vector.shape_cast %47 : vector<1x8x576xf32> to vector<8x576xf32>
    %49 = vector.extract_strided_slice %34 {offsets = [7, 0, 0], sizes = [1, 8, 576], strides = [1, 1, 1]} : vector<8x8x576xf32> to vector<1x8x576xf32>
    %50 = vector.shape_cast %49 : vector<1x8x576xf32> to vector<8x576xf32>
    %51 = tpu.concatenate %36, %38, %40, %42, %44, %46, %48, %50 in 0 : vector<8x576xf32>, vector<8x576xf32>, vector<8x576xf32>, vector<8x576xf32>, vector<8x576xf32>, vector<8x576xf32>, vector<8x576xf32>, vector<8x576xf32> -> vector<64x576xf32>
    %52 = tpu.concatenate %5, %7, %9, %13, %15, %17, %21, %23, %25 in 2 : vector<8x8x64xf32>, vector<8x8x64xf32>, vector<8x8x64xf32>, vector<8x8x64xf32>, vector<8x8x64xf32>, vector<8x8x64xf32>, vector<8x8x64xf32>, vector<8x8x64xf32>, vector<8x8x64xf32> -> vector<8x8x576xf32>
    %53 = vector.extract_strided_slice %52 {offsets = [0, 0, 0], sizes = [1, 8, 576], strides = [1, 1, 1]} : vector<8x8x576xf32> to vector<1x8x576xf32>
    %54 = vector.shape_cast %53 : vector<1x8x576xf32> to vector<8x576xf32>
    %55 = vector.extract_strided_slice %52 {offsets = [1, 0, 0], sizes = [1, 8, 576], strides = [1, 1, 1]} : vector<8x8x576xf32> to vector<1x8x576xf32>
    %56 = vector.shape_cast %55 : vector<1x8x576xf32> to vector<8x576xf32>
    %57 = vector.extract_strided_slice %52 {offsets = [2, 0, 0], sizes = [1, 8, 576], strides = [1, 1, 1]} : vector<8x8x576xf32> to vector<1x8x576xf32>
    %58 = vector.shape_cast %57 : vector<1x8x576xf32> to vector<8x576xf32>
    %59 = vector.extract_strided_slice %52 {offsets = [3, 0, 0], sizes = [1, 8, 576], strides = [1, 1, 1]} : vector<8x8x576xf32> to vector<1x8x576xf32>
    %60 = vector.shape_cast %59 : vector<1x8x576xf32> to vector<8x576xf32>
    %61 = vector.extract_strided_slice %52 {offsets = [4, 0, 0], sizes = [1, 8, 576], strides = [1, 1, 1]} : vector<8x8x576xf32> to vector<1x8x576xf32>
    %62 = vector.shape_cast %61 : vector<1x8x576xf32> to vector<8x576xf32>
    %63 = vector.extract_strided_slice %52 {offsets = [5, 0, 0], sizes = [1, 8, 576], strides = [1, 1, 1]} : vector<8x8x576xf32> to vector<1x8x576xf32>
    %64 = vector.shape_cast %63 : vector<1x8x576xf32> to vector<8x576xf32>
    %65 = vector.extract_strided_slice %52 {offsets = [6, 0, 0], sizes = [1, 8, 576], strides = [1, 1, 1]} : vector<8x8x576xf32> to vector<1x8x576xf32>
    %66 = vector.shape_cast %65 : vector<1x8x576xf32> to vector<8x576xf32>
    %67 = vector.extract_strided_slice %52 {offsets = [7, 0, 0], sizes = [1, 8, 576], strides = [1, 1, 1]} : vector<8x8x576xf32> to vector<1x8x576xf32>
    %68 = vector.shape_cast %67 : vector<1x8x576xf32> to vector<8x576xf32>
    %69 = tpu.concatenate %54, %56, %58, %60, %62, %64, %66, %68 in 0 : vector<8x576xf32>, vector<8x576xf32>, vector<8x576xf32>, vector<8x576xf32>, vector<8x576xf32>, vector<8x576xf32>, vector<8x576xf32>, vector<8x576xf32> -> vector<64x576xf32>
    %70 = tpu.concatenate %11, %13, %15, %19, %21, %23, %27, %29, %31 in 2 : vector<8x8x64xf32>, vector<8x8x64xf32>, vector<8x8x64xf32>, vector<8x8x64xf32>, vector<8x8x64xf32>, vector<8x8x64xf32>, vector<8x8x64xf32>, vector<8x8x64xf32>, vector<8x8x64xf32> -> vector<8x8x576xf32>
    %71 = vector.extract_strided_slice %70 {offsets = [0, 0, 0], sizes = [1, 8, 576], strides = [1, 1, 1]} : vector<8x8x576xf32> to vector<1x8x576xf32>
    %72 = vector.shape_cast %71 : vector<1x8x576xf32> to vector<8x576xf32>
    %73 = vector.extract_strided_slice %70 {offsets = [1, 0, 0], sizes = [1, 8, 576], strides = [1, 1, 1]} : vector<8x8x576xf32> to vector<1x8x576xf32>
    %74 = vector.shape_cast %73 : vector<1x8x576xf32> to vector<8x576xf32>
    %75 = vector.extract_strided_slice %70 {offsets = [2, 0, 0], sizes = [1, 8, 576], strides = [1, 1, 1]} : vector<8x8x576xf32> to vector<1x8x576xf32>
    %76 = vector.shape_cast %75 : vector<1x8x576xf32> to vector<8x576xf32>
    %77 = vector.extract_strided_slice %70 {offsets = [3, 0, 0], sizes = [1, 8, 576], strides = [1, 1, 1]} : vector<8x8x576xf32> to vector<1x8x576xf32>
    %78 = vector.shape_cast %77 : vector<1x8x576xf32> to vector<8x576xf32>
    %79 = vector.extract_strided_slice %70 {offsets = [4, 0, 0], sizes = [1, 8, 576], strides = [1, 1, 1]} : vector<8x8x576xf32> to vector<1x8x576xf32>
    %80 = vector.shape_cast %79 : vector<1x8x576xf32> to vector<8x576xf32>
    %81 = vector.extract_strided_slice %70 {offsets = [5, 0, 0], sizes = [1, 8, 576], strides = [1, 1, 1]} : vector<8x8x576xf32> to vector<1x8x576xf32>
    %82 = vector.shape_cast %81 : vector<1x8x576xf32> to vector<8x576xf32>
    %83 = vector.extract_strided_slice %70 {offsets = [6, 0, 0], sizes = [1, 8, 576], strides = [1, 1, 1]} : vector<8x8x576xf32> to vector<1x8x576xf32>
    %84 = vector.shape_cast %83 : vector<1x8x576xf32> to vector<8x576xf32>
    %85 = vector.extract_strided_slice %70 {offsets = [7, 0, 0], sizes = [1, 8, 576], strides = [1, 1, 1]} : vector<8x8x576xf32> to vector<1x8x576xf32>
    %86 = vector.shape_cast %85 : vector<1x8x576xf32> to vector<8x576xf32>
    %87 = tpu.concatenate %72, %74, %76, %78, %80, %82, %84, %86 in 0 : vector<8x576xf32>, vector<8x576xf32>, vector<8x576xf32>, vector<8x576xf32>, vector<8x576xf32>, vector<8x576xf32>, vector<8x576xf32>, vector<8x576xf32> -> vector<64x576xf32>
    %88 = tpu.concatenate %13, %15, %17, %21, %23, %25, %29, %31, %33 in 2 : vector<8x8x64xf32>, vector<8x8x64xf32>, vector<8x8x64xf32>, vector<8x8x64xf32>, vector<8x8x64xf32>, vector<8x8x64xf32>, vector<8x8x64xf32>, vector<8x8x64xf32>, vector<8x8x64xf32> -> vector<8x8x576xf32>
    %89 = vector.extract_strided_slice %88 {offsets = [0, 0, 0], sizes = [1, 8, 576], strides = [1, 1, 1]} : vector<8x8x576xf32> to vector<1x8x576xf32>
    %90 = vector.shape_cast %89 : vector<1x8x576xf32> to vector<8x576xf32>
    %91 = vector.extract_strided_slice %88 {offsets = [1, 0, 0], sizes = [1, 8, 576], strides = [1, 1, 1]} : vector<8x8x576xf32> to vector<1x8x576xf32>
    %92 = vector.shape_cast %91 : vector<1x8x576xf32> to vector<8x576xf32>
    %93 = vector.extract_strided_slice %88 {offsets = [2, 0, 0], sizes = [1, 8, 576], strides = [1, 1, 1]} : vector<8x8x576xf32> to vector<1x8x576xf32>
    %94 = vector.shape_cast %93 : vector<1x8x576xf32> to vector<8x576xf32>
    %95 = vector.extract_strided_slice %88 {offsets = [3, 0, 0], sizes = [1, 8, 576], strides = [1, 1, 1]} : vector<8x8x576xf32> to vector<1x8x576xf32>
    %96 = vector.shape_cast %95 : vector<1x8x576xf32> to vector<8x576xf32>
    %97 = vector.extract_strided_slice %88 {offsets = [4, 0, 0], sizes = [1, 8, 576], strides = [1, 1, 1]} : vector<8x8x576xf32> to vector<1x8x576xf32>
    %98 = vector.shape_cast %97 : vector<1x8x576xf32> to vector<8x576xf32>
    %99 = vector.extract_strided_slice %88 {offsets = [5, 0, 0], sizes = [1, 8, 576], strides = [1, 1, 1]} : vector<8x8x576xf32> to vector<1x8x576xf32>
    %100 = vector.shape_cast %99 : vector<1x8x576xf32> to vector<8x576xf32>
    %101 = vector.extract_strided_slice %88 {offsets = [6, 0, 0], sizes = [1, 8, 576], strides = [1, 1, 1]} : vector<8x8x576xf32> to vector<1x8x576xf32>
    %102 = vector.shape_cast %101 : vector<1x8x576xf32> to vector<8x576xf32>
    %103 = vector.extract_strided_slice %88 {offsets = [7, 0, 0], sizes = [1, 8, 576], strides = [1, 1, 1]} : vector<8x8x576xf32> to vector<1x8x576xf32>
    %104 = vector.shape_cast %103 : vector<1x8x576xf32> to vector<8x576xf32>
    %105 = tpu.concatenate %90, %92, %94, %96, %98, %100, %102, %104 in 0 : vector<8x576xf32>, vector<8x576xf32>, vector<8x576xf32>, vector<8x576xf32>, vector<8x576xf32>, vector<8x576xf32>, vector<8x576xf32>, vector<8x576xf32> -> vector<64x576xf32>
    %106 = tpu.concatenate %51, %69, %87, %105 in 0 : vector<64x576xf32>, vector<64x576xf32>, vector<64x576xf32>, vector<64x576xf32> -> vector<256x576xf32>
    %c0_6 = arith.constant 0 : index
    %c0_7 = arith.constant 0 : index
    %107 = vector.load %arg3[%c0_6, %c0_7] : memref<576x64xf32, #tpu.memory_space<vmem>>, vector<576x64xf32>
    %cst = arith.constant dense<0.000000e+00> : vector<256x64xf32>
    %108 = tpu.matmul %106, %107, %cst {dimension_numbers = #tpu.dot_dimension_numbers<[1], [0], [0], [1], [0, 0, 1, 1], [], []>} : vector<256x576xf32>, vector<576x64xf32>, vector<256x64xf32> -> vector<256x64xf32>
    %109 = vector.extract_strided_slice %108 {offsets = [0, 0], sizes = [64, 64], strides = [1, 1]} : vector<256x64xf32> to vector<64x64xf32>
    %110 = vector.extract_strided_slice %108 {offsets = [64, 0], sizes = [64, 64], strides = [1, 1]} : vector<256x64xf32> to vector<64x64xf32>
    %111 = arith.maximumf %109, %110 : vector<64x64xf32>
    %112 = vector.extract_strided_slice %108 {offsets = [128, 0], sizes = [64, 64], strides = [1, 1]} : vector<256x64xf32> to vector<64x64xf32>
    %113 = vector.extract_strided_slice %108 {offsets = [192, 0], sizes = [64, 64], strides = [1, 1]} : vector<256x64xf32> to vector<64x64xf32>
    %114 = arith.maximumf %112, %113 : vector<64x64xf32>
    %115 = arith.maximumf %111, %114 : vector<64x64xf32>
    %c0_8 = arith.constant 0 : index
    %c0_9 = arith.constant 0 : index
    %116 = vector.load %arg4[%c0_8, %c0_9] : memref<1x64xf32, #tpu.memory_space<vmem>>, vector<1x64xf32>
    %117 = vector.broadcast %116 : vector<1x64xf32> to vector<64x64xf32>
    %118 = arith.addf %115, %117 : vector<64x64xf32>
    %cst_10 = arith.constant 0.000000e+00 : f32
    %119 = vector.broadcast %cst_10 : f32 to vector<64x64xf32>
    %120 = arith.maximumf %118, %119 : vector<64x64xf32>
    %c0_11 = arith.constant 0 : index
    %c0_12 = arith.constant 0 : index
    %c0_13 = arith.constant 0 : index
    %c0_14 = arith.constant 0 : index
    %121 = vector.load %arg5[%c0_11, %c0_12, %c0_13, %c0_14] : memref<1x1x64x64xf32, #tpu.memory_space<vmem>>, vector<1x1x64x64xf32>
    %122 = vector.shape_cast %121 : vector<1x1x64x64xf32> to vector<64x64xf32>
    %123 = vector.shape_cast %120 : vector<64x64xf32> to vector<1x1x64x64xf32>
    tpu.vector_store %arg5[%c0_11, %c0_12, %c0_13, %c0_14], %123 {strides = array<i32>} : memref<1x1x64x64xf32, #tpu.memory_space<vmem>>, vector<1x1x64x64xf32>,
    return
  }
  func.func @transform_0(%arg0: i32, %arg1: i32) -> (i32, i32, i32, i32, i32, i32, i32) {
    %c0_i32 = arith.constant 0 : i32
    %c0_i32_0 = arith.constant 0 : i32
    %c0_i32_1 = arith.constant 0 : i32
    %c0_i32_2 = arith.constant 0 : i32
    %c0_i32_3 = arith.constant 0 : i32
    %c0_i32_4 = arith.constant 0 : i32
    return %arg0, %arg1, %c0_i32, %c0_i32_0, %c0_i32_1, %c0_i32_2, %c0_i32_3 : i32, i32, i32, i32, i32, i32, i32
  }
  func.func @transform_1(%arg0: i32, %arg1: i32) -> (i32, i32) {
    %c0_i32 = arith.constant 0 : i32
    %c0_i32_0 = arith.constant 0 : i32
    %c0_i32_1 = arith.constant 0 : i32
    return %c0_i32, %c0_i32_0 : i32, i32
  }
  func.func @transform_2(%arg0: i32, %arg1: i32) -> (i32, i32) {
    %c0_i32 = arith.constant 0 : i32
    %c0_i32_0 = arith.constant 0 : i32
    %c0_i32_1 = arith.constant 0 : i32
    return %c0_i32, %c0_i32_0 : i32, i32
  }
  func.func @transform_3(%arg0: i32, %arg1: i32) -> (i32, i32, i32, i32) {
    %c0_i32 = arith.constant 0 : i32
    %c0_i32_0 = arith.constant 0 : i32
    %c0_i32_1 = arith.constant 0 : i32
    return %arg0, %arg1, %c0_i32, %c0_i32_0 : i32, i32, i32, i32
  }
}

module attributes {stable_mosaic.version = 11 : i64} {
  func.func @_conv_pool_global_kernel(%arg0: i32, %arg1: i32, %arg2: memref<1x1x2x2x5x5x64xf32, #tpu.memory_space<vmem>>, %arg3: memref<576x64xf32, #tpu.memory_space<vmem>>, %arg4: memref<1x64xf32, #tpu.memory_space<vmem>>, %arg5: memref<1x1x64xf32, #tpu.memory_space<vmem>>, %arg6: memref<1x64xf32, #tpu.memory_space<vmem>>, %arg7: memref<1x64xf32, #tpu.memory_space<vmem>>) attributes {dimension_semantics = [#tpu.dimension_semantics<parallel>, #tpu.dimension_semantics<arbitrary>], iteration_bounds = array<i64: 2, 1>, scalar_prefetch = 0 : i64, scratch_operands = 2 : i64, tpu.core_type = #tpu.core_type<tc>, window_params = [{transform_indices = @transform_0, window_bounds = array<i64: 1, 1, 2, 2, 5, 5, 64>}, {pipeline_mode = #tpu.pipeline_mode<synchronous>, transform_indices = @transform_1, window_bounds = array<i64: 576, 64>}, {pipeline_mode = #tpu.pipeline_mode<synchronous>, transform_indices = @transform_2, window_bounds = array<i64: 1, 64>}, {transform_indices = @transform_3, window_bounds = array<i64: 1, 1, 64>}]} {
    %c0 = arith.constant 0 : index
    %c0_0 = arith.constant 0 : index
    %c0_1 = arith.constant 0 : index
    %c0_2 = arith.constant 0 : index
    %c0_3 = arith.constant 0 : index
    %c0_4 = arith.constant 0 : index
    %c0_5 = arith.constant 0 : index
    %0 = vector.load %arg2[%c0, %c0_0, %c0_1, %c0_2, %c0_3, %c0_4, %c0_5] : memref<1x1x2x2x5x5x64xf32, #tpu.memory_space<vmem>>, vector<1x1x2x2x5x5x64xf32>
    %1 = vector.shape_cast %0 : vector<1x1x2x2x5x5x64xf32> to vector<2x2x5x5x64xf32>
    %2 = vector.extract_strided_slice %1 {offsets = [0, 0, 0, 0, 0], sizes = [1, 1, 4, 4, 64], strides = [1, 1, 1, 1, 1]} : vector<2x2x5x5x64xf32> to vector<1x1x4x4x64xf32>
    %3 = vector.shape_cast %2 : vector<1x1x4x4x64xf32> to vector<4x4x64xf32>
    %4 = vector.extract_strided_slice %1 {offsets = [0, 1, 0, 0, 0], sizes = [1, 1, 4, 4, 64], strides = [1, 1, 1, 1, 1]} : vector<2x2x5x5x64xf32> to vector<1x1x4x4x64xf32>
    %5 = vector.shape_cast %4 : vector<1x1x4x4x64xf32> to vector<4x4x64xf32>
    %6 = vector.extract_strided_slice %1 {offsets = [0, 0, 0, 1, 0], sizes = [1, 1, 4, 4, 64], strides = [1, 1, 1, 1, 1]} : vector<2x2x5x5x64xf32> to vector<1x1x4x4x64xf32>
    %7 = vector.shape_cast %6 : vector<1x1x4x4x64xf32> to vector<4x4x64xf32>
    %8 = vector.extract_strided_slice %1 {offsets = [0, 1, 0, 1, 0], sizes = [1, 1, 4, 4, 64], strides = [1, 1, 1, 1, 1]} : vector<2x2x5x5x64xf32> to vector<1x1x4x4x64xf32>
    %9 = vector.shape_cast %8 : vector<1x1x4x4x64xf32> to vector<4x4x64xf32>
    %10 = vector.extract_strided_slice %1 {offsets = [1, 0, 0, 0, 0], sizes = [1, 1, 4, 4, 64], strides = [1, 1, 1, 1, 1]} : vector<2x2x5x5x64xf32> to vector<1x1x4x4x64xf32>
    %11 = vector.shape_cast %10 : vector<1x1x4x4x64xf32> to vector<4x4x64xf32>
    %12 = vector.extract_strided_slice %1 {offsets = [1, 1, 0, 0, 0], sizes = [1, 1, 4, 4, 64], strides = [1, 1, 1, 1, 1]} : vector<2x2x5x5x64xf32> to vector<1x1x4x4x64xf32>
    %13 = vector.shape_cast %12 : vector<1x1x4x4x64xf32> to vector<4x4x64xf32>
    %14 = vector.extract_strided_slice %1 {offsets = [1, 0, 0, 1, 0], sizes = [1, 1, 4, 4, 64], strides = [1, 1, 1, 1, 1]} : vector<2x2x5x5x64xf32> to vector<1x1x4x4x64xf32>
    %15 = vector.shape_cast %14 : vector<1x1x4x4x64xf32> to vector<4x4x64xf32>
    %16 = vector.extract_strided_slice %1 {offsets = [1, 1, 0, 1, 0], sizes = [1, 1, 4, 4, 64], strides = [1, 1, 1, 1, 1]} : vector<2x2x5x5x64xf32> to vector<1x1x4x4x64xf32>
    %17 = vector.shape_cast %16 : vector<1x1x4x4x64xf32> to vector<4x4x64xf32>
    %18 = vector.extract_strided_slice %1 {offsets = [0, 0, 1, 0, 0], sizes = [1, 1, 4, 4, 64], strides = [1, 1, 1, 1, 1]} : vector<2x2x5x5x64xf32> to vector<1x1x4x4x64xf32>
    %19 = vector.shape_cast %18 : vector<1x1x4x4x64xf32> to vector<4x4x64xf32>
    %20 = vector.extract_strided_slice %1 {offsets = [0, 1, 1, 0, 0], sizes = [1, 1, 4, 4, 64], strides = [1, 1, 1, 1, 1]} : vector<2x2x5x5x64xf32> to vector<1x1x4x4x64xf32>
    %21 = vector.shape_cast %20 : vector<1x1x4x4x64xf32> to vector<4x4x64xf32>
    %22 = vector.extract_strided_slice %1 {offsets = [0, 0, 1, 1, 0], sizes = [1, 1, 4, 4, 64], strides = [1, 1, 1, 1, 1]} : vector<2x2x5x5x64xf32> to vector<1x1x4x4x64xf32>
    %23 = vector.shape_cast %22 : vector<1x1x4x4x64xf32> to vector<4x4x64xf32>
    %24 = vector.extract_strided_slice %1 {offsets = [0, 1, 1, 1, 0], sizes = [1, 1, 4, 4, 64], strides = [1, 1, 1, 1, 1]} : vector<2x2x5x5x64xf32> to vector<1x1x4x4x64xf32>
    %25 = vector.shape_cast %24 : vector<1x1x4x4x64xf32> to vector<4x4x64xf32>
    %26 = vector.extract_strided_slice %1 {offsets = [1, 0, 1, 0, 0], sizes = [1, 1, 4, 4, 64], strides = [1, 1, 1, 1, 1]} : vector<2x2x5x5x64xf32> to vector<1x1x4x4x64xf32>
    %27 = vector.shape_cast %26 : vector<1x1x4x4x64xf32> to vector<4x4x64xf32>
    %28 = vector.extract_strided_slice %1 {offsets = [1, 1, 1, 0, 0], sizes = [1, 1, 4, 4, 64], strides = [1, 1, 1, 1, 1]} : vector<2x2x5x5x64xf32> to vector<1x1x4x4x64xf32>
    %29 = vector.shape_cast %28 : vector<1x1x4x4x64xf32> to vector<4x4x64xf32>
    %30 = vector.extract_strided_slice %1 {offsets = [1, 0, 1, 1, 0], sizes = [1, 1, 4, 4, 64], strides = [1, 1, 1, 1, 1]} : vector<2x2x5x5x64xf32> to vector<1x1x4x4x64xf32>
    %31 = vector.shape_cast %30 : vector<1x1x4x4x64xf32> to vector<4x4x64xf32>
    %32 = vector.extract_strided_slice %1 {offsets = [1, 1, 1, 1, 0], sizes = [1, 1, 4, 4, 64], strides = [1, 1, 1, 1, 1]} : vector<2x2x5x5x64xf32> to vector<1x1x4x4x64xf32>
    %33 = vector.shape_cast %32 : vector<1x1x4x4x64xf32> to vector<4x4x64xf32>
    %34 = tpu.concatenate %3, %5, %7, %11, %13, %15, %19, %21, %23 in 2 : vector<4x4x64xf32>, vector<4x4x64xf32>, vector<4x4x64xf32>, vector<4x4x64xf32>, vector<4x4x64xf32>, vector<4x4x64xf32>, vector<4x4x64xf32>, vector<4x4x64xf32>, vector<4x4x64xf32> -> vector<4x4x576xf32>
    %35 = vector.extract_strided_slice %34 {offsets = [0, 0, 0], sizes = [1, 4, 576], strides = [1, 1, 1]} : vector<4x4x576xf32> to vector<1x4x576xf32>
    %36 = vector.shape_cast %35 : vector<1x4x576xf32> to vector<4x576xf32>
    %37 = vector.extract_strided_slice %34 {offsets = [1, 0, 0], sizes = [1, 4, 576], strides = [1, 1, 1]} : vector<4x4x576xf32> to vector<1x4x576xf32>
    %38 = vector.shape_cast %37 : vector<1x4x576xf32> to vector<4x576xf32>
    %39 = vector.extract_strided_slice %34 {offsets = [2, 0, 0], sizes = [1, 4, 576], strides = [1, 1, 1]} : vector<4x4x576xf32> to vector<1x4x576xf32>
    %40 = vector.shape_cast %39 : vector<1x4x576xf32> to vector<4x576xf32>
    %41 = vector.extract_strided_slice %34 {offsets = [3, 0, 0], sizes = [1, 4, 576], strides = [1, 1, 1]} : vector<4x4x576xf32> to vector<1x4x576xf32>
    %42 = vector.shape_cast %41 : vector<1x4x576xf32> to vector<4x576xf32>
    %43 = tpu.concatenate %36, %38, %40, %42 in 0 : vector<4x576xf32>, vector<4x576xf32>, vector<4x576xf32>, vector<4x576xf32> -> vector<16x576xf32>
    %44 = tpu.concatenate %5, %7, %9, %13, %15, %17, %21, %23, %25 in 2 : vector<4x4x64xf32>, vector<4x4x64xf32>, vector<4x4x64xf32>, vector<4x4x64xf32>, vector<4x4x64xf32>, vector<4x4x64xf32>, vector<4x4x64xf32>, vector<4x4x64xf32>, vector<4x4x64xf32> -> vector<4x4x576xf32>
    %45 = vector.extract_strided_slice %44 {offsets = [0, 0, 0], sizes = [1, 4, 576], strides = [1, 1, 1]} : vector<4x4x576xf32> to vector<1x4x576xf32>
    %46 = vector.shape_cast %45 : vector<1x4x576xf32> to vector<4x576xf32>
    %47 = vector.extract_strided_slice %44 {offsets = [1, 0, 0], sizes = [1, 4, 576], strides = [1, 1, 1]} : vector<4x4x576xf32> to vector<1x4x576xf32>
    %48 = vector.shape_cast %47 : vector<1x4x576xf32> to vector<4x576xf32>
    %49 = vector.extract_strided_slice %44 {offsets = [2, 0, 0], sizes = [1, 4, 576], strides = [1, 1, 1]} : vector<4x4x576xf32> to vector<1x4x576xf32>
    %50 = vector.shape_cast %49 : vector<1x4x576xf32> to vector<4x576xf32>
    %51 = vector.extract_strided_slice %44 {offsets = [3, 0, 0], sizes = [1, 4, 576], strides = [1, 1, 1]} : vector<4x4x576xf32> to vector<1x4x576xf32>
    %52 = vector.shape_cast %51 : vector<1x4x576xf32> to vector<4x576xf32>
    %53 = tpu.concatenate %46, %48, %50, %52 in 0 : vector<4x576xf32>, vector<4x576xf32>, vector<4x576xf32>, vector<4x576xf32> -> vector<16x576xf32>
    %54 = tpu.concatenate %11, %13, %15, %19, %21, %23, %27, %29, %31 in 2 : vector<4x4x64xf32>, vector<4x4x64xf32>, vector<4x4x64xf32>, vector<4x4x64xf32>, vector<4x4x64xf32>, vector<4x4x64xf32>, vector<4x4x64xf32>, vector<4x4x64xf32>, vector<4x4x64xf32> -> vector<4x4x576xf32>
    %55 = vector.extract_strided_slice %54 {offsets = [0, 0, 0], sizes = [1, 4, 576], strides = [1, 1, 1]} : vector<4x4x576xf32> to vector<1x4x576xf32>
    %56 = vector.shape_cast %55 : vector<1x4x576xf32> to vector<4x576xf32>
    %57 = vector.extract_strided_slice %54 {offsets = [1, 0, 0], sizes = [1, 4, 576], strides = [1, 1, 1]} : vector<4x4x576xf32> to vector<1x4x576xf32>
    %58 = vector.shape_cast %57 : vector<1x4x576xf32> to vector<4x576xf32>
    %59 = vector.extract_strided_slice %54 {offsets = [2, 0, 0], sizes = [1, 4, 576], strides = [1, 1, 1]} : vector<4x4x576xf32> to vector<1x4x576xf32>
    %60 = vector.shape_cast %59 : vector<1x4x576xf32> to vector<4x576xf32>
    %61 = vector.extract_strided_slice %54 {offsets = [3, 0, 0], sizes = [1, 4, 576], strides = [1, 1, 1]} : vector<4x4x576xf32> to vector<1x4x576xf32>
    %62 = vector.shape_cast %61 : vector<1x4x576xf32> to vector<4x576xf32>
    %63 = tpu.concatenate %56, %58, %60, %62 in 0 : vector<4x576xf32>, vector<4x576xf32>, vector<4x576xf32>, vector<4x576xf32> -> vector<16x576xf32>
    %64 = tpu.concatenate %13, %15, %17, %21, %23, %25, %29, %31, %33 in 2 : vector<4x4x64xf32>, vector<4x4x64xf32>, vector<4x4x64xf32>, vector<4x4x64xf32>, vector<4x4x64xf32>, vector<4x4x64xf32>, vector<4x4x64xf32>, vector<4x4x64xf32>, vector<4x4x64xf32> -> vector<4x4x576xf32>
    %65 = vector.extract_strided_slice %64 {offsets = [0, 0, 0], sizes = [1, 4, 576], strides = [1, 1, 1]} : vector<4x4x576xf32> to vector<1x4x576xf32>
    %66 = vector.shape_cast %65 : vector<1x4x576xf32> to vector<4x576xf32>
    %67 = vector.extract_strided_slice %64 {offsets = [1, 0, 0], sizes = [1, 4, 576], strides = [1, 1, 1]} : vector<4x4x576xf32> to vector<1x4x576xf32>
    %68 = vector.shape_cast %67 : vector<1x4x576xf32> to vector<4x576xf32>
    %69 = vector.extract_strided_slice %64 {offsets = [2, 0, 0], sizes = [1, 4, 576], strides = [1, 1, 1]} : vector<4x4x576xf32> to vector<1x4x576xf32>
    %70 = vector.shape_cast %69 : vector<1x4x576xf32> to vector<4x576xf32>
    %71 = vector.extract_strided_slice %64 {offsets = [3, 0, 0], sizes = [1, 4, 576], strides = [1, 1, 1]} : vector<4x4x576xf32> to vector<1x4x576xf32>
    %72 = vector.shape_cast %71 : vector<1x4x576xf32> to vector<4x576xf32>
    %73 = tpu.concatenate %66, %68, %70, %72 in 0 : vector<4x576xf32>, vector<4x576xf32>, vector<4x576xf32>, vector<4x576xf32> -> vector<16x576xf32>
    %74 = tpu.concatenate %43, %53, %63, %73 in 0 : vector<16x576xf32>, vector<16x576xf32>, vector<16x576xf32>, vector<16x576xf32> -> vector<64x576xf32>
    %c0_6 = arith.constant 0 : index
    %c0_7 = arith.constant 0 : index
    %75 = vector.load %arg3[%c0_6, %c0_7] : memref<576x64xf32, #tpu.memory_space<vmem>>, vector<576x64xf32>
    %cst = arith.constant dense<0.000000e+00> : vector<64x64xf32>
    %76 = tpu.matmul %74, %75, %cst {dimension_numbers = #tpu.dot_dimension_numbers<[1], [0], [0], [1], [0, 0, 1, 1], [], []>} : vector<64x576xf32>, vector<576x64xf32>, vector<64x64xf32> -> vector<64x64xf32>
    %77 = vector.extract_strided_slice %76 {offsets = [0, 0], sizes = [16, 64], strides = [1, 1]} : vector<64x64xf32> to vector<16x64xf32>
    %78 = vector.extract_strided_slice %76 {offsets = [16, 0], sizes = [16, 64], strides = [1, 1]} : vector<64x64xf32> to vector<16x64xf32>
    %79 = arith.maximumf %77, %78 : vector<16x64xf32>
    %80 = vector.extract_strided_slice %76 {offsets = [32, 0], sizes = [16, 64], strides = [1, 1]} : vector<64x64xf32> to vector<16x64xf32>
    %81 = vector.extract_strided_slice %76 {offsets = [48, 0], sizes = [16, 64], strides = [1, 1]} : vector<64x64xf32> to vector<16x64xf32>
    %82 = arith.maximumf %80, %81 : vector<16x64xf32>
    %83 = arith.maximumf %79, %82 : vector<16x64xf32>
    %c0_8 = arith.constant 0 : index
    %c0_9 = arith.constant 0 : index
    %84 = vector.load %arg4[%c0_8, %c0_9] : memref<1x64xf32, #tpu.memory_space<vmem>>, vector<1x64xf32>
    %85 = vector.broadcast %84 : vector<1x64xf32> to vector<16x64xf32>
    %86 = arith.addf %83, %85 : vector<16x64xf32>
    %cst_10 = arith.constant 0.000000e+00 : f32
    %87 = vector.broadcast %cst_10 : f32 to vector<16x64xf32>
    %88 = arith.maximumf %86, %87 : vector<16x64xf32>
    %cst_11 = arith.constant dense<0xFF800000> : vector<64xf32>
    %89 = vector.multi_reduction <maximumf>, %88, %cst_11 [0] : vector<16x64xf32> to vector<64xf32>
    %90 = vector.shape_cast %89 : vector<64xf32> to vector<1x64xf32>
    %cst_12 = arith.constant dense<0.000000e+00> : vector<64xf32>
    %91 = vector.multi_reduction <add>, %88, %cst_12 [0] : vector<16x64xf32> to vector<64xf32>
    %92 = vector.shape_cast %91 : vector<64xf32> to vector<1x64xf32>
    %c0_i32 = arith.constant 0 : i32
    %93 = arith.cmpi eq, %arg1, %c0_i32 : i32
    %94 = arith.extui %93 : i1 to i32
    %c0_i32_13 = arith.constant 0 : i32
    %95 = arith.cmpi ne, %94, %c0_i32_13 : i32
    scf.if %95 {
      %c0_18 = arith.constant 0 : index
      %c0_19 = arith.constant 0 : index
      %102 = vector.load %arg6[%c0_18, %c0_19] : memref<1x64xf32, #tpu.memory_space<vmem>>, vector<1x64xf32>
      tpu.vector_store %arg6[%c0_18, %c0_19], %90 {strides = array<i32>} : memref<1x64xf32, #tpu.memory_space<vmem>>, vector<1x64xf32>,
      %c0_20 = arith.constant 0 : index
      %c0_21 = arith.constant 0 : index
      %103 = vector.load %arg7[%c0_20, %c0_21] : memref<1x64xf32, #tpu.memory_space<vmem>>, vector<1x64xf32>
      tpu.vector_store %arg7[%c0_20, %c0_21], %92 {strides = array<i32>} : memref<1x64xf32, #tpu.memory_space<vmem>>, vector<1x64xf32>,
    } else {
    }
    %c0_i32_14 = arith.constant 0 : i32
    %96 = arith.cmpi ne, %arg1, %c0_i32_14 : i32
    %97 = arith.extui %96 : i1 to i32
    %c0_i32_15 = arith.constant 0 : i32
    %98 = arith.cmpi ne, %97, %c0_i32_15 : i32
    scf.if %98 {
      %c0_18 = arith.constant 0 : index
      %c0_19 = arith.constant 0 : index
      %102 = vector.load %arg6[%c0_18, %c0_19] : memref<1x64xf32, #tpu.memory_space<vmem>>, vector<1x64xf32>
      %103 = arith.maximumf %102, %90 : vector<1x64xf32>
      %c0_20 = arith.constant 0 : index
      %c0_21 = arith.constant 0 : index
      %104 = vector.load %arg6[%c0_20, %c0_21] : memref<1x64xf32, #tpu.memory_space<vmem>>, vector<1x64xf32>
      tpu.vector_store %arg6[%c0_20, %c0_21], %103 {strides = array<i32>} : memref<1x64xf32, #tpu.memory_space<vmem>>, vector<1x64xf32>,
      %c0_22 = arith.constant 0 : index
      %c0_23 = arith.constant 0 : index
      %105 = vector.load %arg7[%c0_22, %c0_23] : memref<1x64xf32, #tpu.memory_space<vmem>>, vector<1x64xf32>
      %106 = arith.addf %105, %92 : vector<1x64xf32>
      %c0_24 = arith.constant 0 : index
      %c0_25 = arith.constant 0 : index
      %107 = vector.load %arg7[%c0_24, %c0_25] : memref<1x64xf32, #tpu.memory_space<vmem>>, vector<1x64xf32>
      tpu.vector_store %arg7[%c0_24, %c0_25], %106 {strides = array<i32>} : memref<1x64xf32, #tpu.memory_space<vmem>>, vector<1x64xf32>,
    } else {
    }
    %c0_i32_16 = arith.constant 0 : i32
    %99 = arith.cmpi eq, %arg1, %c0_i32_16 : i32
    %100 = arith.extui %99 : i1 to i32
    %c0_i32_17 = arith.constant 0 : i32
    %101 = arith.cmpi ne, %100, %c0_i32_17 : i32
    scf.if %101 {
      %c0_18 = arith.constant 0 : index
      %c0_19 = arith.constant 0 : index
      %102 = vector.load %arg6[%c0_18, %c0_19] : memref<1x64xf32, #tpu.memory_space<vmem>>, vector<1x64xf32>
      %c0_20 = arith.constant 0 : index
      %c0_21 = arith.constant 0 : index
      %103 = vector.load %arg7[%c0_20, %c0_21] : memref<1x64xf32, #tpu.memory_space<vmem>>, vector<1x64xf32>
      %cst_22 = arith.constant 6.250000e-02 : f32
      %104 = vector.broadcast %cst_22 : f32 to vector<1x64xf32>
      %105 = arith.mulf %103, %104 : vector<1x64xf32>
      %106 = arith.addf %102, %105 : vector<1x64xf32>
      %c0_23 = arith.constant 0 : index
      %c0_24 = arith.constant 0 : index
      %c0_25 = arith.constant 0 : index
      %107 = vector.load %arg5[%c0_23, %c0_24, %c0_25] : memref<1x1x64xf32, #tpu.memory_space<vmem>>, vector<1x1x64xf32>
      %108 = vector.shape_cast %107 : vector<1x1x64xf32> to vector<1x64xf32>
      %109 = vector.shape_cast %106 : vector<1x64xf32> to vector<1x1x64xf32>
      tpu.vector_store %arg5[%c0_23, %c0_24, %c0_25], %109 {strides = array<i32>} : memref<1x1x64xf32, #tpu.memory_space<vmem>>, vector<1x1x64xf32>,
    } else {
    }
    return
  }
  func.func @transform_0(%arg0: i32, %arg1: i32) -> (i32, i32, i32, i32, i32, i32, i32) {
    %c0_i32 = arith.constant 0 : i32
    %c0_i32_0 = arith.constant 0 : i32
    %c0_i32_1 = arith.constant 0 : i32
    %c0_i32_2 = arith.constant 0 : i32
    %c0_i32_3 = arith.constant 0 : i32
    %c0_i32_4 = arith.constant 0 : i32
    return %arg0, %arg1, %c0_i32, %c0_i32_0, %c0_i32_1, %c0_i32_2, %c0_i32_3 : i32, i32, i32, i32, i32, i32, i32
  }
  func.func @transform_1(%arg0: i32, %arg1: i32) -> (i32, i32) {
    %c0_i32 = arith.constant 0 : i32
    %c0_i32_0 = arith.constant 0 : i32
    %c0_i32_1 = arith.constant 0 : i32
    return %c0_i32, %c0_i32_0 : i32, i32
  }
  func.func @transform_2(%arg0: i32, %arg1: i32) -> (i32, i32) {
    %c0_i32 = arith.constant 0 : i32
    %c0_i32_0 = arith.constant 0 : i32
    %c0_i32_1 = arith.constant 0 : i32
    return %c0_i32, %c0_i32_0 : i32, i32
  }
  func.func @transform_3(%arg0: i32, %arg1: i32) -> (i32, i32, i32) {
    %c0_i32 = arith.constant 0 : i32
    %c0_i32_0 = arith.constant 0 : i32
    %c0_i32_1 = arith.constant 0 : i32
    return %arg0, %c0_i32, %c0_i32_0 : i32, i32, i32
  }
}

</mosaic_0001>

<llo_original>
// kernel: conv_encoder_forward.3
$region0: #{conv_encoder_forward.3}
  #allocation0 [shape = 'u32[]', space=smem, size = 0x4, offset = 0x4, fixed_abs, tag = 'smem constant byte address 0x4 - core index']
  #allocation1 [shape = 'u32[144,128]{1,0:T(1,128)}', space=vmem, size = 0x12000, scoped, tag = 'internal scratch']
  #allocation2 [shape = 'f32[1,64]{1,0:T(1,128)}', space=vmem, size = 0x200, scoped, tag = 'scratch operand']
  #allocation3 [shape = 'f32[1,64]{1,0:T(1,128)}', space=vmem, size = 0x200, scoped, tag = 'scratch operand']
  %s0 = inlined_call_operand.vmem [shape: f32[2,1,2,2,5,5,64], index: 0, kind: input, shape index: {}]
  %s1 = inlined_call_operand.vmem [shape: f32[576,64], index: 1, kind: input, shape index: {}]
  %s2 = inlined_call_operand.vmem [shape: f32[1,64], index: 2, kind: input, shape index: {}]
  %s3 = inlined_call_operand.hbm [shape: f32[2,1,64], index: 3, kind: output, shape index: {}]
  %s4 = sld [smem:[#allocation0]]
  $region57: #{conv_encoder_forward.3} parent=0
    _
  %s6 = ssub.s32 1, %s4
  %s7 = scalar_select 0, %s6, %s4
  $region1: #{conv_encoder_forward.3} parent=0
    #allocation4 [shape = 'u8[1024]{0}', space=vmem, size = 0x400, scoped, tag = 'output window, operand 0']
    #allocation5 [shape = 's32[2]{0}', space=sflag, size = 0x8, scoped, tag = 'scoped memory for conv_encoder_forward.3']
    %8 = vsyncpa [#allocation5], 0
    %s9 = scalar_lea.sflag [#allocation5], 1
    %10 = vsyncpa %s9, 0
    loop: start=0, step=1, limit=4
    $region2: #{conv_encoder_forward.3} parent=1 // loop_pre_header
      _
    $region3: #{conv_encoder_forward.3} parent=1 // loop_header
      %s12 = sphi 0, %s16
      %p13 = scmp.ge.s32.totalorder %s12, 4
      %s19 = sphi 0, %s31
      %s20 = sphi 0, %s27
      %s21 = sphi 0, %s19
      %s22 = sphi 0, %s20
      %s23 = sphi 0, %s21
      %s24 = sphi 0, %s22
      %s36 = sphi 0, %s38
      %s39 = sphi 0, %s36
      %s40 = sphi 0, %s39
      %s56 = sphi 0, %s40
      %s60 = sphi 0, %s60
      %s62 = sphi 0, %s60
      %s63 = sphi 0, %s62
      %s77 = sphi 0, %s63
      %s81 = sphi 0, %s81
      %s83 = sphi 0, %s81
      %s84 = sphi 0, %s83
      %s98 = sphi 0, %s84
      %s104 = sphi 0, %s106
      %s107 = sphi 0, %s104
      %s108 = sphi 0, %s107
      %s124 = sphi 0, %s108
    $region4: #{conv_encoder_forward.3} parent=1 // loop_header_branch
      %15 = sbr.rel (%p13) target = $region8
    $region5: #{conv_encoder_forward.3} parent=1 // loop_body
      %s17 = ssub.s32 %s12, 1
      %s18 = ssub.s32 %s12, 2
      %s25 = sadd.s32 1, %s20
      %p26 = scmp.ge.s32.totalorder %s25, 1
      %s27 = scalar_select %p26, 0, %s25
      %s28 = sadd.s32 1, %s19
      %s29 = scalar_select %p26, %s28, %s19
      %p30 = scmp.ge.s32.totalorder %s29, 2
      %s31 = scalar_select %p30, 0, %s29
      %s32 = ssub.s32 %s19, %s31
      %s33 = ssub.s32 %s20, %s27
      %s34 = sor.u32 %s32, %s33
      %p35 = scmp.eq.s32.totalorder %s34, 0
      %s37 = sadd.s32 %s36, 1
      %s38 = scalar_select %p35, %s36, %s37
      %p41 = pneg %p35
      %p42 = scmp.eq.s32.totalorder %s12, 1
      %p43 = por %p41, %p42
      %p44 = scmp.ne.s32.totalorder %s36, %s39
      %p45 = scmp.eq.s32.totalorder %s12, 0
      %p46 = por %p44, %p45
      %p47 = scmp.ne.s32.totalorder %s36, %s39
      %p48 = scmp.eq.s32.totalorder %s17, 1
      %p49 = por %p47, %p48
      %p50 = scmp.ne.s32.totalorder %s39, %s40
      %p51 = scmp.eq.s32.totalorder %s17, 0
      %p52 = por %p50, %p51
      %p53 = scmp.ne.s32.totalorder %s39, %s40
      %p54 = scmp.eq.s32.totalorder %s18, 1
      %p55 = por %p53, %p54
      %p57 = scmp.ne.s32.totalorder %s40, %s56
      %p58 = scmp.eq.s32.totalorder %s18, 0
      %p59 = por %p57, %p58
      %s61 = sadd.s32 %s60, 1
      %p64 = scmp.eq.s32.totalorder %s12, 1
      %p65 = scmp.ne.s32.totalorder %s60, %s62
      %p66 = scmp.eq.s32.totalorder %s12, 0
      %p67 = por %p65, %p66
      %p68 = scmp.ne.s32.totalorder %s60, %s62
      %p69 = scmp.eq.s32.totalorder %s17, 1
      %p70 = por %p68, %p69
      %p71 = scmp.ne.s32.totalorder %s62, %s63
      %p72 = scmp.eq.s32.totalorder %s17, 0
      %p73 = por %p71, %p72
      %p74 = scmp.ne.s32.totalorder %s62, %s63
      %p75 = scmp.eq.s32.totalorder %s18, 1
      %p76 = por %p74, %p75
      %p78 = scmp.ne.s32.totalorder %s63, %s77
      %p79 = scmp.eq.s32.totalorder %s18, 0
      %p80 = por %p78, %p79
      %s82 = sadd.s32 %s81, 1
      %p85 = scmp.eq.s32.totalorder %s12, 1
      %p86 = scmp.ne.s32.totalorder %s81, %s83
      %p87 = scmp.eq.s32.totalorder %s12, 0
      %p88 = por %p86, %p87
      %p89 = scmp.ne.s32.totalorder %s81, %s83
      %p90 = scmp.eq.s32.totalorder %s17, 1
      %p91 = por %p89, %p90
      %p92 = scmp.ne.s32.totalorder %s83, %s84
      %p93 = scmp.eq.s32.totalorder %s17, 0
      %p94 = por %p92, %p93
      %p95 = scmp.ne.s32.totalorder %s83, %s84
      %p96 = scmp.eq.s32.totalorder %s18, 1
      %p97 = por %p95, %p96
      %p99 = scmp.ne.s32.totalorder %s84, %s98
      %p100 = scmp.eq.s32.totalorder %s18, 0
      %p101 = por %p99, %p100
      %s102 = ssub.s32 %s19, %s31
      %p103 = scmp.eq.s32.totalorder %s102, 0
      %s105 = sadd.s32 %s104, 1
      %s106 = scalar_select %p103, %s104, %s105
      %p109 = pneg %p103
      %p110 = scmp.eq.s32.totalorder %s12, 1
      %p111 = por %p109, %p110
      %p112 = scmp.ne.s32.totalorder %s104, %s107
      %p113 = scmp.eq.s32.totalorder %s12, 0
      %p114 = por %p112, %p113
      %p115 = scmp.ne.s32.totalorder %s104, %s107
      %p116 = scmp.eq.s32.totalorder %s17, 1
      %p117 = por %p115, %p116
      %p118 = scmp.ne.s32.totalorder %s107, %s108
      %p119 = scmp.eq.s32.totalorder %s17, 0
      %p120 = por %p118, %p119
      %p121 = scmp.ne.s32.totalorder %s107, %s108
      %p122 = scmp.eq.s32.totalorder %s18, 1
      %p123 = por %p121, %p122
      %p125 = scmp.ne.s32.totalorder %s108, %s124
      %p126 = scmp.eq.s32.totalorder %s18, 0
      %p127 = por %p125, %p126
      %p128 = scmp.le.s32.totalorder 1, %s12
      %p129 = scmp.lt.s32.totalorder %s12, 3
      %p130 = pnand %p128, %p129
      %p131 = pneg %p130
      // Predicated region
      $region9: #{conv_encoder_forward.3} parent=5 // pred_check
        _
      $region10: #{conv_encoder_forward.3} parent=5 // pred_check_branch
        %133 = sbr.rel (%p130) target = $region12
      $region11: #{conv_encoder_forward.3} parent=5 // pred_region
        %s134 = ssub.s32 %s12, 1
        // Predicated region
        $region13: #{conv_encoder_forward.3} parent=11 // pred_check
          %p135 = pneg %p73
        $region14: #{conv_encoder_forward.3} parent=11 // pred_check_branch
          %137 = sbr.rel (%p135) target = $region16
        $region15: #{conv_encoder_forward.3} parent=11 // pred_region
          _
        $region16: #{conv_encoder_forward.3} parent=11 // pred_fallthru
          _
        // Predicated region
        $region17: #{conv_encoder_forward.3} parent=11 // pred_check
          %p138 = pneg %p94
        $region18: #{conv_encoder_forward.3} parent=11 // pred_check_branch
          %140 = sbr.rel (%p138) target = $region20
        $region19: #{conv_encoder_forward.3} parent=11 // pred_region
          _
        $region20: #{conv_encoder_forward.3} parent=11 // pred_fallthru
          _
      $region12: #{conv_encoder_forward.3} parent=5 // pred_fallthru
        _
      %p141 = scmp.lt.s32.totalorder %s12, 2
      // Predicated region
      $region21: #{conv_encoder_forward.3} parent=5 // pred_check
        %p142 = pneg %p141
      $region22: #{conv_encoder_forward.3} parent=5 // pred_check_branch
        %144 = sbr.rel (%p142) target = $region24
      $region23: #{conv_encoder_forward.3} parent=5 // pred_region
        // Predicated region
        $region25: #{conv_encoder_forward.3} parent=23 // pred_check
          %p145 = pneg %p46
        $region26: #{conv_encoder_forward.3} parent=23 // pred_check_branch
          %147 = sbr.rel (%p145) target = $region28
        $region27: #{conv_encoder_forward.3} parent=23 // pred_region
          %p148 = scmp.lt.s32.totalorder %s19, 1
          %s149 = scalar_select %p148, %s19, 1
          %p150 = scmp.lt.s32.totalorder %s20, 0
          %s151 = scalar_select %p150, %s20, 0
          %s152 = smul.addr %s151, 20
          %s153 = smul.addr %s149, 20
          %s154 = sadd.s32 %s152, %s153
          %s155 = smul.addr %s154, 8
          %s156 = scalar_lea.vmem %s0, %s155
        $region28: #{conv_encoder_forward.3} parent=23 // pred_fallthru
          _
      $region24: #{conv_encoder_forward.3} parent=5 // pred_fallthru
        _
      %p157 = scmp.le.s32.totalorder 1, %s12
      %p158 = scmp.lt.s32.totalorder %s12, 3
      %p159 = pnand %p157, %p158
      %p160 = pneg %p159
      // Predicated region
      $region29: #{conv_encoder_forward.3} parent=5 // pred_check
        _
      $region30: #{conv_encoder_forward.3} parent=5 // pred_check_branch
        %162 = sbr.rel (%p159) target = $region32
      $region31: #{conv_encoder_forward.3} parent=5 // pred_region
        %s163 = ssub.s32 %s12, 1
        %p164 = scmp.lt.s32.totalorder %s21, 1
        %s165 = scalar_select %p164, %s21, 1
        %p166 = scmp.lt.s32.totalorder %s22, 0
        %s167 = scalar_select %p166, %s22, 0
        %s168 = smul.addr %s167, 20
        %s169 = smul.addr %s165, 20
        %s170 = sadd.s32 %s168, %s169
        %s171 = smul.addr %s170, 8
        %s172 = scalar_lea.vmem %s0, %s171
        %p173 = pneg %p52
        %p174 = pneg %p49
        %p175 = pneg %p73
        %p176 = pneg %p70
        %p177 = pneg %p94
        %p178 = pneg %p91
        %p179 = pneg %p120
        %p180 = pneg %p117
        %s181 = sand.u32 %s107, 1
        %s182 = scalar_lea.sflag [#allocation5], %s181
        %s183 = sand.u32 %s107, 1
        %s184 = scalar_lea.vmem [#allocation4], %s183
        %p185 = scmp.lt.s32.totalorder %s21, 1
        %s186 = scalar_select %p185, %s21, 1
        %p187 = scmp.lt.s32.totalorder %s22, 0
        %s188 = scalar_select %p187, %s22, 0
        %s189 = smul.addr %s188, 20
        %s190 = smul.addr %s186, 20
        %s191 = sadd.s32 %s189, %s190
        %s192 = smul.addr %s191, 8
        %s193 = scalar_lea.vmem %s0, %s192
        %v194 = vld [vmem:[%s193] sm:$0x1f]
        %v195 = vld [vmem:[%s193 + $0x8] sm:$0x1f]
        %v196 = vld [vmem:[%s193 + $0x10] sm:$0x1f]
        %v197 = vld [vmem:[%s193 + $0x18] sm:$0x1f]
        %v198 = vld [vmem:[%s193 + $0x20] sm:$0x1f]
        %v199 = vld [vmem:[%s193 + $0x28] sm:$0x1f]
        %v200 = vld [vmem:[%s193 + $0x30] sm:$0x1f]
        %v201 = vld [vmem:[%s193 + $0x38] sm:$0x1f]
        %v202 = vld [vmem:[%s193 + $0x40] sm:$0x1f]
        %v203 = vld [vmem:[%s193 + $0x48] sm:$0x1f]
        %v204 = vld [vmem:[%s193 + $0x50] sm:$0x1f]
        %v205 = vld [vmem:[%s193 + $0x58] sm:$0x1f]
        %v206 = vld [vmem:[%s193 + $0x60] sm:$0x1f]
        %v207 = vld [vmem:[%s193 + $0x68] sm:$0x1f]
        %v208 = vld [vmem:[%s193 + $0x70] sm:$0x1f]
        %v209 = vld [vmem:[%s193 + $0x78] sm:$0x1f]
        %v210 = vld [vmem:[%s193 + $0x80] sm:$0x1f]
        %v211 = vld [vmem:[%s193 + $0x88] sm:$0x1f]
        %v212 = vld [vmem:[%s193 + $0x90] sm:$0x1f]
        %v213 = vld [vmem:[%s193 + $0x98] sm:$0x1f]
        %218 = vrot.lane.b32.xlu0 %v199, 64
        %v219 = vpop.permute.xlu0 %218
        %220 = vrot.lane.b32.xlu0 %v200, 64
        %v221 = vpop.permute.xlu0 %220
        %222 = vrot.lane.b32.xlu0 %v201, 64
        %v223 = vpop.permute.xlu0 %222
        %224 = vrot.lane.b32.xlu0 %v202, 64
        %v225 = vpop.permute.xlu0 %224
        %v234 = vrot.slane %v194, 1
        %v235 = vrot.slane %v195, 1
        %v236 = vrot.slane %v196, 1
        %v237 = vrot.slane %v197, 1
        %246 = vrot.lane.b32.xlu0 %v204, 64
        %v247 = vpop.permute.xlu0 %246
        %248 = vrot.lane.b32.xlu0 %v205, 64
        %v249 = vpop.permute.xlu0 %248
        %250 = vrot.lane.b32.xlu0 %v206, 64
        %v251 = vpop.permute.xlu0 %250
        %252 = vrot.lane.b32.xlu0 %v207, 64
        %v253 = vpop.permute.xlu0 %252
        %v258 = vrot.slane %v204, 1
        %v259 = vrot.slane %v205, 1
        %v260 = vrot.slane %v206, 1
        %v261 = vrot.slane %v207, 1
        %262 = vrot.lane.b32.xlu0 %v258, 64
        %v263 = vpop.permute.xlu0 %262
        %264 = vrot.lane.b32.xlu0 %v259, 64
        %v265 = vpop.permute.xlu0 %264
        %266 = vrot.lane.b32.xlu0 %v260, 64
        %v267 = vpop.permute.xlu0 %266
        %268 = vrot.lane.b32.xlu0 %v261, 64
        %v269 = vpop.permute.xlu0 %268
        %275 = vrot.lane.b32.xlu0 %v203, 64
        %v276 = vpop.permute.xlu0 %275
        %v279 = vrot.slane %v198, 1
        %vm280 = vcmask 523264
        %v281 = vsel %vm280, %v194, %v219
        %v282 = vsel %vm280, %v195, %v221
        %v283 = vsel %vm280, %v196, %v223
        %v284 = vsel %vm280, %v197, %v225
        %v285 = vsel %vm280, %v234, %v247
        %v286 = vsel %vm280, %v235, %v249
        %v287 = vsel %vm280, %v236, %v251
        %v288 = vsel %vm280, %v237, %v253
        %v289 = vsel %vm280, %v209, %v263
        %v290 = vsel %vm280, %v210, %v265
        %v291 = vsel %vm280, %v211, %v267
        %v292 = vsel %vm280, %v212, %v269
        %v293 = vsel %vm280, %v198, %v276
        %v298 = vrot.slane %v282, 4
        %v299 = vrot.slane %v286, 4
        %v300 = vrot.slane %v290, 4
        %v301 = vrot.slane %v283, 4
        %v302 = vrot.slane %v236, 4
        %v312 = vrot.slane %v284, 4
        %v313 = vrot.slane %v288, 4
        %v314 = vrot.slane %v292, 4
        %v315 = vrot.slane %v293, 4
        %v316 = vrot.slane %v279, 4
        %vm322 = vcmask 1043456
        %v323 = vsel %vm322, %v281, %v298
        %v324 = vsel %vm322, %v285, %v299
        %v325 = vsel %vm322, %v289, %v300
        %v326 = vsel %vm322, %v282, %v301
        %v327 = vsel %vm322, %v235, %v302
        %v328 = vsel %vm322, %v283, %v312
        %v329 = vsel %vm322, %v287, %v313
        %v330 = vsel %vm322, %v291, %v314
        %v331 = vsel %vm322, %v284, %v315
        %v332 = vsel %vm322, %v237, %v316
        %333 = vrot.lane.b32.xlu0 %v234, 64
        %v334 = vpop.permute.xlu0 %333
        %335 = vrot.lane.b32.xlu0 %v235, 64
        %v336 = vpop.permute.xlu0 %335
        %337 = vrot.lane.b32.xlu0 %v236, 64
        %v338 = vpop.permute.xlu0 %337
        %339 = vrot.lane.b32.xlu0 %v237, 64
        %v340 = vpop.permute.xlu0 %339
        %v345 = vrot.slane %v199, 1
        %v346 = vrot.slane %v200, 1
        %v347 = vrot.slane %v201, 1
        %v348 = vrot.slane %v202, 1
        %357 = vrot.lane.b32.xlu0 %v209, 64
        %v358 = vpop.permute.xlu0 %357
        %359 = vrot.lane.b32.xlu0 %v210, 64
        %v360 = vpop.permute.xlu0 %359
        %361 = vrot.lane.b32.xlu0 %v211, 64
        %v362 = vpop.permute.xlu0 %361
        %363 = vrot.lane.b32.xlu0 %v212, 64
        %v364 = vpop.permute.xlu0 %363
        %v373 = vrot.slane %v209, 1
        %v374 = vrot.slane %v210, 1
        %v375 = vrot.slane %v211, 1
        %v376 = vrot.slane %v212, 1
        %377 = vrot.lane.b32.xlu0 %v373, 64
        %v378 = vpop.permute.xlu0 %377
        %379 = vrot.lane.b32.xlu0 %v374, 64
        %v380 = vpop.permute.xlu0 %379
        %381 = vrot.lane.b32.xlu0 %v375, 64
        %v382 = vpop.permute.xlu0 %381
        %383 = vrot.lane.b32.xlu0 %v376, 64
        %v384 = vpop.permute.xlu0 %383
        %389 = vrot.lane.b32.xlu0 %v279, 64
        %v390 = vpop.permute.xlu0 %389
        %v392 = vrot.slane %v203, 1
        %v393 = vsel %vm280, %v199, %v334
        %v394 = vsel %vm280, %v200, %v336
        %v395 = vsel %vm280, %v201, %v338
        %v396 = vsel %vm280, %v202, %v340
        %v397 = vsel %vm280, %v345, %v358
        %v398 = vsel %vm280, %v346, %v360
        %v399 = vsel %vm280, %v347, %v362
        %v400 = vsel %vm280, %v348, %v364
        %v401 = vsel %vm280, %v258, %v378
        %v402 = vsel %vm280, %v259, %v380
        %v403 = vsel %vm280, %v260, %v382
        %v404 = vsel %vm280, %v261, %v384
        %v405 = vsel %vm280, %v203, %v390
        %v410 = vrot.slane %v394, 4
        %v411 = vrot.slane %v398, 4
        %v412 = vrot.slane %v402, 4
        %v413 = vrot.slane %v395, 4
        %v414 = vrot.slane %v347, 4
        %v424 = vrot.slane %v396, 4
        %v425 = vrot.slane %v400, 4
        %v426 = vrot.slane %v404, 4
        %v427 = vrot.slane %v405, 4
        %v428 = vrot.slane %v392, 4
        %v434 = vsel %vm322, %v393, %v410
        %v435 = vsel %vm322, %v397, %v411
        %v436 = vsel %vm322, %v401, %v412
        %v437 = vsel %vm322, %v394, %v413
        %v438 = vsel %vm322, %v346, %v414
        %v439 = vsel %vm322, %v395, %v424
        %v440 = vsel %vm322, %v399, %v425
        %v441 = vsel %vm322, %v403, %v426
        %v442 = vsel %vm322, %v396, %v427
        %v443 = vsel %vm322, %v348, %v428
        %444 = vrot.lane.b32.xlu0 %v195, 64
        %v445 = vpop.permute.xlu0 %444
        %446 = vrot.lane.b32.xlu0 %v196, 64
        %v447 = vpop.permute.xlu0 %446
        %448 = vrot.lane.b32.xlu0 %v197, 64
        %v449 = vpop.permute.xlu0 %448
        %450 = vrot.lane.b32.xlu0 %v198, 64
        %v451 = vpop.permute.xlu0 %450
        %457 = vrot.lane.b32.xlu0 %v213, 64
        %v458 = vpop.permute.xlu0 %457
        %v461 = vrot.slane %v208, 1
        %v462 = vsel %vm280, %v204, %v358
        %v463 = vsel %vm280, %v205, %v360
        %v464 = vsel %vm280, %v206, %v362
        %v465 = vsel %vm280, %v207, %v364
        %v466 = vsel %vm280, %v258, %v445
        %v467 = vsel %vm280, %v259, %v447
        %v468 = vsel %vm280, %v260, %v449
        %v469 = vsel %vm280, %v261, %v451
        %v470 = vsel %vm280, %v208, %v458
        %v474 = vrot.slane %v463, 4
        %v475 = vrot.slane %v467, 4
        %v476 = vrot.slane %v464, 4
        %v477 = vrot.slane %v260, 4
        %v485 = vrot.slane %v465, 4
        %v486 = vrot.slane %v469, 4
        %v487 = vrot.slane %v470, 4
        %v488 = vrot.slane %v461, 4
        %v493 = vsel %vm322, %v462, %v474
        %v494 = vsel %vm322, %v466, %v475
        %v495 = vsel %vm322, %v463, %v476
        %v496 = vsel %vm322, %v259, %v477
        %v497 = vsel %vm322, %v464, %v485
        %v498 = vsel %vm322, %v468, %v486
        %v499 = vsel %vm322, %v465, %v487
        %v500 = vsel %vm322, %v261, %v488
        %506 = vrot.lane.b32.xlu0 %v346, 64
        %v507 = vpop.permute.xlu0 %506
        %508 = vrot.lane.b32.xlu0 %v347, 64
        %v509 = vpop.permute.xlu0 %508
        %510 = vrot.lane.b32.xlu0 %v348, 64
        %v511 = vpop.permute.xlu0 %510
        %512 = vrot.lane.b32.xlu0 %v392, 64
        %v513 = vpop.permute.xlu0 %512
        %518 = vrot.lane.b32.xlu0 %v461, 64
        %v519 = vpop.permute.xlu0 %518
        %v521 = vrot.slane %v213, 1
        %v522 = vsel %vm280, %v373, %v221
        %v523 = vsel %vm280, %v374, %v223
        %v524 = vsel %vm280, %v375, %v225
        %v525 = vsel %vm280, %v376, %v276
        %v526 = vsel %vm280, %v235, %v507
        %v527 = vsel %vm280, %v236, %v509
        %v528 = vsel %vm280, %v237, %v511
        %v529 = vsel %vm280, %v279, %v513
        %v530 = vsel %vm280, %v213, %v519
        %v534 = vrot.slane %v523, 4
        %v535 = vrot.slane %v527, 4
        %v536 = vrot.slane %v291, 4
        %v537 = vrot.slane %v375, 4
        %v545 = vrot.slane %v525, 4
        %v546 = vrot.slane %v529, 4
        %v547 = vrot.slane %v530, 4
        %v548 = vrot.slane %v521, 4
        %v553 = vsel %vm322, %v522, %v534
        %v554 = vsel %vm322, %v526, %v535
        %v555 = vsel %vm322, %v290, %v536
        %v556 = vsel %vm322, %v374, %v537
        %v557 = vsel %vm322, %v524, %v545
        %v558 = vsel %vm322, %v528, %v546
        %v559 = vsel %vm322, %v292, %v547
        %v560 = vsel %vm322, %v376, %v548
        %v561 = vld [vmem:[%s1] sm:$0xff]
        %v562 = vld [vmem:[%s1 + $0x8] sm:$0xff]
        %v563 = vld [vmem:[%s1 + $0x10] sm:$0xff]
        %v564 = vld [vmem:[%s1 + $0x18] sm:$0xff]
        %v565 = vld [vmem:[%s1 + $0x20] sm:$0xff]
        %v566 = vld [vmem:[%s1 + $0x28] sm:$0xff]
        %v567 = vld [vmem:[%s1 + $0x30] sm:$0xff]
        %v568 = vld [vmem:[%s1 + $0x38] sm:$0xff]
        %v569 = vld [vmem:[%s1 + $0x40] sm:$0xff]
        %v570 = vld [vmem:[%s1 + $0x48] sm:$0xff]
        %v571 = vld [vmem:[%s1 + $0x50] sm:$0xff]
        %v572 = vld [vmem:[%s1 + $0x58] sm:$0xff]
        %v573 = vld [vmem:[%s1 + $0x60] sm:$0xff]
        %v574 = vld [vmem:[%s1 + $0x68] sm:$0xff]
        %v575 = vld [vmem:[%s1 + $0x70] sm:$0xff]
        %v576 = vld [vmem:[%s1 + $0x78] sm:$0xff]
        %v577 = vld [vmem:[%s1 + $0x80] sm:$0xff]
        %v578 = vld [vmem:[%s1 + $0x88] sm:$0xff]
        %v579 = vld [vmem:[%s1 + $0x90] sm:$0xff]
        %v580 = vld [vmem:[%s1 + $0x98] sm:$0xff]
        %v581 = vld [vmem:[%s1 + $0xa0] sm:$0xff]
        %v582 = vld [vmem:[%s1 + $0xa8] sm:$0xff]
        %v583 = vld [vmem:[%s1 + $0xb0] sm:$0xff]
        %v584 = vld [vmem:[%s1 + $0xb8] sm:$0xff]
        %v585 = vld [vmem:[%s1 + $0xc0] sm:$0xff]
        %v586 = vld [vmem:[%s1 + $0xc8] sm:$0xff]
        %v587 = vld [vmem:[%s1 + $0xd0] sm:$0xff]
        %v588 = vld [vmem:[%s1 + $0xd8] sm:$0xff]
        %v589 = vld [vmem:[%s1 + $0xe0] sm:$0xff]
        %v590 = vld [vmem:[%s1 + $0xe8] sm:$0xff]
        %v591 = vld [vmem:[%s1 + $0xf0] sm:$0xff]
        %v592 = vld [vmem:[%s1 + $0xf8] sm:$0xff]
        %v593 = vld [vmem:[%s1 + $0x100] sm:$0xff]
        %v594 = vld [vmem:[%s1 + $0x108] sm:$0xff]
        %v595 = vld [vmem:[%s1 + $0x110] sm:$0xff]
        %v596 = vld [vmem:[%s1 + $0x118] sm:$0xff]
        %v597 = vld [vmem:[%s1 + $0x120] sm:$0xff]
        %v598 = vld [vmem:[%s1 + $0x128] sm:$0xff]
        %v599 = vld [vmem:[%s1 + $0x130] sm:$0xff]
        %v600 = vld [vmem:[%s1 + $0x138] sm:$0xff]
        %v601 = vld [vmem:[%s1 + $0x140] sm:$0xff]
        %v602 = vld [vmem:[%s1 + $0x148] sm:$0xff]
        %v603 = vld [vmem:[%s1 + $0x150] sm:$0xff]
        %v604 = vld [vmem:[%s1 + $0x158] sm:$0xff]
        %v605 = vld [vmem:[%s1 + $0x160] sm:$0xff]
        %v606 = vld [vmem:[%s1 + $0x168] sm:$0xff]
        %v607 = vld [vmem:[%s1 + $0x170] sm:$0xff]
        %v608 = vld [vmem:[%s1 + $0x178] sm:$0xff]
        %v609 = vld [vmem:[%s1 + $0x180] sm:$0xff]
        %v610 = vld [vmem:[%s1 + $0x188] sm:$0xff]
        %v611 = vld [vmem:[%s1 + $0x190] sm:$0xff]
        %v612 = vld [vmem:[%s1 + $0x198] sm:$0xff]
        %v613 = vld [vmem:[%s1 + $0x1a0] sm:$0xff]
        %v614 = vld [vmem:[%s1 + $0x1a8] sm:$0xff]
        %v615 = vld [vmem:[%s1 + $0x1b0] sm:$0xff]
        %v616 = vld [vmem:[%s1 + $0x1b8] sm:$0xff]
        %v617 = vld [vmem:[%s1 + $0x1c0] sm:$0xff]
        %v618 = vld [vmem:[%s1 + $0x1c8] sm:$0xff]
        %v619 = vld [vmem:[%s1 + $0x1d0] sm:$0xff]
        %v620 = vld [vmem:[%s1 + $0x1d8] sm:$0xff]
        %v621 = vld [vmem:[%s1 + $0x1e0] sm:$0xff]
        %v622 = vld [vmem:[%s1 + $0x1e8] sm:$0xff]
        %v623 = vld [vmem:[%s1 + $0x1f0] sm:$0xff]
        %v624 = vld [vmem:[%s1 + $0x1f8] sm:$0xff]
        %v625 = vld [vmem:[%s1 + $0x200] sm:$0xff]
        %v626 = vld [vmem:[%s1 + $0x208] sm:$0xff]
        %v627 = vld [vmem:[%s1 + $0x210] sm:$0xff]
        %v628 = vld [vmem:[%s1 + $0x218] sm:$0xff]
        %v629 = vld [vmem:[%s1 + $0x220] sm:$0xff]
        %v630 = vld [vmem:[%s1 + $0x228] sm:$0xff]
        %v631 = vld [vmem:[%s1 + $0x230] sm:$0xff]
        %v632 = vld [vmem:[%s1 + $0x238] sm:$0xff]
        %v634 = vsel %vm280, %v327, 0
        %v637 = vsel %vm280, %v332, 0
        %v640 = vsel %vm280, %v438, 0
        %v643 = vsel %vm280, %v443, 0
        %v646 = vsel %vm280, %v496, 0
        %v649 = vsel %vm280, %v500, 0
        %v652 = vsel %vm280, %v556, 0
        %v655 = vsel %vm280, %v560, 0
        %657 = vmatprep.subr.mxu0 0.0
        %658 = vmatpush1.msra.mxu0 %v576
        %659 = vmatprep.subr.mxu0 0.0
        %660 = vmatpush1.msra.mxu0 %v575
        %661 = vmatprep.subr.mxu0 0.0
        %662 = vmatpush1.msra.mxu0 %v574
        %663 = vmatprep.subr.mxu0 0.0
        %664 = vmatpush1.msra.mxu0 %v573
        %665 = vmatprep.subr.mxu0 0.0
        %666 = vmatpush1.msra.mxu0 %v572
        %667 = vmatprep.subr.mxu0 0.0
        %668 = vmatpush1.msra.mxu0 %v571
        %669 = vmatprep.subr.mxu0 0.0
        %670 = vmatpush1.msra.mxu0 %v570
        %671 = vmatprep.subr.mxu0 0.0
        %672 = vmatpush1.msra.mxu0 %v569
        %673 = vmatprep.subr.mxu0 0.0
        %674 = vmatpush1.msra.mxu0 %v568
        %675 = vmatprep.subr.mxu0 0.0
        %676 = vmatpush1.msra.mxu0 %v567
        %677 = vmatprep.subr.mxu0 0.0
        %678 = vmatpush1.msra.mxu0 %v566
        %679 = vmatprep.subr.mxu0 0.0
        %680 = vmatpush1.msra.mxu0 %v565
        %681 = vmatprep.subr.mxu0 0.0
        %682 = vmatpush1.msra.mxu0 %v564
        %683 = vmatprep.subr.mxu0 0.0
        %684 = vmatpush1.msra.mxu0 %v563
        %685 = vmatprep.subr.mxu0 0.0
        %686 = vmatpush1.msra.mxu0 %v562
        %687 = vmatprep.subr.mxu0 0.0
        %688 = vmatpush1.msra.mxu0 %v561
        %689 = vmatprep.subr.mxu0 0.0
        %690 = vmatpush2.msra.mxu0 %v592
        %691 = vmatprep.subr.mxu0 0.0
        %692 = vmatpush2.msra.mxu0 %v591
        %693 = vmatprep.subr.mxu0 0.0
        %694 = vmatpush2.msra.mxu0 %v590
        %695 = vmatprep.subr.mxu0 0.0
        %696 = vmatpush2.msra.mxu0 %v589
        %697 = vmatprep.subr.mxu0 0.0
        %698 = vmatpush2.msra.mxu0 %v588
        %699 = vmatprep.subr.mxu0 0.0
        %700 = vmatpush2.msra.mxu0 %v587
        %701 = vmatprep.subr.mxu0 0.0
        %702 = vmatpush2.msra.mxu0 %v586
        %703 = vmatprep.subr.mxu0 0.0
        %704 = vmatpush2.msra.mxu0 %v585
        %705 = vmatprep.subr.mxu0 0.0
        %706 = vmatpush2.msra.mxu0 %v584
        %707 = vmatprep.subr.mxu0 0.0
        %708 = vmatpush2.msra.mxu0 %v583
        %709 = vmatprep.subr.mxu0 0.0
        %710 = vmatpush2.msra.mxu0 %v582
        %711 = vmatprep.subr.mxu0 0.0
        %712 = vmatpush2.msra.mxu0 %v581
        %713 = vmatprep.subr.mxu0 0.0
        %714 = vmatpush2.msra.mxu0 %v580
        %715 = vmatprep.subr.mxu0 0.0
        %716 = vmatpush2.msra.mxu0 %v579
        %717 = vmatprep.subr.mxu0 0.0
        %718 = vmatpush2.msra.mxu0 %v578
        %719 = vmatprep.subr.mxu0 0.0
        %720 = vmatpush2.msra.mxu0 %v577
        %721 = vmatprep.mubr.f32.mxu0 %v324
        %722 = vmatmul.mubr.f32.gmra.mxu0 %v323
        %v723 = vpop.f32.mrf.mxu0
        %v724 = vadd.f32 0.0, %v723
        %v725 = vpop.f32.mrf.mxu0
        %726 = vmatprep.mubr.f32.mxu0 %v329
        %727 = vmatmul.mubr.f32.gmra.mxu0 %v328
        %v728 = vpop.f32.mrf.mxu0
        %v729 = vadd.f32 0.0, %v728
        %v730 = vpop.f32.mrf.mxu0
        %731 = vmatprep.mubr.f32.mxu0 %v435
        %732 = vmatmul.mubr.f32.gmra.mxu0 %v434
        %v733 = vpop.f32.mrf.mxu0
        %v734 = vadd.f32 0.0, %v733
        %v735 = vpop.f32.mrf.mxu0
        %736 = vmatprep.mubr.f32.mxu0 %v440
        %737 = vmatmul.mubr.f32.gmra.mxu0 %v439
        %v738 = vpop.f32.mrf.mxu0
        %v739 = vadd.f32 0.0, %v738
        %v740 = vpop.f32.mrf.mxu0
        %741 = vmatprep.mubr.f32.mxu0 %v494
        %742 = vmatmul.mubr.f32.gmra.mxu0 %v493
        %v743 = vpop.f32.mrf.mxu0
        %v744 = vadd.f32 0.0, %v743
        %v745 = vpop.f32.mrf.mxu0
        %746 = vmatprep.mubr.f32.mxu0 %v498
        %747 = vmatmul.mubr.f32.gmra.mxu0 %v497
        %v748 = vpop.f32.mrf.mxu0
        %v749 = vadd.f32 0.0, %v748
        %v750 = vpop.f32.mrf.mxu0
        %751 = vmatprep.mubr.f32.mxu0 %v553
        %752 = vmatmul.mubr.f32.gmra.mxu0 %v325
        %v753 = vpop.f32.mrf.mxu0
        %v754 = vadd.f32 0.0, %v753
        %v755 = vpop.f32.mrf.mxu0
        %756 = vmatprep.mubr.f32.mxu0 %v557
        %757 = vmatmul.mubr.f32.gmra.mxu0 %v330
        %v758 = vpop.f32.mrf.mxu0
        %v759 = vadd.f32 0.0, %v758
        %v760 = vpop.f32.mrf.mxu0
        %761 = vdwg.mxu0
        %762 = vmatprep.subr.mxu0 0.0
        %763 = vmatpush1.msra.mxu0 %v608
        %764 = vmatprep.subr.mxu0 0.0
        %765 = vmatpush1.msra.mxu0 %v607
        %766 = vmatprep.subr.mxu0 0.0
        %767 = vmatpush1.msra.mxu0 %v606
        %768 = vmatprep.subr.mxu0 0.0
        %769 = vmatpush1.msra.mxu0 %v605
        %770 = vmatprep.subr.mxu0 0.0
        %771 = vmatpush1.msra.mxu0 %v604
        %772 = vmatprep.subr.mxu0 0.0
        %773 = vmatpush1.msra.mxu0 %v603
        %774 = vmatprep.subr.mxu0 0.0
        %775 = vmatpush1.msra.mxu0 %v602
        %776 = vmatprep.subr.mxu0 0.0
        %777 = vmatpush1.msra.mxu0 %v601
        %778 = vmatprep.subr.mxu0 0.0
        %779 = vmatpush1.msra.mxu0 %v600
        %780 = vmatprep.subr.mxu0 0.0
        %781 = vmatpush1.msra.mxu0 %v599
        %782 = vmatprep.subr.mxu0 0.0
        %783 = vmatpush1.msra.mxu0 %v598
        %784 = vmatprep.subr.mxu0 0.0
        %785 = vmatpush1.msra.mxu0 %v597
        %786 = vmatprep.subr.mxu0 0.0
        %787 = vmatpush1.msra.mxu0 %v596
        %788 = vmatprep.subr.mxu0 0.0
        %789 = vmatpush1.msra.mxu0 %v595
        %790 = vmatprep.subr.mxu0 0.0
        %791 = vmatpush1.msra.mxu0 %v594
        %792 = vmatprep.subr.mxu0 0.0
        %793 = vmatpush1.msra.mxu0 %v593
        %794 = vmatprep.subr.mxu0 0.0
        %795 = vmatpush2.msra.mxu0 %v624
        %796 = vmatprep.subr.mxu0 0.0
        %797 = vmatpush2.msra.mxu0 %v623
        %798 = vmatprep.subr.mxu0 0.0
        %799 = vmatpush2.msra.mxu0 %v622
        %800 = vmatprep.subr.mxu0 0.0
        %801 = vmatpush2.msra.mxu0 %v621
        %802 = vmatprep.subr.mxu0 0.0
        %803 = vmatpush2.msra.mxu0 %v620
        %804 = vmatprep.subr.mxu0 0.0
        %805 = vmatpush2.msra.mxu0 %v619
        %806 = vmatprep.subr.mxu0 0.0
        %807 = vmatpush2.msra.mxu0 %v618
        %808 = vmatprep.subr.mxu0 0.0
        %809 = vmatpush2.msra.mxu0 %v617
        %810 = vmatprep.subr.mxu0 0.0
        %811 = vmatpush2.msra.mxu0 %v616
        %812 = vmatprep.subr.mxu0 0.0
        %813 = vmatpush2.msra.mxu0 %v615
        %814 = vmatprep.subr.mxu0 0.0
        %815 = vmatpush2.msra.mxu0 %v614
        %816 = vmatprep.subr.mxu0 0.0
        %817 = vmatpush2.msra.mxu0 %v613
        %818 = vmatprep.subr.mxu0 0.0
        %819 = vmatpush2.msra.mxu0 %v612
        %820 = vmatprep.subr.mxu0 0.0
        %821 = vmatpush2.msra.mxu0 %v611
        %822 = vmatprep.subr.mxu0 0.0
        %823 = vmatpush2.msra.mxu0 %v610
        %824 = vmatprep.subr.mxu0 0.0
        %825 = vmatpush2.msra.mxu0 %v609
        %826 = vmatprep.mubr.f32.mxu0 %v326
        %827 = vmatmul.mubr.f32.gmra.mxu0 %v325
        %v828 = vpop.f32.mrf.mxu0
        %v829 = vadd.f32 %v724, %v828
        %v830 = vpop.f32.mrf.mxu0
        %831 = vmatprep.mubr.f32.mxu0 %v331
        %832 = vmatmul.mubr.f32.gmra.mxu0 %v330
        %v833 = vpop.f32.mrf.mxu0
        %v834 = vadd.f32 %v729, %v833
        %v835 = vpop.f32.mrf.mxu0
        %836 = vmatprep.mubr.f32.mxu0 %v437
        %837 = vmatmul.mubr.f32.gmra.mxu0 %v436
        %v838 = vpop.f32.mrf.mxu0
        %v839 = vadd.f32 %v734, %v838
        %v840 = vpop.f32.mrf.mxu0
        %841 = vmatprep.mubr.f32.mxu0 %v442
        %842 = vmatmul.mubr.f32.gmra.mxu0 %v441
        %v843 = vpop.f32.mrf.mxu0
        %v844 = vadd.f32 %v739, %v843
        %v845 = vpop.f32.mrf.mxu0
        %846 = vmatprep.mubr.f32.mxu0 %v495
        %847 = vmatmul.mubr.f32.gmra.mxu0 %v437
        %v848 = vpop.f32.mrf.mxu0
        %v849 = vadd.f32 %v744, %v848
        %v850 = vpop.f32.mrf.mxu0
        %851 = vmatprep.mubr.f32.mxu0 %v499
        %852 = vmatmul.mubr.f32.gmra.mxu0 %v442
        %v853 = vpop.f32.mrf.mxu0
        %v854 = vadd.f32 %v749, %v853
        %v855 = vpop.f32.mrf.mxu0
        %856 = vmatprep.mubr.f32.mxu0 %v555
        %857 = vmatmul.mubr.f32.gmra.mxu0 %v554
        %v858 = vpop.f32.mrf.mxu0
        %v859 = vadd.f32 %v754, %v858
        %v860 = vpop.f32.mrf.mxu0
        %861 = vmatprep.mubr.f32.mxu0 %v559
        %862 = vmatmul.mubr.f32.gmra.mxu0 %v558
        %v863 = vpop.f32.mrf.mxu0
        %v864 = vadd.f32 %v759, %v863
        %v865 = vpop.f32.mrf.mxu0
        %866 = vdwg.mxu0
        %867 = vmatprep.subr.mxu0 0.0
        %868 = vmatpush1.msra.mxu0 0.0
        %869 = vmatprep.subr.mxu0 0.0
        %870 = vmatpush1.msra.mxu0 0.0
        %871 = vmatprep.subr.mxu0 0.0
        %872 = vmatpush1.msra.mxu0 0.0
        %873 = vmatprep.subr.mxu0 0.0
        %874 = vmatpush1.msra.mxu0 0.0
        %875 = vmatprep.subr.mxu0 0.0
        %876 = vmatpush1.msra.mxu0 0.0
        %877 = vmatprep.subr.mxu0 0.0
        %878 = vmatpush1.msra.mxu0 0.0
        %879 = vmatprep.subr.mxu0 0.0
        %880 = vmatpush1.msra.mxu0 0.0
        %881 = vmatprep.subr.mxu0 0.0
        %882 = vmatpush1.msra.mxu0 0.0
        %883 = vmatprep.subr.mxu0 0.0
        %884 = vmatpush1.msra.mxu0 %v632
        %885 = vmatprep.subr.mxu0 0.0
        %886 = vmatpush1.msra.mxu0 %v631
        %887 = vmatprep.subr.mxu0 0.0
        %888 = vmatpush1.msra.mxu0 %v630
        %889 = vmatprep.subr.mxu0 0.0
        %890 = vmatpush1.msra.mxu0 %v629
        %891 = vmatprep.subr.mxu0 0.0
        %892 = vmatpush1.msra.mxu0 %v628
        %893 = vmatprep.subr.mxu0 0.0
        %894 = vmatpush1.msra.mxu0 %v627
        %895 = vmatprep.subr.mxu0 0.0
        %896 = vmatpush1.msra.mxu0 %v626
        %897 = vmatprep.subr.mxu0 0.0
        %898 = vmatpush1.msra.mxu0 %v625
        %899 = vmatprep.subr.mxu0 0.0
        %900 = vmatpush2.msra.mxu0 0.0
        %901 = vmatprep.subr.mxu0 0.0
        %902 = vmatpush2.msra.mxu0 0.0
        %903 = vmatprep.subr.mxu0 0.0
        %904 = vmatpush2.msra.mxu0 0.0
        %905 = vmatprep.subr.mxu0 0.0
        %906 = vmatpush2.msra.mxu0 0.0
        %907 = vmatprep.subr.mxu0 0.0
        %908 = vmatpush2.msra.mxu0 0.0
        %909 = vmatprep.subr.mxu0 0.0
        %910 = vmatpush2.msra.mxu0 0.0
        %911 = vmatprep.subr.mxu0 0.0
        %912 = vmatpush2.msra.mxu0 0.0
        %913 = vmatprep.subr.mxu0 0.0
        %914 = vmatpush2.msra.mxu0 0.0
        %915 = vmatprep.subr.mxu0 0.0
        %916 = vmatpush2.msra.mxu0 0.0
        %917 = vmatprep.subr.mxu0 0.0
        %918 = vmatpush2.msra.mxu0 0.0
        %919 = vmatprep.subr.mxu0 0.0
        %920 = vmatpush2.msra.mxu0 0.0
        %921 = vmatprep.subr.mxu0 0.0
        %922 = vmatpush2.msra.mxu0 0.0
        %923 = vmatprep.subr.mxu0 0.0
        %924 = vmatpush2.msra.mxu0 0.0
        %925 = vmatprep.subr.mxu0 0.0
        %926 = vmatpush2.msra.mxu0 0.0
        %927 = vmatprep.subr.mxu0 0.0
        %928 = vmatpush2.msra.mxu0 0.0
        %929 = vmatprep.subr.mxu0 0.0
        %930 = vmatpush2.msra.mxu0 0.0
        %931 = vmatprep.mubr.f32.mxu0 0.0
        %932 = vmatmul.mubr.f32.gmra.mxu0 %v634
        %v933 = vpop.f32.mrf.mxu0
        %v934 = vadd.f32 %v829, %v933
        %v935 = vpop.f32.mrf.mxu0
        %936 = vmatprep.mubr.f32.mxu0 0.0
        %937 = vmatmul.mubr.f32.gmra.mxu0 %v637
        %v938 = vpop.f32.mrf.mxu0
        %v939 = vadd.f32 %v834, %v938
        %v940 = vpop.f32.mrf.mxu0
        %941 = vmatprep.mubr.f32.mxu0 0.0
        %942 = vmatmul.mubr.f32.gmra.mxu0 %v640
        %v943 = vpop.f32.mrf.mxu0
        %v944 = vadd.f32 %v839, %v943
        %v945 = vpop.f32.mrf.mxu0
        %946 = vmatprep.mubr.f32.mxu0 0.0
        %947 = vmatmul.mubr.f32.gmra.mxu0 %v643
        %v948 = vpop.f32.mrf.mxu0
        %v949 = vadd.f32 %v844, %v948
        %v950 = vpop.f32.mrf.mxu0
        %951 = vmatprep.mubr.f32.mxu0 0.0
        %952 = vmatmul.mubr.f32.gmra.mxu0 %v646
        %v953 = vpop.f32.mrf.mxu0
        %v954 = vadd.f32 %v849, %v953
        %v955 = vpop.f32.mrf.mxu0
        %956 = vmatprep.mubr.f32.mxu0 0.0
        %957 = vmatmul.mubr.f32.gmra.mxu0 %v649
        %v958 = vpop.f32.mrf.mxu0
        %v959 = vadd.f32 %v854, %v958
        %v960 = vpop.f32.mrf.mxu0
        %961 = vmatprep.mubr.f32.mxu0 0.0
        %962 = vmatmul.mubr.f32.gmra.mxu0 %v652
        %v963 = vpop.f32.mrf.mxu0
        %v964 = vadd.f32 %v859, %v963
        %v965 = vpop.f32.mrf.mxu0
        %966 = vmatprep.mubr.f32.mxu0 0.0
        %967 = vmatmul.mubr.f32.gmra.mxu0 %v655
        %v968 = vpop.f32.mrf.mxu0
        %v969 = vadd.f32 %v864, %v968
        %v970 = vpop.f32.mrf.mxu0
        %971 = vdwg.mxu0
        %v972 = vmax.f32 %v934, %v944
        %v973 = vmax.f32 %v939, %v949
        %v974 = vmax.f32 %v954, %v964
        %v975 = vmax.f32 %v959, %v969
        %v976 = vmax.f32 %v972, %v974
        %v977 = vmax.f32 %v973, %v975
        %v978 = vld [vmem:[%s2] sm:$0x1]
        %v980 = vlaneseq
        %v981 = vshrl.u32 %v980, 7
        %v982 = vsub.s32 0, %v981
        %v983 = vrot.slane %v978, %v982
        %v985 = vadd.f32 %v976, %v983
        %v986 = vadd.f32 %v977, %v983
        %v987 = vmax.f32 %v985, 0.0
        %v988 = vmax.f32 %v986, 0.0
        %v989 = vsel %vm280, %v987, -inf
        %v990 = vsel %vm280, %v988, -inf
        %v991 = vmax.f32 %v989, %v990
        %v992 = vrot.slane %v991, 4
        %v993 = vmax.f32 %v991, %v992
        %v994 = vrot.slane %v993, 2
        %v995 = vmax.f32 %v993, %v994
        %v996 = vrot.slane %v995, 1
        %v997 = vmax.f32 %v995, %v996
        %v998 = vsel %vm280, %v987, 0.0
        %v999 = vsel %vm280, %v988, 0.0
        %v1000 = vadd.f32 %v998, %v999
        %v1001 = vrot.slane %v1000, 4
        %v1002 = vadd.f32 %v1000, %v1001
        %v1003 = vrot.slane %v1002, 2
        %v1004 = vadd.f32 %v1002, %v1003
        %v1005 = vrot.slane %v1004, 1
        %v1006 = vadd.f32 %v1004, %v1005
        %p1007 = scmp.eq.s32.totalorder %s22, 0
        // Predicated region
        $region33: #{conv_encoder_forward.3} parent=31 // pred_check
          %p1008 = pneg %p1007
        $region34: #{conv_encoder_forward.3} parent=31 // pred_check_branch
          %1010 = sbr.rel (%p1008) target = $region36
        $region35: #{conv_encoder_forward.3} parent=31 // pred_region
          %vm1011 = vcmask 516096
          %1012 = vst.msk [vmem:[#allocation2] sm:$0x1] %vm1011, %v997
          %1013 = vst.msk [vmem:[#allocation3] sm:$0x1] %vm1011, %v1006
        $region36: #{conv_encoder_forward.3} parent=31 // pred_fallthru
          _
        %p1014 = scmp.ne.s32.totalorder %s22, 0
        // Predicated region
        $region37: #{conv_encoder_forward.3} parent=31 // pred_check
          %p1015 = pneg %p1014
        $region38: #{conv_encoder_forward.3} parent=31 // pred_check_branch
          %1017 = sbr.rel (%p1015) target = $region40
        $region39: #{conv_encoder_forward.3} parent=31 // pred_region
          %v1018 = vld [vmem:[#allocation2] sm:$0x1]
          %v1019 = vmax.f32 %v1018, %v997
          %vm1020 = vcmask 516096
          %1021 = vst.msk [vmem:[#allocation2] sm:$0x1] %vm1020, %v1019
          %v1022 = vld [vmem:[#allocation3] sm:$0x1]
          %v1023 = vadd.f32 %v1022, %v1006
          %1024 = vst.msk [vmem:[#allocation3] sm:$0x1] %vm1020, %v1023
        $region40: #{conv_encoder_forward.3} parent=31 // pred_fallthru
          _
        // Predicated region
        $region41: #{conv_encoder_forward.3} parent=31 // pred_check
          %p1025 = pneg %p1007
        $region42: #{conv_encoder_forward.3} parent=31 // pred_check_branch
          %1027 = sbr.rel (%p1025) target = $region44
        $region43: #{conv_encoder_forward.3} parent=31 // pred_region
          %v1028 = vld [vmem:[#allocation2] sm:$0x1]
          %v1029 = vld [vmem:[#allocation3] sm:$0x1]
          %v1030 = vmul.f32 %v1029, 0.0625
          %v1031 = vadd.f32 %v1028, %v1030
          %vm1032 = vcmask 516096
          %1033 = vst.msk [vmem:[%s184] sm:$0x1] %vm1032, %v1031
        $region44: #{conv_encoder_forward.3} parent=31 // pred_fallthru
          _
        %s1034 = sand.u32 %s107, 1
        %s1035 = scalar_lea.sflag [#allocation5], %s1034
        %s1036 = sand.u32 %s107, 1
        %s1037 = scalar_lea.vmem [#allocation4], %s1036
        // Predicated region
        $region45: #{conv_encoder_forward.3} parent=31 // pred_check
          %p1038 = pneg %p117
        $region46: #{conv_encoder_forward.3} parent=31 // pred_check_branch
          %1040 = sbr.rel (%p1038) target = $region48
        $region47: #{conv_encoder_forward.3} parent=31 // pred_region
          %s1042 = ssub.s32 16, 16
          %1043 = vsyncadd %s1035, %s1042
          %s1044 = smul.addr %s21, 16
          %s1045 = scalar_lea.hbm %s3, %s1044
          %s1047 = sshll.u32 %s1037, 4
          %s1048 = int_to_ptr.vmem [resolvable:$true] %s1047
          %1050 = dma.vmem_to_hbm [thread:$0]  %s1048, 16, %s1045, %s1035
        $region48: #{conv_encoder_forward.3} parent=31 // pred_fallthru
          _
      $region32: #{conv_encoder_forward.3} parent=5 // pred_fallthru
        _
      %p1051 = scmp.le.s32.totalorder 2, %s12
      // Predicated region
      $region49: #{conv_encoder_forward.3} parent=5 // pred_check
        %p1052 = pneg %p1051
      $region50: #{conv_encoder_forward.3} parent=5 // pred_check_branch
        %1054 = sbr.rel (%p1052) target = $region52
      $region51: #{conv_encoder_forward.3} parent=5 // pred_region
        %s1055 = ssub.s32 %s12, 2
        // Predicated region
        $region53: #{conv_encoder_forward.3} parent=51 // pred_check
          %p1056 = pneg %p123
        $region54: #{conv_encoder_forward.3} parent=51 // pred_check_branch
          %1058 = sbr.rel (%p1056) target = $region56
        $region55: #{conv_encoder_forward.3} parent=51 // pred_region
          %s1059 = sand.u32 %s108, 1
          %s1060 = scalar_lea.sflag [#allocation5], %s1059
          %s1061 = sand.u32 %s108, 1
          %s1062 = scalar_lea.vmem [#allocation4], %s1061
          %1063 = dma.done %s1060, 16
        $region56: #{conv_encoder_forward.3} parent=51 // pred_fallthru
          _
      $region52: #{conv_encoder_forward.3} parent=5 // pred_fallthru
        _
    $region6: #{conv_encoder_forward.3} parent=1 // loop_footer
      %s16 = sadd.s32 1, %s12
    $region7: #{conv_encoder_forward.3} parent=1 // loop_footer_branch
      %11 = sbr.rel target = $region3
    $region8: #{conv_encoder_forward.3} parent=1 // loop_exit
      _
    %1064 = vsyncpa [#allocation5], 1
    %s1065 = scalar_lea.sflag [#allocation5], 1
    %1066 = vsyncpa %s1065, 1

// kernel: conv_encoder_forward.2
$region0: #{conv_encoder_forward.2}
  #allocation0 [shape = 'u32[]', space=smem, size = 0x4, offset = 0x4, fixed_abs, tag = 'smem constant byte address 0x4 - core index']
  #allocation1 [shape = 'u32[144,128]{1,0:T(1,128)}', space=vmem, size = 0x12000, scoped, tag = 'internal scratch']
  %s0 = inlined_call_operand.vmem [shape: f32[2,1,2,2,9,9,64], index: 0, kind: input, shape index: {}]
  %s1 = inlined_call_operand.vmem [shape: f32[576,64], index: 1, kind: input, shape index: {}]
  %s2 = inlined_call_operand.vmem [shape: f32[1,64], index: 2, kind: input, shape index: {}]
  %s3 = inlined_call_operand.vmem [shape: f32[2,1,64,64], index: 3, kind: output, shape index: {}]
  %s4 = sld [smem:[#allocation0]]
  $region45: #{conv_encoder_forward.2} parent=0
    _
  %s6 = ssub.s32 1, %s4
  %s7 = scalar_select 0, %s6, %s4
  loop: start=0, step=1, limit=4
  $region2: #{conv_encoder_forward.2} parent=0 // loop_pre_header
    _
  $region3: #{conv_encoder_forward.2} parent=0 // loop_header
    %s9 = sphi 0, %s13
    %p10 = scmp.ge.s32.totalorder %s9, 4
    %s16 = sphi 0, %s28
    %s17 = sphi 0, %s24
    %s18 = sphi 0, %s16
    %s19 = sphi 0, %s17
    %s20 = sphi 0, %s18
    %s21 = sphi 0, %s19
    %s33 = sphi 0, %s35
    %s36 = sphi 0, %s33
    %s37 = sphi 0, %s36
    %s53 = sphi 0, %s37
    %s57 = sphi 0, %s57
    %s59 = sphi 0, %s57
    %s60 = sphi 0, %s59
    %s74 = sphi 0, %s60
    %s78 = sphi 0, %s78
    %s80 = sphi 0, %s78
    %s81 = sphi 0, %s80
    %s95 = sphi 0, %s81
    %s103 = sphi 0, %s105
    %s106 = sphi 0, %s103
    %s107 = sphi 0, %s106
    %s123 = sphi 0, %s107
  $region4: #{conv_encoder_forward.2} parent=0 // loop_header_branch
    %12 = sbr.rel (%p10) target = $region8
  $region5: #{conv_encoder_forward.2} parent=0 // loop_body
    %s14 = ssub.s32 %s9, 1
    %s15 = ssub.s32 %s9, 2
    %s22 = sadd.s32 1, %s17
    %p23 = scmp.ge.s32.totalorder %s22, 1
    %s24 = scalar_select %p23, 0, %s22
    %s25 = sadd.s32 1, %s16
    %s26 = scalar_select %p23, %s25, %s16
    %p27 = scmp.ge.s32.totalorder %s26, 2
    %s28 = scalar_select %p27, 0, %s26
    %s29 = ssub.s32 %s16, %s28
    %s30 = ssub.s32 %s17, %s24
    %s31 = sor.u32 %s29, %s30
    %p32 = scmp.eq.s32.totalorder %s31, 0
    %s34 = sadd.s32 %s33, 1
    %s35 = scalar_select %p32, %s33, %s34
    %p38 = pneg %p32
    %p39 = scmp.eq.s32.totalorder %s9, 1
    %p40 = por %p38, %p39
    %p41 = scmp.ne.s32.totalorder %s33, %s36
    %p42 = scmp.eq.s32.totalorder %s9, 0
    %p43 = por %p41, %p42
    %p44 = scmp.ne.s32.totalorder %s33, %s36
    %p45 = scmp.eq.s32.totalorder %s14, 1
    %p46 = por %p44, %p45
    %p47 = scmp.ne.s32.totalorder %s36, %s37
    %p48 = scmp.eq.s32.totalorder %s14, 0
    %p49 = por %p47, %p48
    %p50 = scmp.ne.s32.totalorder %s36, %s37
    %p51 = scmp.eq.s32.totalorder %s15, 1
    %p52 = por %p50, %p51
    %p54 = scmp.ne.s32.totalorder %s37, %s53
    %p55 = scmp.eq.s32.totalorder %s15, 0
    %p56 = por %p54, %p55
    %s58 = sadd.s32 %s57, 1
    %p61 = scmp.eq.s32.totalorder %s9, 1
    %p62 = scmp.ne.s32.totalorder %s57, %s59
    %p63 = scmp.eq.s32.totalorder %s9, 0
    %p64 = por %p62, %p63
    %p65 = scmp.ne.s32.totalorder %s57, %s59
    %p66 = scmp.eq.s32.totalorder %s14, 1
    %p67 = por %p65, %p66
    %p68 = scmp.ne.s32.totalorder %s59, %s60
    %p69 = scmp.eq.s32.totalorder %s14, 0
    %p70 = por %p68, %p69
    %p71 = scmp.ne.s32.totalorder %s59, %s60
    %p72 = scmp.eq.s32.totalorder %s15, 1
    %p73 = por %p71, %p72
    %p75 = scmp.ne.s32.totalorder %s60, %s74
    %p76 = scmp.eq.s32.totalorder %s15, 0
    %p77 = por %p75, %p76
    %s79 = sadd.s32 %s78, 1
    %p82 = scmp.eq.s32.totalorder %s9, 1
    %p83 = scmp.ne.s32.totalorder %s78, %s80
    %p84 = scmp.eq.s32.totalorder %s9, 0
    %p85 = por %p83, %p84
    %p86 = scmp.ne.s32.totalorder %s78, %s80
    %p87 = scmp.eq.s32.totalorder %s14, 1
    %p88 = por %p86, %p87
    %p89 = scmp.ne.s32.totalorder %s80, %s81
    %p90 = scmp.eq.s32.totalorder %s14, 0
    %p91 = por %p89, %p90
    %p92 = scmp.ne.s32.totalorder %s80, %s81
    %p93 = scmp.eq.s32.totalorder %s15, 1
    %p94 = por %p92, %p93
    %p96 = scmp.ne.s32.totalorder %s81, %s95
    %p97 = scmp.eq.s32.totalorder %s15, 0
    %p98 = por %p96, %p97
    %s99 = ssub.s32 %s16, %s28
    %s100 = ssub.s32 %s17, %s24
    %s101 = sor.u32 %s99, %s100
    %p102 = scmp.eq.s32.totalorder %s101, 0
    %s104 = sadd.s32 %s103, 1
    %s105 = scalar_select %p102, %s103, %s104
    %p108 = pneg %p102
    %p109 = scmp.eq.s32.totalorder %s9, 1
    %p110 = por %p108, %p109
    %p111 = scmp.ne.s32.totalorder %s103, %s106
    %p112 = scmp.eq.s32.totalorder %s9, 0
    %p113 = por %p111, %p112
    %p114 = scmp.ne.s32.totalorder %s103, %s106
    %p115 = scmp.eq.s32.totalorder %s14, 1
    %p116 = por %p114, %p115
    %p117 = scmp.ne.s32.totalorder %s106, %s107
    %p118 = scmp.eq.s32.totalorder %s14, 0
    %p119 = por %p117, %p118
    %p120 = scmp.ne.s32.totalorder %s106, %s107
    %p121 = scmp.eq.s32.totalorder %s15, 1
    %p122 = por %p120, %p121
    %p124 = scmp.ne.s32.totalorder %s107, %s123
    %p125 = scmp.eq.s32.totalorder %s15, 0
    %p126 = por %p124, %p125
    %p127 = scmp.le.s32.totalorder 1, %s9
    %p128 = scmp.lt.s32.totalorder %s9, 3
    %p129 = pnand %p127, %p128
    %p130 = pneg %p129
    // Predicated region
    $region9: #{conv_encoder_forward.2} parent=5 // pred_check
      _
    $region10: #{conv_encoder_forward.2} parent=5 // pred_check_branch
      %132 = sbr.rel (%p129) target = $region12
    $region11: #{conv_encoder_forward.2} parent=5 // pred_region
      %s133 = ssub.s32 %s9, 1
      // Predicated region
      $region13: #{conv_encoder_forward.2} parent=11 // pred_check
        %p134 = pneg %p70
      $region14: #{conv_encoder_forward.2} parent=11 // pred_check_branch
        %136 = sbr.rel (%p134) target = $region16
      $region15: #{conv_encoder_forward.2} parent=11 // pred_region
        _
      $region16: #{conv_encoder_forward.2} parent=11 // pred_fallthru
        _
      // Predicated region
      $region17: #{conv_encoder_forward.2} parent=11 // pred_check
        %p137 = pneg %p91
      $region18: #{conv_encoder_forward.2} parent=11 // pred_check_branch
        %139 = sbr.rel (%p137) target = $region20
      $region19: #{conv_encoder_forward.2} parent=11 // pred_region
        _
      $region20: #{conv_encoder_forward.2} parent=11 // pred_fallthru
        _
    $region12: #{conv_encoder_forward.2} parent=5 // pred_fallthru
      _
    %p140 = scmp.lt.s32.totalorder %s9, 2
    // Predicated region
    $region21: #{conv_encoder_forward.2} parent=5 // pred_check
      %p141 = pneg %p140
    $region22: #{conv_encoder_forward.2} parent=5 // pred_check_branch
      %143 = sbr.rel (%p141) target = $region24
    $region23: #{conv_encoder_forward.2} parent=5 // pred_region
      // Predicated region
      $region25: #{conv_encoder_forward.2} parent=23 // pred_check
        %p144 = pneg %p43
      $region26: #{conv_encoder_forward.2} parent=23 // pred_check_branch
        %146 = sbr.rel (%p144) target = $region28
      $region27: #{conv_encoder_forward.2} parent=23 // pred_region
        %p147 = scmp.lt.s32.totalorder %s16, 1
        %s148 = scalar_select %p147, %s16, 1
        %p149 = scmp.lt.s32.totalorder %s17, 0
        %s150 = scalar_select %p149, %s17, 0
        %s151 = smul.addr %s150, 72
        %s152 = smul.addr %s148, 72
        %s153 = sadd.s32 %s151, %s152
        %s154 = smul.addr %s153, 8
        %s155 = scalar_lea.vmem %s0, %s154
      $region28: #{conv_encoder_forward.2} parent=23 // pred_fallthru
        _
    $region24: #{conv_encoder_forward.2} parent=5 // pred_fallthru
      _
    %p156 = scmp.le.s32.totalorder 1, %s9
    %p157 = scmp.lt.s32.totalorder %s9, 3
    %p158 = pnand %p156, %p157
    %p159 = pneg %p158
    // Predicated region
    $region29: #{conv_encoder_forward.2} parent=5 // pred_check
      _
    $region30: #{conv_encoder_forward.2} parent=5 // pred_check_branch
      %161 = sbr.rel (%p158) target = $region32
    $region31: #{conv_encoder_forward.2} parent=5 // pred_region
      %s162 = ssub.s32 %s9, 1
      %p163 = scmp.lt.s32.totalorder %s18, 1
      %s164 = scalar_select %p163, %s18, 1
      %p165 = scmp.lt.s32.totalorder %s19, 0
      %s166 = scalar_select %p165, %s19, 0
      %s167 = smul.addr %s166, 72
      %s168 = smul.addr %s164, 72
      %s169 = sadd.s32 %s167, %s168
      %s170 = smul.addr %s169, 8
      %s171 = scalar_lea.vmem %s0, %s170
      %p172 = pneg %p49
      %p173 = pneg %p46
      %p174 = pneg %p70
      %p175 = pneg %p67
      %p176 = pneg %p91
      %p177 = pneg %p88
      %p178 = pneg %p119
      %p179 = pneg %p116
      %p180 = scmp.lt.s32.totalorder %s18, 1
      %s181 = scalar_select %p180, %s18, 1
      %p182 = scmp.lt.s32.totalorder %s19, 0
      %s183 = scalar_select %p182, %s19, 0
      %s184 = smul.addr %s183, 8
      %s185 = smul.addr %s181, 8
      %s186 = sadd.s32 %s184, %s185
      %s187 = smul.addr %s186, 8
      %s188 = scalar_lea.vmem %s3, %s187
      %p189 = scmp.lt.s32.totalorder %s18, 1
      %s190 = scalar_select %p189, %s18, 1
      %p191 = scmp.lt.s32.totalorder %s19, 0
      %s192 = scalar_select %p191, %s19, 0
      %s193 = smul.addr %s192, 72
      %s194 = smul.addr %s190, 72
      %s195 = sadd.s32 %s193, %s194
      %s196 = smul.addr %s195, 8
      %s197 = scalar_lea.vmem %s0, %s196
      %p198 = scmp.lt.s32.totalorder %s18, 1
      %s199 = scalar_select %p198, %s18, 1
      %p200 = scmp.lt.s32.totalorder %s19, 0
      %s201 = scalar_select %p200, %s19, 0
      %s202 = smul.addr %s201, 8
      %s203 = smul.addr %s199, 8
      %s204 = sadd.s32 %s202, %s203
      %s205 = smul.addr %s204, 8
      %s206 = scalar_lea.vmem %s3, %s205
      %v207 = vld [vmem:[%s197] sm:$0xff]
      %v208 = vld [vmem:[%s197 + $0x8] sm:$0x1]
      %v209 = vld [vmem:[%s197 + $0x10] sm:$0xff]
      %v210 = vld [vmem:[%s197 + $0x18] sm:$0x1]
      %v211 = vld [vmem:[%s197 + $0x20] sm:$0xff]
      %v212 = vld [vmem:[%s197 + $0x28] sm:$0x1]
      %v213 = vld [vmem:[%s197 + $0x30] sm:$0xff]
      %v214 = vld [vmem:[%s197 + $0x38] sm:$0x1]
      %v215 = vld [vmem:[%s197 + $0x40] sm:$0xff]
      %v216 = vld [vmem:[%s197 + $0x48] sm:$0x1]
      %v217 = vld [vmem:[%s197 + $0x50] sm:$0xff]
      %v218 = vld [vmem:[%s197 + $0x58] sm:$0x1]
      %v219 = vld [vmem:[%s197 + $0x60] sm:$0xff]
      %v220 = vld [vmem:[%s197 + $0x68] sm:$0x1]
      %v221 = vld [vmem:[%s197 + $0x70] sm:$0xff]
      %v222 = vld [vmem:[%s197 + $0x78] sm:$0x1]
      %v223 = vld [vmem:[%s197 + $0x80] sm:$0xff]
      %v224 = vld [vmem:[%s197 + $0x88] sm:$0x1]
      %v225 = vld [vmem:[%s197 + $0x90] sm:$0xff]
      %v226 = vld [vmem:[%s197 + $0x98] sm:$0x1]
      %v227 = vld [vmem:[%s197 + $0xa0] sm:$0xff]
      %v228 = vld [vmem:[%s197 + $0xa8] sm:$0x1]
      %v229 = vld [vmem:[%s197 + $0xb0] sm:$0xff]
      %v230 = vld [vmem:[%s197 + $0xb8] sm:$0x1]
      %v231 = vld [vmem:[%s197 + $0xc0] sm:$0xff]
      %v232 = vld [vmem:[%s197 + $0xc8] sm:$0x1]
      %v233 = vld [vmem:[%s197 + $0xd0] sm:$0xff]
      %v234 = vld [vmem:[%s197 + $0xd8] sm:$0x1]
      %v235 = vld [vmem:[%s197 + $0xe0] sm:$0xff]
      %v236 = vld [vmem:[%s197 + $0xe8] sm:$0x1]
      %v237 = vld [vmem:[%s197 + $0xf0] sm:$0xff]
      %v238 = vld [vmem:[%s197 + $0xf8] sm:$0x1]
      %v239 = vld [vmem:[%s197 + $0x100] sm:$0xff]
      %v240 = vld [vmem:[%s197 + $0x108] sm:$0x1]
      %v241 = vld [vmem:[%s197 + $0x110] sm:$0xff]
      %v242 = vld [vmem:[%s197 + $0x118] sm:$0x1]
      %v243 = vld [vmem:[%s197 + $0x120] sm:$0xff]
      %v244 = vld [vmem:[%s197 + $0x128] sm:$0x1]
      %v245 = vld [vmem:[%s197 + $0x130] sm:$0xff]
      %v246 = vld [vmem:[%s197 + $0x138] sm:$0x1]
      %v247 = vld [vmem:[%s197 + $0x140] sm:$0xff]
      %v248 = vld [vmem:[%s197 + $0x148] sm:$0x1]
      %v249 = vld [vmem:[%s197 + $0x150] sm:$0xff]
      %v250 = vld [vmem:[%s197 + $0x158] sm:$0x1]
      %v251 = vld [vmem:[%s197 + $0x160] sm:$0xff]
      %v252 = vld [vmem:[%s197 + $0x168] sm:$0x1]
      %v253 = vld [vmem:[%s197 + $0x170] sm:$0xff]
      %v254 = vld [vmem:[%s197 + $0x178] sm:$0x1]
      %v255 = vld [vmem:[%s197 + $0x180] sm:$0xff]
      %v256 = vld [vmem:[%s197 + $0x188] sm:$0x1]
      %v257 = vld [vmem:[%s197 + $0x190] sm:$0xff]
      %v258 = vld [vmem:[%s197 + $0x198] sm:$0x1]
      %v259 = vld [vmem:[%s197 + $0x1a0] sm:$0xff]
      %v260 = vld [vmem:[%s197 + $0x1a8] sm:$0x1]
      %v261 = vld [vmem:[%s197 + $0x1b0] sm:$0xff]
      %v262 = vld [vmem:[%s197 + $0x1b8] sm:$0x1]
      %v263 = vld [vmem:[%s197 + $0x1c0] sm:$0xff]
      %v264 = vld [vmem:[%s197 + $0x1c8] sm:$0x1]
      %v265 = vld [vmem:[%s197 + $0x1d0] sm:$0xff]
      %v266 = vld [vmem:[%s197 + $0x1d8] sm:$0x1]
      %v267 = vld [vmem:[%s197 + $0x1e0] sm:$0xff]
      %v268 = vld [vmem:[%s197 + $0x1e8] sm:$0x1]
      %v269 = vld [vmem:[%s197 + $0x1f0] sm:$0xff]
      %v270 = vld [vmem:[%s197 + $0x1f8] sm:$0x1]
      %v271 = vld [vmem:[%s197 + $0x200] sm:$0xff]
      %v272 = vld [vmem:[%s197 + $0x208] sm:$0x1]
      %v273 = vld [vmem:[%s197 + $0x210] sm:$0xff]
      %v274 = vld [vmem:[%s197 + $0x218] sm:$0x1]
      %v275 = vld [vmem:[%s197 + $0x220] sm:$0xff]
      %v276 = vld [vmem:[%s197 + $0x228] sm:$0x1]
      %v277 = vld [vmem:[%s197 + $0x230] sm:$0xff]
      %v278 = vld [vmem:[%s197 + $0x238] sm:$0x1]
      %287 = vrot.lane.b32.xlu0 %v225, 64
      %v288 = vpop.permute.xlu0 %287
      %289 = vrot.lane.b32.xlu0 %v227, 64
      %v290 = vpop.permute.xlu0 %289
      %291 = vrot.lane.b32.xlu0 %v229, 64
      %v292 = vpop.permute.xlu0 %291
      %293 = vrot.lane.b32.xlu0 %v231, 64
      %v294 = vpop.permute.xlu0 %293
      %295 = vrot.lane.b32.xlu0 %v233, 64
      %v296 = vpop.permute.xlu0 %295
      %297 = vrot.lane.b32.xlu0 %v235, 64
      %v298 = vpop.permute.xlu0 %297
      %299 = vrot.lane.b32.xlu0 %v237, 64
      %v300 = vpop.permute.xlu0 %299
      %301 = vrot.lane.b32.xlu0 %v239, 64
      %v302 = vpop.permute.xlu0 %301
      %vm327 = vcmask 1046528
      %v328 = vrot.slane %v207, 1
      %v329 = vrot.slane %v208, 1
      %v330 = vsel %vm327, %v328, %v329
      %v331 = vrot.slane %v209, 1
      %v332 = vrot.slane %v210, 1
      %v333 = vsel %vm327, %v331, %v332
      %v334 = vrot.slane %v211, 1
      %v335 = vrot.slane %v212, 1
      %v336 = vsel %vm327, %v334, %v335
      %v337 = vrot.slane %v213, 1
      %v338 = vrot.slane %v214, 1
      %v339 = vsel %vm327, %v337, %v338
      %v340 = vrot.slane %v215, 1
      %v341 = vrot.slane %v216, 1
      %v342 = vsel %vm327, %v340, %v341
      %v343 = vrot.slane %v217, 1
      %v344 = vrot.slane %v218, 1
      %v345 = vsel %vm327, %v343, %v344
      %v346 = vrot.slane %v219, 1
      %v347 = vrot.slane %v220, 1
      %v348 = vsel %vm327, %v346, %v347
      %v349 = vrot.slane %v221, 1
      %v350 = vrot.slane %v222, 1
      %v351 = vsel %vm327, %v349, %v350
      %368 = vrot.lane.b32.xlu0 %v243, 64
      %v369 = vpop.permute.xlu0 %368
      %370 = vrot.lane.b32.xlu0 %v245, 64
      %v371 = vpop.permute.xlu0 %370
      %372 = vrot.lane.b32.xlu0 %v247, 64
      %v373 = vpop.permute.xlu0 %372
      %374 = vrot.lane.b32.xlu0 %v249, 64
      %v375 = vpop.permute.xlu0 %374
      %376 = vrot.lane.b32.xlu0 %v251, 64
      %v377 = vpop.permute.xlu0 %376
      %378 = vrot.lane.b32.xlu0 %v253, 64
      %v379 = vpop.permute.xlu0 %378
      %380 = vrot.lane.b32.xlu0 %v255, 64
      %v381 = vpop.permute.xlu0 %380
      %382 = vrot.lane.b32.xlu0 %v257, 64
      %v383 = vpop.permute.xlu0 %382
      %v400 = vrot.slane %v243, 1
      %v401 = vrot.slane %v244, 1
      %v402 = vsel %vm327, %v400, %v401
      %v403 = vrot.slane %v245, 1
      %v404 = vrot.slane %v246, 1
      %v405 = vsel %vm327, %v403, %v404
      %v406 = vrot.slane %v247, 1
      %v407 = vrot.slane %v248, 1
      %v408 = vsel %vm327, %v406, %v407
      %v409 = vrot.slane %v249, 1
      %v410 = vrot.slane %v250, 1
      %v411 = vsel %vm327, %v409, %v410
      %v412 = vrot.slane %v251, 1
      %v413 = vrot.slane %v252, 1
      %v414 = vsel %vm327, %v412, %v413
      %v415 = vrot.slane %v253, 1
      %v416 = vrot.slane %v254, 1
      %v417 = vsel %vm327, %v415, %v416
      %v418 = vrot.slane %v255, 1
      %v419 = vrot.slane %v256, 1
      %v420 = vsel %vm327, %v418, %v419
      %v421 = vrot.slane %v257, 1
      %v422 = vrot.slane %v258, 1
      %v423 = vsel %vm327, %v421, %v422
      %424 = vrot.lane.b32.xlu0 %v402, 64
      %v425 = vpop.permute.xlu0 %424
      %426 = vrot.lane.b32.xlu0 %v405, 64
      %v427 = vpop.permute.xlu0 %426
      %428 = vrot.lane.b32.xlu0 %v408, 64
      %v429 = vpop.permute.xlu0 %428
      %430 = vrot.lane.b32.xlu0 %v411, 64
      %v431 = vpop.permute.xlu0 %430
      %432 = vrot.lane.b32.xlu0 %v414, 64
      %v433 = vpop.permute.xlu0 %432
      %434 = vrot.lane.b32.xlu0 %v417, 64
      %v435 = vpop.permute.xlu0 %434
      %436 = vrot.lane.b32.xlu0 %v420, 64
      %v437 = vpop.permute.xlu0 %436
      %438 = vrot.lane.b32.xlu0 %v423, 64
      %v439 = vpop.permute.xlu0 %438
      %449 = vrot.lane.b32.xlu0 %v241, 64
      %v450 = vpop.permute.xlu0 %449
      %v454 = vrot.slane %v223, 1
      %v455 = vrot.slane %v224, 1
      %v456 = vsel %vm327, %v454, %v455
      %vm457 = vcmask 523264
      %v458 = vsel %vm457, %v207, %v288
      %v459 = vsel %vm457, %v209, %v290
      %v460 = vsel %vm457, %v211, %v292
      %v461 = vsel %vm457, %v213, %v294
      %v462 = vsel %vm457, %v215, %v296
      %v463 = vsel %vm457, %v217, %v298
      %v464 = vsel %vm457, %v219, %v300
      %v465 = vsel %vm457, %v221, %v302
      %v466 = vsel %vm457, %v330, %v369
      %v467 = vsel %vm457, %v333, %v371
      %v468 = vsel %vm457, %v336, %v373
      %v469 = vsel %vm457, %v339, %v375
      %v470 = vsel %vm457, %v342, %v377
      %v471 = vsel %vm457, %v345, %v379
      %v472 = vsel %vm457, %v348, %v381
      %v473 = vsel %vm457, %v351, %v383
      %v474 = vsel %vm457, %v261, %v425
      %v475 = vsel %vm457, %v263, %v427
      %v476 = vsel %vm457, %v265, %v429
      %v477 = vsel %vm457, %v267, %v431
      %v478 = vsel %vm457, %v269, %v433
      %v479 = vsel %vm457, %v271, %v435
      %v480 = vsel %vm457, %v273, %v437
      %v481 = vsel %vm457, %v275, %v439
      %v482 = vsel %vm457, %v223, %v450
      %483 = vrot.lane.b32.xlu0 %v330, 64
      %v484 = vpop.permute.xlu0 %483
      %485 = vrot.lane.b32.xlu0 %v333, 64
      %v486 = vpop.permute.xlu0 %485
      %487 = vrot.lane.b32.xlu0 %v336, 64
      %v488 = vpop.permute.xlu0 %487
      %489 = vrot.lane.b32.xlu0 %v339, 64
      %v490 = vpop.permute.xlu0 %489
      %491 = vrot.lane.b32.xlu0 %v342, 64
      %v492 = vpop.permute.xlu0 %491
      %493 = vrot.lane.b32.xlu0 %v345, 64
      %v494 = vpop.permute.xlu0 %493
      %495 = vrot.lane.b32.xlu0 %v348, 64
      %v496 = vpop.permute.xlu0 %495
      %497 = vrot.lane.b32.xlu0 %v351, 64
      %v498 = vpop.permute.xlu0 %497
      %v515 = vrot.slane %v225, 1
      %v516 = vrot.slane %v226, 1
      %v517 = vsel %vm327, %v515, %v516
      %v518 = vrot.slane %v227, 1
      %v519 = vrot.slane %v228, 1
      %v520 = vsel %vm327, %v518, %v519
      %v521 = vrot.slane %v229, 1
      %v522 = vrot.slane %v230, 1
      %v523 = vsel %vm327, %v521, %v522
      %v524 = vrot.slane %v231, 1
      %v525 = vrot.slane %v232, 1
      %v526 = vsel %vm327, %v524, %v525
      %v527 = vrot.slane %v233, 1
      %v528 = vrot.slane %v234, 1
      %v529 = vsel %vm327, %v527, %v528
      %v530 = vrot.slane %v235, 1
      %v531 = vrot.slane %v236, 1
      %v532 = vsel %vm327, %v530, %v531
      %v533 = vrot.slane %v237, 1
      %v534 = vrot.slane %v238, 1
      %v535 = vsel %vm327, %v533, %v534
      %v536 = vrot.slane %v239, 1
      %v537 = vrot.slane %v240, 1
      %v538 = vsel %vm327, %v536, %v537
      %555 = vrot.lane.b32.xlu0 %v261, 64
      %v556 = vpop.permute.xlu0 %555
      %557 = vrot.lane.b32.xlu0 %v263, 64
      %v558 = vpop.permute.xlu0 %557
      %559 = vrot.lane.b32.xlu0 %v265, 64
      %v560 = vpop.permute.xlu0 %559
      %561 = vrot.lane.b32.xlu0 %v267, 64
      %v562 = vpop.permute.xlu0 %561
      %563 = vrot.lane.b32.xlu0 %v269, 64
      %v564 = vpop.permute.xlu0 %563
      %565 = vrot.lane.b32.xlu0 %v271, 64
      %v566 = vpop.permute.xlu0 %565
      %567 = vrot.lane.b32.xlu0 %v273, 64
      %v568 = vpop.permute.xlu0 %567
      %569 = vrot.lane.b32.xlu0 %v275, 64
      %v570 = vpop.permute.xlu0 %569
      %v595 = vrot.slane %v261, 1
      %v596 = vrot.slane %v262, 1
      %v597 = vsel %vm327, %v595, %v596
      %v598 = vrot.slane %v263, 1
      %v599 = vrot.slane %v264, 1
      %v600 = vsel %vm327, %v598, %v599
      %v601 = vrot.slane %v265, 1
      %v602 = vrot.slane %v266, 1
      %v603 = vsel %vm327, %v601, %v602
      %v604 = vrot.slane %v267, 1
      %v605 = vrot.slane %v268, 1
      %v606 = vsel %vm327, %v604, %v605
      %v607 = vrot.slane %v269, 1
      %v608 = vrot.slane %v270, 1
      %v609 = vsel %vm327, %v607, %v608
      %v610 = vrot.slane %v271, 1
      %v611 = vrot.slane %v272, 1
      %v612 = vsel %vm327, %v610, %v611
      %v613 = vrot.slane %v273, 1
      %v614 = vrot.slane %v274, 1
      %v615 = vsel %vm327, %v613, %v614
      %v616 = vrot.slane %v275, 1
      %v617 = vrot.slane %v276, 1
      %v618 = vsel %vm327, %v616, %v617
      %619 = vrot.lane.b32.xlu0 %v597, 64
      %v620 = vpop.permute.xlu0 %619
      %621 = vrot.lane.b32.xlu0 %v600, 64
      %v622 = vpop.permute.xlu0 %621
      %623 = vrot.lane.b32.xlu0 %v603, 64
      %v624 = vpop.permute.xlu0 %623
      %625 = vrot.lane.b32.xlu0 %v606, 64
      %v626 = vpop.permute.xlu0 %625
      %627 = vrot.lane.b32.xlu0 %v609, 64
      %v628 = vpop.permute.xlu0 %627
      %629 = vrot.lane.b32.xlu0 %v612, 64
      %v630 = vpop.permute.xlu0 %629
      %631 = vrot.lane.b32.xlu0 %v615, 64
      %v632 = vpop.permute.xlu0 %631
      %633 = vrot.lane.b32.xlu0 %v618, 64
      %v634 = vpop.permute.xlu0 %633
      %643 = vrot.lane.b32.xlu0 %v456, 64
      %v644 = vpop.permute.xlu0 %643
      %v647 = vrot.slane %v241, 1
      %v648 = vrot.slane %v242, 1
      %v649 = vsel %vm327, %v647, %v648
      %v650 = vsel %vm457, %v225, %v484
      %v651 = vsel %vm457, %v227, %v486
      %v652 = vsel %vm457, %v229, %v488
      %v653 = vsel %vm457, %v231, %v490
      %v654 = vsel %vm457, %v233, %v492
      %v655 = vsel %vm457, %v235, %v494
      %v656 = vsel %vm457, %v237, %v496
      %v657 = vsel %vm457, %v239, %v498
      %v658 = vsel %vm457, %v517, %v556
      %v659 = vsel %vm457, %v520, %v558
      %v660 = vsel %vm457, %v523, %v560
      %v661 = vsel %vm457, %v526, %v562
      %v662 = vsel %vm457, %v529, %v564
      %v663 = vsel %vm457, %v532, %v566
      %v664 = vsel %vm457, %v535, %v568
      %v665 = vsel %vm457, %v538, %v570
      %v666 = vsel %vm457, %v402, %v620
      %v667 = vsel %vm457, %v405, %v622
      %v668 = vsel %vm457, %v408, %v624
      %v669 = vsel %vm457, %v411, %v626
      %v670 = vsel %vm457, %v414, %v628
      %v671 = vsel %vm457, %v417, %v630
      %v672 = vsel %vm457, %v420, %v632
      %v673 = vsel %vm457, %v423, %v634
      %v674 = vsel %vm457, %v241, %v644
      %675 = vrot.lane.b32.xlu0 %v209, 64
      %v676 = vpop.permute.xlu0 %675
      %677 = vrot.lane.b32.xlu0 %v211, 64
      %v678 = vpop.permute.xlu0 %677
      %679 = vrot.lane.b32.xlu0 %v213, 64
      %v680 = vpop.permute.xlu0 %679
      %681 = vrot.lane.b32.xlu0 %v215, 64
      %v682 = vpop.permute.xlu0 %681
      %683 = vrot.lane.b32.xlu0 %v217, 64
      %v684 = vpop.permute.xlu0 %683
      %685 = vrot.lane.b32.xlu0 %v219, 64
      %v686 = vpop.permute.xlu0 %685
      %687 = vrot.lane.b32.xlu0 %v221, 64
      %v688 = vpop.permute.xlu0 %687
      %689 = vrot.lane.b32.xlu0 %v223, 64
      %v690 = vpop.permute.xlu0 %689
      %700 = vrot.lane.b32.xlu0 %v277, 64
      %v701 = vpop.permute.xlu0 %700
      %v705 = vrot.slane %v259, 1
      %v706 = vrot.slane %v260, 1
      %v707 = vsel %vm327, %v705, %v706
      %v708 = vsel %vm457, %v243, %v556
      %v709 = vsel %vm457, %v245, %v558
      %v710 = vsel %vm457, %v247, %v560
      %v711 = vsel %vm457, %v249, %v562
      %v712 = vsel %vm457, %v251, %v564
      %v713 = vsel %vm457, %v253, %v566
      %v714 = vsel %vm457, %v255, %v568
      %v715 = vsel %vm457, %v257, %v570
      %v716 = vsel %vm457, %v402, %v676
      %v717 = vsel %vm457, %v405, %v678
      %v718 = vsel %vm457, %v408, %v680
      %v719 = vsel %vm457, %v411, %v682
      %v720 = vsel %vm457, %v414, %v684
      %v721 = vsel %vm457, %v417, %v686
      %v722 = vsel %vm457, %v420, %v688
      %v723 = vsel %vm457, %v423, %v690
      %v724 = vsel %vm457, %v259, %v701
      %734 = vrot.lane.b32.xlu0 %v520, 64
      %v735 = vpop.permute.xlu0 %734
      %736 = vrot.lane.b32.xlu0 %v523, 64
      %v737 = vpop.permute.xlu0 %736
      %738 = vrot.lane.b32.xlu0 %v526, 64
      %v739 = vpop.permute.xlu0 %738
      %740 = vrot.lane.b32.xlu0 %v529, 64
      %v741 = vpop.permute.xlu0 %740
      %742 = vrot.lane.b32.xlu0 %v532, 64
      %v743 = vpop.permute.xlu0 %742
      %744 = vrot.lane.b32.xlu0 %v535, 64
      %v745 = vpop.permute.xlu0 %744
      %746 = vrot.lane.b32.xlu0 %v538, 64
      %v747 = vpop.permute.xlu0 %746
      %748 = vrot.lane.b32.xlu0 %v649, 64
      %v749 = vpop.permute.xlu0 %748
      %758 = vrot.lane.b32.xlu0 %v707, 64
      %v759 = vpop.permute.xlu0 %758
      %v762 = vrot.slane %v277, 1
      %v763 = vrot.slane %v278, 1
      %v764 = vsel %vm327, %v762, %v763
      %v765 = vsel %vm457, %v597, %v290
      %v766 = vsel %vm457, %v600, %v292
      %v767 = vsel %vm457, %v603, %v294
      %v768 = vsel %vm457, %v606, %v296
      %v769 = vsel %vm457, %v609, %v298
      %v770 = vsel %vm457, %v612, %v300
      %v771 = vsel %vm457, %v615, %v302
      %v772 = vsel %vm457, %v618, %v450
      %v773 = vsel %vm457, %v333, %v735
      %v774 = vsel %vm457, %v336, %v737
      %v775 = vsel %vm457, %v339, %v739
      %v776 = vsel %vm457, %v342, %v741
      %v777 = vsel %vm457, %v345, %v743
      %v778 = vsel %vm457, %v348, %v745
      %v779 = vsel %vm457, %v351, %v747
      %v780 = vsel %vm457, %v456, %v749
      %v781 = vsel %vm457, %v277, %v759
      %v782 = vld [vmem:[%s1] sm:$0xff]
      %v783 = vld [vmem:[%s1 + $0x8] sm:$0xff]
      %v784 = vld [vmem:[%s1 + $0x10] sm:$0xff]
      %v785 = vld [vmem:[%s1 + $0x18] sm:$0xff]
      %v786 = vld [vmem:[%s1 + $0x20] sm:$0xff]
      %v787 = vld [vmem:[%s1 + $0x28] sm:$0xff]
      %v788 = vld [vmem:[%s1 + $0x30] sm:$0xff]
      %v789 = vld [vmem:[%s1 + $0x38] sm:$0xff]
      %v790 = vld [vmem:[%s1 + $0x40] sm:$0xff]
      %v791 = vld [vmem:[%s1 + $0x48] sm:$0xff]
      %v792 = vld [vmem:[%s1 + $0x50] sm:$0xff]
      %v793 = vld [vmem:[%s1 + $0x58] sm:$0xff]
      %v794 = vld [vmem:[%s1 + $0x60] sm:$0xff]
      %v795 = vld [vmem:[%s1 + $0x68] sm:$0xff]
      %v796 = vld [vmem:[%s1 + $0x70] sm:$0xff]
      %v797 = vld [vmem:[%s1 + $0x78] sm:$0xff]
      %v798 = vld [vmem:[%s1 + $0x80] sm:$0xff]
      %v799 = vld [vmem:[%s1 + $0x88] sm:$0xff]
      %v800 = vld [vmem:[%s1 + $0x90] sm:$0xff]
      %v801 = vld [vmem:[%s1 + $0x98] sm:$0xff]
      %v802 = vld [vmem:[%s1 + $0xa0] sm:$0xff]
      %v803 = vld [vmem:[%s1 + $0xa8] sm:$0xff]
      %v804 = vld [vmem:[%s1 + $0xb0] sm:$0xff]
      %v805 = vld [vmem:[%s1 + $0xb8] sm:$0xff]
      %v806 = vld [vmem:[%s1 + $0xc0] sm:$0xff]
      %v807 = vld [vmem:[%s1 + $0xc8] sm:$0xff]
      %v808 = vld [vmem:[%s1 + $0xd0] sm:$0xff]
      %v809 = vld [vmem:[%s1 + $0xd8] sm:$0xff]
      %v810 = vld [vmem:[%s1 + $0xe0] sm:$0xff]
      %v811 = vld [vmem:[%s1 + $0xe8] sm:$0xff]
      %v812 = vld [vmem:[%s1 + $0xf0] sm:$0xff]
      %v813 = vld [vmem:[%s1 + $0xf8] sm:$0xff]
      %v814 = vld [vmem:[%s1 + $0x100] sm:$0xff]
      %v815 = vld [vmem:[%s1 + $0x108] sm:$0xff]
      %v816 = vld [vmem:[%s1 + $0x110] sm:$0xff]
      %v817 = vld [vmem:[%s1 + $0x118] sm:$0xff]
      %v818 = vld [vmem:[%s1 + $0x120] sm:$0xff]
      %v819 = vld [vmem:[%s1 + $0x128] sm:$0xff]
      %v820 = vld [vmem:[%s1 + $0x130] sm:$0xff]
      %v821 = vld [vmem:[%s1 + $0x138] sm:$0xff]
      %v822 = vld [vmem:[%s1 + $0x140] sm:$0xff]
      %v823 = vld [vmem:[%s1 + $0x148] sm:$0xff]
      %v824 = vld [vmem:[%s1 + $0x150] sm:$0xff]
      %v825 = vld [vmem:[%s1 + $0x158] sm:$0xff]
      %v826 = vld [vmem:[%s1 + $0x160] sm:$0xff]
      %v827 = vld [vmem:[%s1 + $0x168] sm:$0xff]
      %v828 = vld [vmem:[%s1 + $0x170] sm:$0xff]
      %v829 = vld [vmem:[%s1 + $0x178] sm:$0xff]
      %v830 = vld [vmem:[%s1 + $0x180] sm:$0xff]
      %v831 = vld [vmem:[%s1 + $0x188] sm:$0xff]
      %v832 = vld [vmem:[%s1 + $0x190] sm:$0xff]
      %v833 = vld [vmem:[%s1 + $0x198] sm:$0xff]
      %v834 = vld [vmem:[%s1 + $0x1a0] sm:$0xff]
      %v835 = vld [vmem:[%s1 + $0x1a8] sm:$0xff]
      %v836 = vld [vmem:[%s1 + $0x1b0] sm:$0xff]
      %v837 = vld [vmem:[%s1 + $0x1b8] sm:$0xff]
      %v838 = vld [vmem:[%s1 + $0x1c0] sm:$0xff]
      %v839 = vld [vmem:[%s1 + $0x1c8] sm:$0xff]
      %v840 = vld [vmem:[%s1 + $0x1d0] sm:$0xff]
      %v841 = vld [vmem:[%s1 + $0x1d8] sm:$0xff]
      %v842 = vld [vmem:[%s1 + $0x1e0] sm:$0xff]
      %v843 = vld [vmem:[%s1 + $0x1e8] sm:$0xff]
      %v844 = vld [vmem:[%s1 + $0x1f0] sm:$0xff]
      %v845 = vld [vmem:[%s1 + $0x1f8] sm:$0xff]
      %v846 = vld [vmem:[%s1 + $0x200] sm:$0xff]
      %v847 = vld [vmem:[%s1 + $0x208] sm:$0xff]
      %v848 = vld [vmem:[%s1 + $0x210] sm:$0xff]
      %v849 = vld [vmem:[%s1 + $0x218] sm:$0xff]
      %v850 = vld [vmem:[%s1 + $0x220] sm:$0xff]
      %v851 = vld [vmem:[%s1 + $0x228] sm:$0xff]
      %v852 = vld [vmem:[%s1 + $0x230] sm:$0xff]
      %v853 = vld [vmem:[%s1 + $0x238] sm:$0xff]
      %v854 = vsel %vm457, %v333, 0
      %v856 = vsel %vm457, %v336, 0
      %v858 = vsel %vm457, %v339, 0
      %v860 = vsel %vm457, %v342, 0
      %v862 = vsel %vm457, %v345, 0
      %v864 = vsel %vm457, %v348, 0
      %v866 = vsel %vm457, %v351, 0
      %v868 = vsel %vm457, %v456, 0
      %v870 = vsel %vm457, %v520, 0
      %v872 = vsel %vm457, %v523, 0
      %v874 = vsel %vm457, %v526, 0
      %v876 = vsel %vm457, %v529, 0
      %v878 = vsel %vm457, %v532, 0
      %v880 = vsel %vm457, %v535, 0
      %v882 = vsel %vm457, %v538, 0
      %v884 = vsel %vm457, %v649, 0
      %v886 = vsel %vm457, %v405, 0
      %v888 = vsel %vm457, %v408, 0
      %v890 = vsel %vm457, %v411, 0
      %v892 = vsel %vm457, %v414, 0
      %v894 = vsel %vm457, %v417, 0
      %v896 = vsel %vm457, %v420, 0
      %v898 = vsel %vm457, %v423, 0
      %v900 = vsel %vm457, %v707, 0
      %v902 = vsel %vm457, %v600, 0
      %v904 = vsel %vm457, %v603, 0
      %v906 = vsel %vm457, %v606, 0
      %v908 = vsel %vm457, %v609, 0
      %v910 = vsel %vm457, %v612, 0
      %v912 = vsel %vm457, %v615, 0
      %v914 = vsel %vm457, %v618, 0
      %v916 = vsel %vm457, %v764, 0
      %918 = vmatprep.subr.mxu0 0.0
      %919 = vmatpush1.msra.mxu0 %v797
      %920 = vmatprep.subr.mxu0 0.0
      %921 = vmatpush1.msra.mxu0 %v796
      %922 = vmatprep.subr.mxu0 0.0
      %923 = vmatpush1.msra.mxu0 %v795
      %924 = vmatprep.subr.mxu0 0.0
      %925 = vmatpush1.msra.mxu0 %v794
      %926 = vmatprep.subr.mxu0 0.0
      %927 = vmatpush1.msra.mxu0 %v793
      %928 = vmatprep.subr.mxu0 0.0
      %929 = vmatpush1.msra.mxu0 %v792
      %930 = vmatprep.subr.mxu0 0.0
      %931 = vmatpush1.msra.mxu0 %v791
      %932 = vmatprep.subr.mxu0 0.0
      %933 = vmatpush1.msra.mxu0 %v790
      %934 = vmatprep.subr.mxu0 0.0
      %935 = vmatpush1.msra.mxu0 %v789
      %936 = vmatprep.subr.mxu0 0.0
      %937 = vmatpush1.msra.mxu0 %v788
      %938 = vmatprep.subr.mxu0 0.0
      %939 = vmatpush1.msra.mxu0 %v787
      %940 = vmatprep.subr.mxu0 0.0
      %941 = vmatpush1.msra.mxu0 %v786
      %942 = vmatprep.subr.mxu0 0.0
      %943 = vmatpush1.msra.mxu0 %v785
      %944 = vmatprep.subr.mxu0 0.0
      %945 = vmatpush1.msra.mxu0 %v784
      %946 = vmatprep.subr.mxu0 0.0
      %947 = vmatpush1.msra.mxu0 %v783
      %948 = vmatprep.subr.mxu0 0.0
      %949 = vmatpush1.msra.mxu0 %v782
      %950 = vmatprep.subr.mxu0 0.0
      %951 = vmatpush2.msra.mxu0 %v813
      %952 = vmatprep.subr.mxu0 0.0
      %953 = vmatpush2.msra.mxu0 %v812
      %954 = vmatprep.subr.mxu0 0.0
      %955 = vmatpush2.msra.mxu0 %v811
      %956 = vmatprep.subr.mxu0 0.0
      %957 = vmatpush2.msra.mxu0 %v810
      %958 = vmatprep.subr.mxu0 0.0
      %959 = vmatpush2.msra.mxu0 %v809
      %960 = vmatprep.subr.mxu0 0.0
      %961 = vmatpush2.msra.mxu0 %v808
      %962 = vmatprep.subr.mxu0 0.0
      %963 = vmatpush2.msra.mxu0 %v807
      %964 = vmatprep.subr.mxu0 0.0
      %965 = vmatpush2.msra.mxu0 %v806
      %966 = vmatprep.subr.mxu0 0.0
      %967 = vmatpush2.msra.mxu0 %v805
      %968 = vmatprep.subr.mxu0 0.0
      %969 = vmatpush2.msra.mxu0 %v804
      %970 = vmatprep.subr.mxu0 0.0
      %971 = vmatpush2.msra.mxu0 %v803
      %972 = vmatprep.subr.mxu0 0.0
      %973 = vmatpush2.msra.mxu0 %v802
      %974 = vmatprep.subr.mxu0 0.0
      %975 = vmatpush2.msra.mxu0 %v801
      %976 = vmatprep.subr.mxu0 0.0
      %977 = vmatpush2.msra.mxu0 %v800
      %978 = vmatprep.subr.mxu0 0.0
      %979 = vmatpush2.msra.mxu0 %v799
      %980 = vmatprep.subr.mxu0 0.0
      %981 = vmatpush2.msra.mxu0 %v798
      %982 = vmatprep.mubr.f32.mxu0 %v466
      %983 = vmatmul.mubr.f32.gmra.mxu0 %v458
      %v984 = vpop.f32.mrf.mxu0
      %v985 = vadd.f32 0.0, %v984
      %v986 = vpop.f32.mrf.mxu0
      %987 = vmatprep.mubr.f32.mxu0 %v467
      %988 = vmatmul.mubr.f32.gmra.mxu0 %v459
      %v989 = vpop.f32.mrf.mxu0
      %v990 = vadd.f32 0.0, %v989
      %v991 = vpop.f32.mrf.mxu0
      %992 = vmatprep.mubr.f32.mxu0 %v468
      %993 = vmatmul.mubr.f32.gmra.mxu0 %v460
      %v994 = vpop.f32.mrf.mxu0
      %v995 = vadd.f32 0.0, %v994
      %v996 = vpop.f32.mrf.mxu0
      %997 = vmatprep.mubr.f32.mxu0 %v469
      %998 = vmatmul.mubr.f32.gmra.mxu0 %v461
      %v999 = vpop.f32.mrf.mxu0
      %v1000 = vadd.f32 0.0, %v999
      %v1001 = vpop.f32.mrf.mxu0
      %1002 = vmatprep.mubr.f32.mxu0 %v470
      %1003 = vmatmul.mubr.f32.gmra.mxu0 %v462
      %v1004 = vpop.f32.mrf.mxu0
      %v1005 = vadd.f32 0.0, %v1004
      %v1006 = vpop.f32.mrf.mxu0
      %1007 = vmatprep.mubr.f32.mxu0 %v471
      %1008 = vmatmul.mubr.f32.gmra.mxu0 %v463
      %v1009 = vpop.f32.mrf.mxu0
      %v1010 = vadd.f32 0.0, %v1009
      %v1011 = vpop.f32.mrf.mxu0
      %1012 = vmatprep.mubr.f32.mxu0 %v472
      %1013 = vmatmul.mubr.f32.gmra.mxu0 %v464
      %v1014 = vpop.f32.mrf.mxu0
      %v1015 = vadd.f32 0.0, %v1014
      %v1016 = vpop.f32.mrf.mxu0
      %1017 = vmatprep.mubr.f32.mxu0 %v473
      %1018 = vmatmul.mubr.f32.gmra.mxu0 %v465
      %v1019 = vpop.f32.mrf.mxu0
      %v1020 = vadd.f32 0.0, %v1019
      %v1021 = vpop.f32.mrf.mxu0
      %1022 = vmatprep.mubr.f32.mxu0 %v658
      %1023 = vmatmul.mubr.f32.gmra.mxu0 %v650
      %v1024 = vpop.f32.mrf.mxu0
      %v1025 = vadd.f32 0.0, %v1024
      %v1026 = vpop.f32.mrf.mxu0
      %1027 = vmatprep.mubr.f32.mxu0 %v659
      %1028 = vmatmul.mubr.f32.gmra.mxu0 %v651
      %v1029 = vpop.f32.mrf.mxu0
      %v1030 = vadd.f32 0.0, %v1029
      %v1031 = vpop.f32.mrf.mxu0
      %1032 = vmatprep.mubr.f32.mxu0 %v660
      %1033 = vmatmul.mubr.f32.gmra.mxu0 %v652
      %v1034 = vpop.f32.mrf.mxu0
      %v1035 = vadd.f32 0.0, %v1034
      %v1036 = vpop.f32.mrf.mxu0
      %1037 = vmatprep.mubr.f32.mxu0 %v661
      %1038 = vmatmul.mubr.f32.gmra.mxu0 %v653
      %v1039 = vpop.f32.mrf.mxu0
      %v1040 = vadd.f32 0.0, %v1039
      %v1041 = vpop.f32.mrf.mxu0
      %1042 = vmatprep.mubr.f32.mxu0 %v662
      %1043 = vmatmul.mubr.f32.gmra.mxu0 %v654
      %v1044 = vpop.f32.mrf.mxu0
      %v1045 = vadd.f32 0.0, %v1044
      %v1046 = vpop.f32.mrf.mxu0
      %1047 = vmatprep.mubr.f32.mxu0 %v663
      %1048 = vmatmul.mubr.f32.gmra.mxu0 %v655
      %v1049 = vpop.f32.mrf.mxu0
      %v1050 = vadd.f32 0.0, %v1049
      %v1051 = vpop.f32.mrf.mxu0
      %1052 = vmatprep.mubr.f32.mxu0 %v664
      %1053 = vmatmul.mubr.f32.gmra.mxu0 %v656
      %v1054 = vpop.f32.mrf.mxu0
      %v1055 = vadd.f32 0.0, %v1054
      %v1056 = vpop.f32.mrf.mxu0
      %1057 = vmatprep.mubr.f32.mxu0 %v665
      %1058 = vmatmul.mubr.f32.gmra.mxu0 %v657
      %v1059 = vpop.f32.mrf.mxu0
      %v1060 = vadd.f32 0.0, %v1059
      %v1061 = vpop.f32.mrf.mxu0
      %1062 = vmatprep.mubr.f32.mxu0 %v716
      %1063 = vmatmul.mubr.f32.gmra.mxu0 %v708
      %v1064 = vpop.f32.mrf.mxu0
      %v1065 = vadd.f32 0.0, %v1064
      %v1066 = vpop.f32.mrf.mxu0
      %1067 = vmatprep.mubr.f32.mxu0 %v717
      %1068 = vmatmul.mubr.f32.gmra.mxu0 %v709
      %v1069 = vpop.f32.mrf.mxu0
      %v1070 = vadd.f32 0.0, %v1069
      %v1071 = vpop.f32.mrf.mxu0
      %1072 = vmatprep.mubr.f32.mxu0 %v718
      %1073 = vmatmul.mubr.f32.gmra.mxu0 %v710
      %v1074 = vpop.f32.mrf.mxu0
      %v1075 = vadd.f32 0.0, %v1074
      %v1076 = vpop.f32.mrf.mxu0
      %1077 = vmatprep.mubr.f32.mxu0 %v719
      %1078 = vmatmul.mubr.f32.gmra.mxu0 %v711
      %v1079 = vpop.f32.mrf.mxu0
      %v1080 = vadd.f32 0.0, %v1079
      %v1081 = vpop.f32.mrf.mxu0
      %1082 = vmatprep.mubr.f32.mxu0 %v720
      %1083 = vmatmul.mubr.f32.gmra.mxu0 %v712
      %v1084 = vpop.f32.mrf.mxu0
      %v1085 = vadd.f32 0.0, %v1084
      %v1086 = vpop.f32.mrf.mxu0
      %1087 = vmatprep.mubr.f32.mxu0 %v721
      %1088 = vmatmul.mubr.f32.gmra.mxu0 %v713
      %v1089 = vpop.f32.mrf.mxu0
      %v1090 = vadd.f32 0.0, %v1089
      %v1091 = vpop.f32.mrf.mxu0
      %1092 = vmatprep.mubr.f32.mxu0 %v722
      %1093 = vmatmul.mubr.f32.gmra.mxu0 %v714
      %v1094 = vpop.f32.mrf.mxu0
      %v1095 = vadd.f32 0.0, %v1094
      %v1096 = vpop.f32.mrf.mxu0
      %1097 = vmatprep.mubr.f32.mxu0 %v723
      %1098 = vmatmul.mubr.f32.gmra.mxu0 %v715
      %v1099 = vpop.f32.mrf.mxu0
      %v1100 = vadd.f32 0.0, %v1099
      %v1101 = vpop.f32.mrf.mxu0
      %1102 = vmatprep.mubr.f32.mxu0 %v765
      %1103 = vmatmul.mubr.f32.gmra.mxu0 %v474
      %v1104 = vpop.f32.mrf.mxu0
      %v1105 = vadd.f32 0.0, %v1104
      %v1106 = vpop.f32.mrf.mxu0
      %1107 = vmatprep.mubr.f32.mxu0 %v766
      %1108 = vmatmul.mubr.f32.gmra.mxu0 %v475
      %v1109 = vpop.f32.mrf.mxu0
      %v1110 = vadd.f32 0.0, %v1109
      %v1111 = vpop.f32.mrf.mxu0
      %1112 = vmatprep.mubr.f32.mxu0 %v767
      %1113 = vmatmul.mubr.f32.gmra.mxu0 %v476
      %v1114 = vpop.f32.mrf.mxu0
      %v1115 = vadd.f32 0.0, %v1114
      %v1116 = vpop.f32.mrf.mxu0
      %1117 = vmatprep.mubr.f32.mxu0 %v768
      %1118 = vmatmul.mubr.f32.gmra.mxu0 %v477
      %v1119 = vpop.f32.mrf.mxu0
      %v1120 = vadd.f32 0.0, %v1119
      %v1121 = vpop.f32.mrf.mxu0
      %1122 = vmatprep.mubr.f32.mxu0 %v769
      %1123 = vmatmul.mubr.f32.gmra.mxu0 %v478
      %v1124 = vpop.f32.mrf.mxu0
      %v1125 = vadd.f32 0.0, %v1124
      %v1126 = vpop.f32.mrf.mxu0
      %1127 = vmatprep.mubr.f32.mxu0 %v770
      %1128 = vmatmul.mubr.f32.gmra.mxu0 %v479
      %v1129 = vpop.f32.mrf.mxu0
      %v1130 = vadd.f32 0.0, %v1129
      %v1131 = vpop.f32.mrf.mxu0
      %1132 = vmatprep.mubr.f32.mxu0 %v771
      %1133 = vmatmul.mubr.f32.gmra.mxu0 %v480
      %v1134 = vpop.f32.mrf.mxu0
      %v1135 = vadd.f32 0.0, %v1134
      %v1136 = vpop.f32.mrf.mxu0
      %1137 = vmatprep.mubr.f32.mxu0 %v772
      %1138 = vmatmul.mubr.f32.gmra.mxu0 %v481
      %v1139 = vpop.f32.mrf.mxu0
      %v1140 = vadd.f32 0.0, %v1139
      %v1141 = vpop.f32.mrf.mxu0
      %1142 = vdwg.mxu0
      %1143 = vmatprep.subr.mxu0 0.0
      %1144 = vmatpush1.msra.mxu0 %v829
      %1145 = vmatprep.subr.mxu0 0.0
      %1146 = vmatpush1.msra.mxu0 %v828
      %1147 = vmatprep.subr.mxu0 0.0
      %1148 = vmatpush1.msra.mxu0 %v827
      %1149 = vmatprep.subr.mxu0 0.0
      %1150 = vmatpush1.msra.mxu0 %v826
      %1151 = vmatprep.subr.mxu0 0.0
      %1152 = vmatpush1.msra.mxu0 %v825
      %1153 = vmatprep.subr.mxu0 0.0
      %1154 = vmatpush1.msra.mxu0 %v824
      %1155 = vmatprep.subr.mxu0 0.0
      %1156 = vmatpush1.msra.mxu0 %v823
      %1157 = vmatprep.subr.mxu0 0.0
      %1158 = vmatpush1.msra.mxu0 %v822
      %1159 = vmatprep.subr.mxu0 0.0
      %1160 = vmatpush1.msra.mxu0 %v821
      %1161 = vmatprep.subr.mxu0 0.0
      %1162 = vmatpush1.msra.mxu0 %v820
      %1163 = vmatprep.subr.mxu0 0.0
      %1164 = vmatpush1.msra.mxu0 %v819
      %1165 = vmatprep.subr.mxu0 0.0
      %1166 = vmatpush1.msra.mxu0 %v818
      %1167 = vmatprep.subr.mxu0 0.0
      %1168 = vmatpush1.msra.mxu0 %v817
      %1169 = vmatprep.subr.mxu0 0.0
      %1170 = vmatpush1.msra.mxu0 %v816
      %1171 = vmatprep.subr.mxu0 0.0
      %1172 = vmatpush1.msra.mxu0 %v815
      %1173 = vmatprep.subr.mxu0 0.0
      %1174 = vmatpush1.msra.mxu0 %v814
      %1175 = vmatprep.subr.mxu0 0.0
      %1176 = vmatpush2.msra.mxu0 %v845
      %1177 = vmatprep.subr.mxu0 0.0
      %1178 = vmatpush2.msra.mxu0 %v844
      %1179 = vmatprep.subr.mxu0 0.0
      %1180 = vmatpush2.msra.mxu0 %v843
      %1181 = vmatprep.subr.mxu0 0.0
      %1182 = vmatpush2.msra.mxu0 %v842
      %1183 = vmatprep.subr.mxu0 0.0
      %1184 = vmatpush2.msra.mxu0 %v841
      %1185 = vmatprep.subr.mxu0 0.0
      %1186 = vmatpush2.msra.mxu0 %v840
      %1187 = vmatprep.subr.mxu0 0.0
      %1188 = vmatpush2.msra.mxu0 %v839
      %1189 = vmatprep.subr.mxu0 0.0
      %1190 = vmatpush2.msra.mxu0 %v838
      %1191 = vmatprep.subr.mxu0 0.0
      %1192 = vmatpush2.msra.mxu0 %v837
      %1193 = vmatprep.subr.mxu0 0.0
      %1194 = vmatpush2.msra.mxu0 %v836
      %1195 = vmatprep.subr.mxu0 0.0
      %1196 = vmatpush2.msra.mxu0 %v835
      %1197 = vmatprep.subr.mxu0 0.0
      %1198 = vmatpush2.msra.mxu0 %v834
      %1199 = vmatprep.subr.mxu0 0.0
      %1200 = vmatpush2.msra.mxu0 %v833
      %1201 = vmatprep.subr.mxu0 0.0
      %1202 = vmatpush2.msra.mxu0 %v832
      %1203 = vmatprep.subr.mxu0 0.0
      %1204 = vmatpush2.msra.mxu0 %v831
      %1205 = vmatprep.subr.mxu0 0.0
      %1206 = vmatpush2.msra.mxu0 %v830
      %1207 = vmatprep.mubr.f32.mxu0 %v459
      %1208 = vmatmul.mubr.f32.gmra.mxu0 %v474
      %v1209 = vpop.f32.mrf.mxu0
      %v1210 = vadd.f32 %v985, %v1209
      %v1211 = vpop.f32.mrf.mxu0
      %1212 = vmatprep.mubr.f32.mxu0 %v460
      %1213 = vmatmul.mubr.f32.gmra.mxu0 %v475
      %v1214 = vpop.f32.mrf.mxu0
      %v1215 = vadd.f32 %v990, %v1214
      %v1216 = vpop.f32.mrf.mxu0
      %1217 = vmatprep.mubr.f32.mxu0 %v461
      %1218 = vmatmul.mubr.f32.gmra.mxu0 %v476
      %v1219 = vpop.f32.mrf.mxu0
      %v1220 = vadd.f32 %v995, %v1219
      %v1221 = vpop.f32.mrf.mxu0
      %1222 = vmatprep.mubr.f32.mxu0 %v462
      %1223 = vmatmul.mubr.f32.gmra.mxu0 %v477
      %v1224 = vpop.f32.mrf.mxu0
      %v1225 = vadd.f32 %v1000, %v1224
      %v1226 = vpop.f32.mrf.mxu0
      %1227 = vmatprep.mubr.f32.mxu0 %v463
      %1228 = vmatmul.mubr.f32.gmra.mxu0 %v478
      %v1229 = vpop.f32.mrf.mxu0
      %v1230 = vadd.f32 %v1005, %v1229
      %v1231 = vpop.f32.mrf.mxu0
      %1232 = vmatprep.mubr.f32.mxu0 %v464
      %1233 = vmatmul.mubr.f32.gmra.mxu0 %v479
      %v1234 = vpop.f32.mrf.mxu0
      %v1235 = vadd.f32 %v1010, %v1234
      %v1236 = vpop.f32.mrf.mxu0
      %1237 = vmatprep.mubr.f32.mxu0 %v465
      %1238 = vmatmul.mubr.f32.gmra.mxu0 %v480
      %v1239 = vpop.f32.mrf.mxu0
      %v1240 = vadd.f32 %v1015, %v1239
      %v1241 = vpop.f32.mrf.mxu0
      %1242 = vmatprep.mubr.f32.mxu0 %v482
      %1243 = vmatmul.mubr.f32.gmra.mxu0 %v481
      %v1244 = vpop.f32.mrf.mxu0
      %v1245 = vadd.f32 %v1020, %v1244
      %v1246 = vpop.f32.mrf.mxu0
      %1247 = vmatprep.mubr.f32.mxu0 %v651
      %1248 = vmatmul.mubr.f32.gmra.mxu0 %v666
      %v1249 = vpop.f32.mrf.mxu0
      %v1250 = vadd.f32 %v1025, %v1249
      %v1251 = vpop.f32.mrf.mxu0
      %1252 = vmatprep.mubr.f32.mxu0 %v652
      %1253 = vmatmul.mubr.f32.gmra.mxu0 %v667
      %v1254 = vpop.f32.mrf.mxu0
      %v1255 = vadd.f32 %v1030, %v1254
      %v1256 = vpop.f32.mrf.mxu0
      %1257 = vmatprep.mubr.f32.mxu0 %v653
      %1258 = vmatmul.mubr.f32.gmra.mxu0 %v668
      %v1259 = vpop.f32.mrf.mxu0
      %v1260 = vadd.f32 %v1035, %v1259
      %v1261 = vpop.f32.mrf.mxu0
      %1262 = vmatprep.mubr.f32.mxu0 %v654
      %1263 = vmatmul.mubr.f32.gmra.mxu0 %v669
      %v1264 = vpop.f32.mrf.mxu0
      %v1265 = vadd.f32 %v1040, %v1264
      %v1266 = vpop.f32.mrf.mxu0
      %1267 = vmatprep.mubr.f32.mxu0 %v655
      %1268 = vmatmul.mubr.f32.gmra.mxu0 %v670
      %v1269 = vpop.f32.mrf.mxu0
      %v1270 = vadd.f32 %v1045, %v1269
      %v1271 = vpop.f32.mrf.mxu0
      %1272 = vmatprep.mubr.f32.mxu0 %v656
      %1273 = vmatmul.mubr.f32.gmra.mxu0 %v671
      %v1274 = vpop.f32.mrf.mxu0
      %v1275 = vadd.f32 %v1050, %v1274
      %v1276 = vpop.f32.mrf.mxu0
      %1277 = vmatprep.mubr.f32.mxu0 %v657
      %1278 = vmatmul.mubr.f32.gmra.mxu0 %v672
      %v1279 = vpop.f32.mrf.mxu0
      %v1280 = vadd.f32 %v1055, %v1279
      %v1281 = vpop.f32.mrf.mxu0
      %1282 = vmatprep.mubr.f32.mxu0 %v674
      %1283 = vmatmul.mubr.f32.gmra.mxu0 %v673
      %v1284 = vpop.f32.mrf.mxu0
      %v1285 = vadd.f32 %v1060, %v1284
      %v1286 = vpop.f32.mrf.mxu0
      %1287 = vmatprep.mubr.f32.mxu0 %v709
      %1288 = vmatmul.mubr.f32.gmra.mxu0 %v651
      %v1289 = vpop.f32.mrf.mxu0
      %v1290 = vadd.f32 %v1065, %v1289
      %v1291 = vpop.f32.mrf.mxu0
      %1292 = vmatprep.mubr.f32.mxu0 %v710
      %1293 = vmatmul.mubr.f32.gmra.mxu0 %v652
      %v1294 = vpop.f32.mrf.mxu0
      %v1295 = vadd.f32 %v1070, %v1294
      %v1296 = vpop.f32.mrf.mxu0
      %1297 = vmatprep.mubr.f32.mxu0 %v711
      %1298 = vmatmul.mubr.f32.gmra.mxu0 %v653
      %v1299 = vpop.f32.mrf.mxu0
      %v1300 = vadd.f32 %v1075, %v1299
      %v1301 = vpop.f32.mrf.mxu0
      %1302 = vmatprep.mubr.f32.mxu0 %v712
      %1303 = vmatmul.mubr.f32.gmra.mxu0 %v654
      %v1304 = vpop.f32.mrf.mxu0
      %v1305 = vadd.f32 %v1080, %v1304
      %v1306 = vpop.f32.mrf.mxu0
      %1307 = vmatprep.mubr.f32.mxu0 %v713
      %1308 = vmatmul.mubr.f32.gmra.mxu0 %v655
      %v1309 = vpop.f32.mrf.mxu0
      %v1310 = vadd.f32 %v1085, %v1309
      %v1311 = vpop.f32.mrf.mxu0
      %1312 = vmatprep.mubr.f32.mxu0 %v714
      %1313 = vmatmul.mubr.f32.gmra.mxu0 %v656
      %v1314 = vpop.f32.mrf.mxu0
      %v1315 = vadd.f32 %v1090, %v1314
      %v1316 = vpop.f32.mrf.mxu0
      %1317 = vmatprep.mubr.f32.mxu0 %v715
      %1318 = vmatmul.mubr.f32.gmra.mxu0 %v657
      %v1319 = vpop.f32.mrf.mxu0
      %v1320 = vadd.f32 %v1095, %v1319
      %v1321 = vpop.f32.mrf.mxu0
      %1322 = vmatprep.mubr.f32.mxu0 %v724
      %1323 = vmatmul.mubr.f32.gmra.mxu0 %v674
      %v1324 = vpop.f32.mrf.mxu0
      %v1325 = vadd.f32 %v1100, %v1324
      %v1326 = vpop.f32.mrf.mxu0
      %1327 = vmatprep.mubr.f32.mxu0 %v475
      %1328 = vmatmul.mubr.f32.gmra.mxu0 %v773
      %v1329 = vpop.f32.mrf.mxu0
      %v1330 = vadd.f32 %v1105, %v1329
      %v1331 = vpop.f32.mrf.mxu0
      %1332 = vmatprep.mubr.f32.mxu0 %v476
      %1333 = vmatmul.mubr.f32.gmra.mxu0 %v774
      %v1334 = vpop.f32.mrf.mxu0
      %v1335 = vadd.f32 %v1110, %v1334
      %v1336 = vpop.f32.mrf.mxu0
      %1337 = vmatprep.mubr.f32.mxu0 %v477
      %1338 = vmatmul.mubr.f32.gmra.mxu0 %v775
      %v1339 = vpop.f32.mrf.mxu0
      %v1340 = vadd.f32 %v1115, %v1339
      %v1341 = vpop.f32.mrf.mxu0
      %1342 = vmatprep.mubr.f32.mxu0 %v478
      %1343 = vmatmul.mubr.f32.gmra.mxu0 %v776
      %v1344 = vpop.f32.mrf.mxu0
      %v1345 = vadd.f32 %v1120, %v1344
      %v1346 = vpop.f32.mrf.mxu0
      %1347 = vmatprep.mubr.f32.mxu0 %v479
      %1348 = vmatmul.mubr.f32.gmra.mxu0 %v777
      %v1349 = vpop.f32.mrf.mxu0
      %v1350 = vadd.f32 %v1125, %v1349
      %v1351 = vpop.f32.mrf.mxu0
      %1352 = vmatprep.mubr.f32.mxu0 %v480
      %1353 = vmatmul.mubr.f32.gmra.mxu0 %v778
      %v1354 = vpop.f32.mrf.mxu0
      %v1355 = vadd.f32 %v1130, %v1354
      %v1356 = vpop.f32.mrf.mxu0
      %1357 = vmatprep.mubr.f32.mxu0 %v481
      %1358 = vmatmul.mubr.f32.gmra.mxu0 %v779
      %v1359 = vpop.f32.mrf.mxu0
      %v1360 = vadd.f32 %v1135, %v1359
      %v1361 = vpop.f32.mrf.mxu0
      %1362 = vmatprep.mubr.f32.mxu0 %v781
      %1363 = vmatmul.mubr.f32.gmra.mxu0 %v780
      %v1364 = vpop.f32.mrf.mxu0
      %v1365 = vadd.f32 %v1140, %v1364
      %v1366 = vpop.f32.mrf.mxu0
      %1367 = vdwg.mxu0
      %1368 = vmatprep.subr.mxu0 0.0
      %1369 = vmatpush1.msra.mxu0 0.0
      %1370 = vmatprep.subr.mxu0 0.0
      %1371 = vmatpush1.msra.mxu0 0.0
      %1372 = vmatprep.subr.mxu0 0.0
      %1373 = vmatpush1.msra.mxu0 0.0
      %1374 = vmatprep.subr.mxu0 0.0
      %1375 = vmatpush1.msra.mxu0 0.0
      %1376 = vmatprep.subr.mxu0 0.0
      %1377 = vmatpush1.msra.mxu0 0.0
      %1378 = vmatprep.subr.mxu0 0.0
      %1379 = vmatpush1.msra.mxu0 0.0
      %1380 = vmatprep.subr.mxu0 0.0
      %1381 = vmatpush1.msra.mxu0 0.0
      %1382 = vmatprep.subr.mxu0 0.0
      %1383 = vmatpush1.msra.mxu0 0.0
      %1384 = vmatprep.subr.mxu0 0.0
      %1385 = vmatpush1.msra.mxu0 %v853
      %1386 = vmatprep.subr.mxu0 0.0
      %1387 = vmatpush1.msra.mxu0 %v852
      %1388 = vmatprep.subr.mxu0 0.0
      %1389 = vmatpush1.msra.mxu0 %v851
      %1390 = vmatprep.subr.mxu0 0.0
      %1391 = vmatpush1.msra.mxu0 %v850
      %1392 = vmatprep.subr.mxu0 0.0
      %1393 = vmatpush1.msra.mxu0 %v849
      %1394 = vmatprep.subr.mxu0 0.0
      %1395 = vmatpush1.msra.mxu0 %v848
      %1396 = vmatprep.subr.mxu0 0.0
      %1397 = vmatpush1.msra.mxu0 %v847
      %1398 = vmatprep.subr.mxu0 0.0
      %1399 = vmatpush1.msra.mxu0 %v846
      %1400 = vmatprep.subr.mxu0 0.0
      %1401 = vmatpush2.msra.mxu0 0.0
      %1402 = vmatprep.subr.mxu0 0.0
      %1403 = vmatpush2.msra.mxu0 0.0
      %1404 = vmatprep.subr.mxu0 0.0
      %1405 = vmatpush2.msra.mxu0 0.0
      %1406 = vmatprep.subr.mxu0 0.0
      %1407 = vmatpush2.msra.mxu0 0.0
      %1408 = vmatprep.subr.mxu0 0.0
      %1409 = vmatpush2.msra.mxu0 0.0
      %1410 = vmatprep.subr.mxu0 0.0
      %1411 = vmatpush2.msra.mxu0 0.0
      %1412 = vmatprep.subr.mxu0 0.0
      %1413 = vmatpush2.msra.mxu0 0.0
      %1414 = vmatprep.subr.mxu0 0.0
      %1415 = vmatpush2.msra.mxu0 0.0
      %1416 = vmatprep.subr.mxu0 0.0
      %1417 = vmatpush2.msra.mxu0 0.0
      %1418 = vmatprep.subr.mxu0 0.0
      %1419 = vmatpush2.msra.mxu0 0.0
      %1420 = vmatprep.subr.mxu0 0.0
      %1421 = vmatpush2.msra.mxu0 0.0
      %1422 = vmatprep.subr.mxu0 0.0
      %1423 = vmatpush2.msra.mxu0 0.0
      %1424 = vmatprep.subr.mxu0 0.0
      %1425 = vmatpush2.msra.mxu0 0.0
      %1426 = vmatprep.subr.mxu0 0.0
      %1427 = vmatpush2.msra.mxu0 0.0
      %1428 = vmatprep.subr.mxu0 0.0
      %1429 = vmatpush2.msra.mxu0 0.0
      %1430 = vmatprep.subr.mxu0 0.0
      %1431 = vmatpush2.msra.mxu0 0.0
      %1432 = vmatprep.mubr.f32.mxu0 0.0
      %1433 = vmatmul.mubr.f32.gmra.mxu0 %v854
      %v1434 = vpop.f32.mrf.mxu0
      %v1435 = vadd.f32 %v1210, %v1434
      %v1436 = vpop.f32.mrf.mxu0
      %1437 = vmatprep.mubr.f32.mxu0 0.0
      %1438 = vmatmul.mubr.f32.gmra.mxu0 %v856
      %v1439 = vpop.f32.mrf.mxu0
      %v1440 = vadd.f32 %v1215, %v1439
      %v1441 = vpop.f32.mrf.mxu0
      %1442 = vmatprep.mubr.f32.mxu0 0.0
      %1443 = vmatmul.mubr.f32.gmra.mxu0 %v858
      %v1444 = vpop.f32.mrf.mxu0
      %v1445 = vadd.f32 %v1220, %v1444
      %v1446 = vpop.f32.mrf.mxu0
      %1447 = vmatprep.mubr.f32.mxu0 0.0
      %1448 = vmatmul.mubr.f32.gmra.mxu0 %v860
      %v1449 = vpop.f32.mrf.mxu0
      %v1450 = vadd.f32 %v1225, %v1449
      %v1451 = vpop.f32.mrf.mxu0
      %1452 = vmatprep.mubr.f32.mxu0 0.0
      %1453 = vmatmul.mubr.f32.gmra.mxu0 %v862
      %v1454 = vpop.f32.mrf.mxu0
      %v1455 = vadd.f32 %v1230, %v1454
      %v1456 = vpop.f32.mrf.mxu0
      %1457 = vmatprep.mubr.f32.mxu0 0.0
      %1458 = vmatmul.mubr.f32.gmra.mxu0 %v864
      %v1459 = vpop.f32.mrf.mxu0
      %v1460 = vadd.f32 %v1235, %v1459
      %v1461 = vpop.f32.mrf.mxu0
      %1462 = vmatprep.mubr.f32.mxu0 0.0
      %1463 = vmatmul.mubr.f32.gmra.mxu0 %v866
      %v1464 = vpop.f32.mrf.mxu0
      %v1465 = vadd.f32 %v1240, %v1464
      %v1466 = vpop.f32.mrf.mxu0
      %1467 = vmatprep.mubr.f32.mxu0 0.0
      %1468 = vmatmul.mubr.f32.gmra.mxu0 %v868
      %v1469 = vpop.f32.mrf.mxu0
      %v1470 = vadd.f32 %v1245, %v1469
      %v1471 = vpop.f32.mrf.mxu0
      %1472 = vmatprep.mubr.f32.mxu0 0.0
      %1473 = vmatmul.mubr.f32.gmra.mxu0 %v870
      %v1474 = vpop.f32.mrf.mxu0
      %v1475 = vadd.f32 %v1250, %v1474
      %v1476 = vpop.f32.mrf.mxu0
      %1477 = vmatprep.mubr.f32.mxu0 0.0
      %1478 = vmatmul.mubr.f32.gmra.mxu0 %v872
      %v1479 = vpop.f32.mrf.mxu0
      %v1480 = vadd.f32 %v1255, %v1479
      %v1481 = vpop.f32.mrf.mxu0
      %1482 = vmatprep.mubr.f32.mxu0 0.0
      %1483 = vmatmul.mubr.f32.gmra.mxu0 %v874
      %v1484 = vpop.f32.mrf.mxu0
      %v1485 = vadd.f32 %v1260, %v1484
      %v1486 = vpop.f32.mrf.mxu0
      %1487 = vmatprep.mubr.f32.mxu0 0.0
      %1488 = vmatmul.mubr.f32.gmra.mxu0 %v876
      %v1489 = vpop.f32.mrf.mxu0
      %v1490 = vadd.f32 %v1265, %v1489
      %v1491 = vpop.f32.mrf.mxu0
      %1492 = vmatprep.mubr.f32.mxu0 0.0
      %1493 = vmatmul.mubr.f32.gmra.mxu0 %v878
      %v1494 = vpop.f32.mrf.mxu0
      %v1495 = vadd.f32 %v1270, %v1494
      %v1496 = vpop.f32.mrf.mxu0
      %1497 = vmatprep.mubr.f32.mxu0 0.0
      %1498 = vmatmul.mubr.f32.gmra.mxu0 %v880
      %v1499 = vpop.f32.mrf.mxu0
      %v1500 = vadd.f32 %v1275, %v1499
      %v1501 = vpop.f32.mrf.mxu0
      %1502 = vmatprep.mubr.f32.mxu0 0.0
      %1503 = vmatmul.mubr.f32.gmra.mxu0 %v882
      %v1504 = vpop.f32.mrf.mxu0
      %v1505 = vadd.f32 %v1280, %v1504
      %v1506 = vpop.f32.mrf.mxu0
      %1507 = vmatprep.mubr.f32.mxu0 0.0
      %1508 = vmatmul.mubr.f32.gmra.mxu0 %v884
      %v1509 = vpop.f32.mrf.mxu0
      %v1510 = vadd.f32 %v1285, %v1509
      %v1511 = vpop.f32.mrf.mxu0
      %1512 = vmatprep.mubr.f32.mxu0 0.0
      %1513 = vmatmul.mubr.f32.gmra.mxu0 %v886
      %v1514 = vpop.f32.mrf.mxu0
      %v1515 = vadd.f32 %v1290, %v1514
      %v1516 = vpop.f32.mrf.mxu0
      %1517 = vmatprep.mubr.f32.mxu0 0.0
      %1518 = vmatmul.mubr.f32.gmra.mxu0 %v888
      %v1519 = vpop.f32.mrf.mxu0
      %v1520 = vadd.f32 %v1295, %v1519
      %v1521 = vpop.f32.mrf.mxu0
      %1522 = vmatprep.mubr.f32.mxu0 0.0
      %1523 = vmatmul.mubr.f32.gmra.mxu0 %v890
      %v1524 = vpop.f32.mrf.mxu0
      %v1525 = vadd.f32 %v1300, %v1524
      %v1526 = vpop.f32.mrf.mxu0
      %1527 = vmatprep.mubr.f32.mxu0 0.0
      %1528 = vmatmul.mubr.f32.gmra.mxu0 %v892
      %v1529 = vpop.f32.mrf.mxu0
      %v1530 = vadd.f32 %v1305, %v1529
      %v1531 = vpop.f32.mrf.mxu0
      %1532 = vmatprep.mubr.f32.mxu0 0.0
      %1533 = vmatmul.mubr.f32.gmra.mxu0 %v894
      %v1534 = vpop.f32.mrf.mxu0
      %v1535 = vadd.f32 %v1310, %v1534
      %v1536 = vpop.f32.mrf.mxu0
      %1537 = vmatprep.mubr.f32.mxu0 0.0
      %1538 = vmatmul.mubr.f32.gmra.mxu0 %v896
      %v1539 = vpop.f32.mrf.mxu0
      %v1540 = vadd.f32 %v1315, %v1539
      %v1541 = vpop.f32.mrf.mxu0
      %1542 = vmatprep.mubr.f32.mxu0 0.0
      %1543 = vmatmul.mubr.f32.gmra.mxu0 %v898
      %v1544 = vpop.f32.mrf.mxu0
      %v1545 = vadd.f32 %v1320, %v1544
      %v1546 = vpop.f32.mrf.mxu0
      %1547 = vmatprep.mubr.f32.mxu0 0.0
      %1548 = vmatmul.mubr.f32.gmra.mxu0 %v900
      %v1549 = vpop.f32.mrf.mxu0
      %v1550 = vadd.f32 %v1325, %v1549
      %v1551 = vpop.f32.mrf.mxu0
      %1552 = vmatprep.mubr.f32.mxu0 0.0
      %1553 = vmatmul.mubr.f32.gmra.mxu0 %v902
      %v1554 = vpop.f32.mrf.mxu0
      %v1555 = vadd.f32 %v1330, %v1554
      %v1556 = vpop.f32.mrf.mxu0
      %1557 = vmatprep.mubr.f32.mxu0 0.0
      %1558 = vmatmul.mubr.f32.gmra.mxu0 %v904
      %v1559 = vpop.f32.mrf.mxu0
      %v1560 = vadd.f32 %v1335, %v1559
      %v1561 = vpop.f32.mrf.mxu0
      %1562 = vmatprep.mubr.f32.mxu0 0.0
      %1563 = vmatmul.mubr.f32.gmra.mxu0 %v906
      %v1564 = vpop.f32.mrf.mxu0
      %v1565 = vadd.f32 %v1340, %v1564
      %v1566 = vpop.f32.mrf.mxu0
      %1567 = vmatprep.mubr.f32.mxu0 0.0
      %1568 = vmatmul.mubr.f32.gmra.mxu0 %v908
      %v1569 = vpop.f32.mrf.mxu0
      %v1570 = vadd.f32 %v1345, %v1569
      %v1571 = vpop.f32.mrf.mxu0
      %1572 = vmatprep.mubr.f32.mxu0 0.0
      %1573 = vmatmul.mubr.f32.gmra.mxu0 %v910
      %v1574 = vpop.f32.mrf.mxu0
      %v1575 = vadd.f32 %v1350, %v1574
      %v1576 = vpop.f32.mrf.mxu0
      %1577 = vmatprep.mubr.f32.mxu0 0.0
      %1578 = vmatmul.mubr.f32.gmra.mxu0 %v912
      %v1579 = vpop.f32.mrf.mxu0
      %v1580 = vadd.f32 %v1355, %v1579
      %v1581 = vpop.f32.mrf.mxu0
      %1582 = vmatprep.mubr.f32.mxu0 0.0
      %1583 = vmatmul.mubr.f32.gmra.mxu0 %v914
      %v1584 = vpop.f32.mrf.mxu0
      %v1585 = vadd.f32 %v1360, %v1584
      %v1586 = vpop.f32.mrf.mxu0
      %1587 = vmatprep.mubr.f32.mxu0 0.0
      %1588 = vmatmul.mubr.f32.gmra.mxu0 %v916
      %v1589 = vpop.f32.mrf.mxu0
      %v1590 = vadd.f32 %v1365, %v1589
      %v1591 = vpop.f32.mrf.mxu0
      %1592 = vdwg.mxu0
      %v1593 = vmax.f32 %v1435, %v1475
      %v1594 = vmax.f32 %v1440, %v1480
      %v1595 = vmax.f32 %v1445, %v1485
      %v1596 = vmax.f32 %v1450, %v1490
      %v1597 = vmax.f32 %v1455, %v1495
      %v1598 = vmax.f32 %v1460, %v1500
      %v1599 = vmax.f32 %v1465, %v1505
      %v1600 = vmax.f32 %v1470, %v1510
      %v1601 = vmax.f32 %v1515, %v1555
      %v1602 = vmax.f32 %v1520, %v1560
      %v1603 = vmax.f32 %v1525, %v1565
      %v1604 = vmax.f32 %v1530, %v1570
      %v1605 = vmax.f32 %v1535, %v1575
      %v1606 = vmax.f32 %v1540, %v1580
      %v1607 = vmax.f32 %v1545, %v1585
      %v1608 = vmax.f32 %v1550, %v1590
      %v1609 = vmax.f32 %v1593, %v1601
      %v1610 = vmax.f32 %v1594, %v1602
      %v1611 = vmax.f32 %v1595, %v1603
      %v1612 = vmax.f32 %v1596, %v1604
      %v1613 = vmax.f32 %v1597, %v1605
      %v1614 = vmax.f32 %v1598, %v1606
      %v1615 = vmax.f32 %v1599, %v1607
      %v1616 = vmax.f32 %v1600, %v1608
      %v1617 = vld [vmem:[%s2] sm:$0x1]
      %v1619 = vlaneseq
      %v1620 = vshrl.u32 %v1619, 7
      %v1621 = vsub.s32 0, %v1620
      %v1622 = vrot.slane %v1617, %v1621
      %v1624 = vadd.f32 %v1609, %v1622
      %v1625 = vadd.f32 %v1610, %v1622
      %v1626 = vadd.f32 %v1611, %v1622
      %v1627 = vadd.f32 %v1612, %v1622
      %v1628 = vadd.f32 %v1613, %v1622
      %v1629 = vadd.f32 %v1614, %v1622
      %v1630 = vadd.f32 %v1615, %v1622
      %v1631 = vadd.f32 %v1616, %v1622
      %v1632 = vmax.f32 %v1624, 0.0
      %v1633 = vmax.f32 %v1625, 0.0
      %v1634 = vmax.f32 %v1626, 0.0
      %v1635 = vmax.f32 %v1627, 0.0
      %v1636 = vmax.f32 %v1628, 0.0
      %v1637 = vmax.f32 %v1629, 0.0
      %v1638 = vmax.f32 %v1630, 0.0
      %v1639 = vmax.f32 %v1631, 0.0
      %1640 = vst.msk [vmem:[%s206] sm:$0xff] %vm457, %v1632
      %1641 = vst.msk [vmem:[%s206 + $0x8] sm:$0xff] %vm457, %v1633
      %1642 = vst.msk [vmem:[%s206 + $0x10] sm:$0xff] %vm457, %v1634
      %1643 = vst.msk [vmem:[%s206 + $0x18] sm:$0xff] %vm457, %v1635
      %1644 = vst.msk [vmem:[%s206 + $0x20] sm:$0xff] %vm457, %v1636
      %1645 = vst.msk [vmem:[%s206 + $0x28] sm:$0xff] %vm457, %v1637
      %1646 = vst.msk [vmem:[%s206 + $0x30] sm:$0xff] %vm457, %v1638
      %1647 = vst.msk [vmem:[%s206 + $0x38] sm:$0xff] %vm457, %v1639
      %p1648 = scmp.lt.s32.totalorder %s18, 1
      %s1649 = scalar_select %p1648, %s18, 1
      %p1650 = scmp.lt.s32.totalorder %s19, 0
      %s1651 = scalar_select %p1650, %s19, 0
      %s1652 = smul.addr %s1651, 8
      %s1653 = smul.addr %s1649, 8
      %s1654 = sadd.s32 %s1652, %s1653
      %s1655 = smul.addr %s1654, 8
      %s1656 = scalar_lea.vmem %s3, %s1655
      // Predicated region
      $region33: #{conv_encoder_forward.2} parent=31 // pred_check
        %p1657 = pneg %p116
      $region34: #{conv_encoder_forward.2} parent=31 // pred_check_branch
        %1659 = sbr.rel (%p1657) target = $region36
      $region35: #{conv_encoder_forward.2} parent=31 // pred_region
        _
      $region36: #{conv_encoder_forward.2} parent=31 // pred_fallthru
        _
    $region32: #{conv_encoder_forward.2} parent=5 // pred_fallthru
      _
    %p1660 = scmp.le.s32.totalorder 2, %s9
    // Predicated region
    $region37: #{conv_encoder_forward.2} parent=5 // pred_check
      %p1661 = pneg %p1660
    $region38: #{conv_encoder_forward.2} parent=5 // pred_check_branch
      %1663 = sbr.rel (%p1661) target = $region40
    $region39: #{conv_encoder_forward.2} parent=5 // pred_region
      %s1664 = ssub.s32 %s9, 2
      // Predicated region
      $region41: #{conv_encoder_forward.2} parent=39 // pred_check
        %p1665 = pneg %p122
      $region42: #{conv_encoder_forward.2} parent=39 // pred_check_branch
        %1667 = sbr.rel (%p1665) target = $region44
      $region43: #{conv_encoder_forward.2} parent=39 // pred_region
        %p1668 = scmp.lt.s32.totalorder %s20, 1
        %s1669 = scalar_select %p1668, %s20, 1
        %p1670 = scmp.lt.s32.totalorder %s21, 0
        %s1671 = scalar_select %p1670, %s21, 0
        %s1672 = smul.addr %s1671, 8
        %s1673 = smul.addr %s1669, 8
        %s1674 = sadd.s32 %s1672, %s1673
        %s1675 = smul.addr %s1674, 8
        %s1676 = scalar_lea.vmem %s3, %s1675
      $region44: #{conv_encoder_forward.2} parent=39 // pred_fallthru
        _
    $region40: #{conv_encoder_forward.2} parent=5 // pred_fallthru
      _
  $region6: #{conv_encoder_forward.2} parent=0 // loop_footer
    %s13 = sadd.s32 1, %s9
  $region7: #{conv_encoder_forward.2} parent=0 // loop_footer_branch
    %8 = sbr.rel target = $region3
  $region8: #{conv_encoder_forward.2} parent=0 // loop_exit
    _

</llo_original>
